<compile_context>
chip_gen: v7x
topology: tpu7x:2x2x1
jax: 0.10.0
libtpu: 0.0.40
codegen_flags: <defaults>
</compile_context>

<pallas_src>
import itertools

import numpy as np
import jax
import jax.numpy as jnp
from jax import lax
from jax.experimental import pallas as pl
from jax.experimental.pallas import tpu as pltpu

# ----------------------------- configuration --------------------------------
DIM = 32
KEY_DIM = 8
NUM_HEADS = 4
ATTN_RATIO = 2
RESOLUTION = 7

NH_KD = KEY_DIM * NUM_HEADS            # 32
D_HEAD = int(ATTN_RATIO * KEY_DIM)     # 16
DH = D_HEAD * NUM_HEADS                # 64
QKV_DIM = 2 * NH_KD + DH               # 128
N_TOK = RESOLUTION * RESOLUTION        # 49
N_PAD = ((N_TOK + 7) // 8) * 8         # 56  (sublane multiple of 8)
K_SHIFT = 512                          # 9*N_PAD = 504, padded to a lane multiple of 128
SCALE = KEY_DIM ** (-0.5)
NEG_INF = -1e9

BATCH = 2
H = W = RESOLUTION


# ------------------------------- fused kernel --------------------------------
def _attention4d_fused_kernel(x_ref, qkvw_ref, sbig_ref, projw_ref, bias_ref,
                              vlw_ref, th1_ref, th2_ref, vecs_ref, o_ref):
    f32 = jnp.float32
    bf16 = jnp.bfloat16
    nb = x_ref.shape[0] // N_PAD          # batches handled in this grid step

    # --- fused q/k/v projection (1x1 conv + folded BN), all batches stacked ---
    qkv = jnp.dot(x_ref[...], qkvw_ref[...], preferred_element_type=f32)
    qkv = qkv + vecs_ref[0:1, :QKV_DIM]

    # Invariant: padded token rows of qkv are exactly zero so that (a) padded v
    # rows contribute nothing to p @ v and (b) colsum(v) below only sums the 49
    # real tokens (needed for the folded talking-head-2 bias term).
    row_ids = lax.broadcasted_iota(jnp.int32, (N_PAD, 1), 0)
    mask1 = row_ids < N_TOK
    mask = jnp.concatenate([mask1] * nb, axis=0) if nb > 1 else mask1
    qkv = jnp.where(mask, qkv, 0.0)

    vl_b = vecs_ref[1:2, :DH]             # (1, 64)
    th2b_lane = vecs_ref[2:3, :DH]        # (1, 64)  th2_b expanded over head lanes
    proj_b = vecs_ref[3:4, :DIM]          # (1, 32)

    sbig = sbig_ref[...]                  # (56, 512) bf16 concatenated 0/1 shift mats
    vlw = vlw_ref[...]                    # (9, 64)  f32 folded depthwise BN weights
    th1 = th1_ref[...]                    # (4, 32)  f32 th1_w*SCALE lane-expanded over q
    th2 = th2_ref[...]                    # (4, 64)  f32 th2_w lane-expanded over v

    fused_rows = []
    for b in range(nb):
        r0 = b * N_PAD
        q_f32 = qkv[r0:r0 + N_PAD, :NH_KD]                       # (56, 32)
        k_bf = qkv[r0:r0 + N_PAD, NH_KD:2 * NH_KD].astype(bf16)  # (56, 32)
        v_f32 = qkv[r0:r0 + N_PAD, 2 * NH_KD:]                   # (56, 64)
        v_bf = v_f32.astype(bf16)

        # --- v_local: depthwise 3x3 conv (+BN) as ONE (56,512)x(512,64) matmul ---
        taps = [v_f32 * vlw[t:t + 1, :] for t in range(9)]       # 9 VPU muls
        taps.append(jnp.zeros((K_SHIFT - 9 * N_PAD, DH), f32))   # K padding to 512
        v_big = jnp.concatenate(taps, axis=0).astype(bf16)       # (512, 64)
        v_local = jnp.dot(sbig, v_big, preferred_element_type=f32) + vl_b

        # column sums of v (talking-head-2 bias term); padded rows are already 0
        colsum_v = jnp.sum(v_f32, axis=0, keepdims=True)         # (1, 64)

        # --- attention core ---------------------------------------------------
        # talking-head-1 (and SCALE) folded into per-head Q lane scales, its bias
        # pre-mixed into bias_ref; talking-head-2 folded into the AV accumulation.
        # Each head's score tile is consumed immediately -> only one 4-head set
        # of (56,56) tiles is ever live.
        acc_av = None
        for i in range(NUM_HEADS):
            q_mix = (q_f32 * th1[i:i + 1, :]).astype(bf16)       # (56, 32)
            s = lax.dot_general(q_mix, k_bf, (((1,), (1,)), ((), ())),
                                preferred_element_type=f32)      # (56, 56)
            # bias_mixed has NEG_INF in the padded key columns -> exp() == 0 there.
            s = s + bias_ref[i]
            m = jnp.max(s, axis=-1, keepdims=True)
            e = jnp.exp(s - m)
            denom = jnp.sum(e, axis=-1, keepdims=True)
            p = (e * pl.reciprocal(denom, approx=True)).astype(bf16)
            g = jnp.dot(p, v_bf, preferred_element_type=f32)     # (56, 64)
            contrib = g * th2[i:i + 1, :]
            acc_av = contrib if acc_av is None else acc_av + contrib

        attn_out = acc_av + th2b_lane * colsum_v                 # (56, 64)
        fused_rows.append(jnp.maximum(attn_out + v_local, 0.0))  # +v_local, ReLU

    # --- projection (1x1 conv + folded BN) on the batch-stacked slab ----------
    fused = fused_rows[0] if nb == 1 else jnp.concatenate(fused_rows, axis=0)
    out = jnp.dot(fused.astype(bf16), projw_ref[...],
                  preferred_element_type=f32) + proj_b
    o_ref[...] = out


# ------------------------------ pallas wrapper --------------------------------
def _batches_per_step(batch):
    kind = jax.devices()[0].device_kind.lower()
    # v7x has 2 TensorCores per chip: keep one batch per grid step so the
    # ("parallel",) grid axis spreads the batches across cores.  Single-TC chips
    # (v5e/v6e): fold every batch into one invocation (no serial multi-step grid).
    if "v7" in kind or "7x" in kind:
        return 1
    return batch


@jax.jit
def attention4d_forward(x, kp):
    # x: (B, DIM, H, W) NCHW, stride=None path.
    # TODO(synk): stride_conv / nn.Upsample path (stride is not None) is not implemented.
    b, c, h, w = x.shape
    n = h * w
    x_tok = jnp.transpose(x, (0, 2, 3, 1)).reshape(b, n, c)
    x_pad = jnp.pad(x_tok, ((0, 0), (0, N_PAD - n), (0, 0)))
    x_flat = x_pad.reshape(b * N_PAD, c).astype(jnp.bfloat16)

    nb = _batches_per_step(b)
    rows = nb * N_PAD
    grid = (b // nb,)

    out_flat = pl.pallas_call(
        _attention4d_fused_kernel,
        out_shape=jax.ShapeDtypeStruct((b * N_PAD, DIM), jnp.float32),
        grid=grid,
        in_specs=[
            pl.BlockSpec((rows, DIM), lambda i: (i, 0)),                   # x (tokens)
            pl.BlockSpec((DIM, QKV_DIM), lambda i: (0, 0)),                # qkv_w
            pl.BlockSpec((N_PAD, K_SHIFT), lambda i: (0, 0)),              # concat shift mats
            pl.BlockSpec((DH, DIM), lambda i: (0, 0)),                     # proj_w
            pl.BlockSpec((NUM_HEADS, N_PAD, N_PAD), lambda i: (0, 0, 0)),  # bias_mixed
            pl.BlockSpec((9, DH), lambda i: (0, 0)),                       # vl_w
            pl.BlockSpec((NUM_HEADS, NH_KD), lambda i: (0, 0)),            # th1 lane scales
            pl.BlockSpec((NUM_HEADS, DH), lambda i: (0, 0)),               # th2 lane scales
            pl.BlockSpec((4, 128), lambda i: (0, 0)),                      # packed row vecs
        ],
        out_specs=pl.BlockSpec((rows, DIM), lambda i: (i, 0)),
        compiler_params=pltpu.CompilerParams(dimension_semantics=("parallel",)),
    )(x_flat, kp['qkv_w'], kp['sbig'], kp['proj_w'], kp['bias_mixed'],
      kp['vl_w'], kp['th1_lane'], kp['th2_lane'], kp['rowvecs'])

    out = out_flat.reshape(b, N_PAD, DIM)[:, :n, :]
    return out.reshape(b, h, w, DIM).transpose(0, 3, 1, 2)          # NCHW out


# ------------------------------ parameter init --------------------------------
def _fold_bn(w, b, gamma, beta, mean, var, eps=1e-5):
    s = gamma / jnp.sqrt(var + eps)
    w_f = w * s.reshape((-1,) + (1,) * (w.ndim - 1))
    b_f = (b - mean) * s + beta
    return w_f, b_f


def _build_shift_big():
    # S_big[n_out, t*N_PAD + n_in] = 1 iff n_in is the t-th (dy,dx) neighbour of
    # n_out (zero-padded 3x3 depthwise conv), so that one MXU call computes
    # v_local = S_big @ concat_t(v * w_t).  K padded 504 -> 512 with zero columns.
    S = np.zeros((N_PAD, K_SHIFT), np.float32)
    for dy in range(3):
        for dx in range(3):
            t = dy * 3 + dx
            for y in range(RESOLUTION):
                for x in range(RESOLUTION):
                    yy, xx = y + dy - 1, x + dx - 1
                    if 0 <= yy < RESOLUTION and 0 <= xx < RESOLUTION:
                        S[y * RESOLUTION + x, t * N_PAD + yy * RESOLUTION + xx] = 1.0
    return S


def build_params(key):
    ks = iter(jax.random.split(key, 40))

    def nxt():
        return next(ks)

    def conv1x1_bn(out_ch, in_ch):
        w = 0.05 * jax.random.normal(nxt(), (out_ch, in_ch), jnp.float32)
        b = 0.05 * jax.random.normal(nxt(), (out_ch,), jnp.float32)
        gamma = jax.random.uniform(nxt(), (out_ch,), minval=0.5, maxval=1.5)
        beta = 0.05 * jax.random.normal(nxt(), (out_ch,), jnp.float32)
        mean = 0.05 * jax.random.normal(nxt(), (out_ch,), jnp.float32)
        var = jax.random.uniform(nxt(), (out_ch,), minval=0.5, maxval=1.5)
        return _fold_bn(w, b, gamma, beta, mean, var)

    # q / k / v projections (1x1 conv + BN), fused into one matmul
    qw, qb = conv1x1_bn(NH_KD, DIM)
    kw, kb = conv1x1_bn(NH_KD, DIM)
    vw, vb = conv1x1_bn(DH, DIM)
    qkv_w = jnp.concatenate([qw, kw, vw], axis=0).T                # (DIM, 128)
    qkv_b = jnp.concatenate([qb, kb, vb]).reshape(1, -1)

    # v_local: depthwise 3x3 conv + BN (weights rearranged per tap)
    vlw = 0.05 * jax.random.normal(nxt(), (DH, 3, 3), jnp.float32)
    vlb = 0.05 * jax.random.normal(nxt(), (DH,), jnp.float32)
    g = jax.random.uniform(nxt(), (DH,), minval=0.5, maxval=1.5)
    be = 0.05 * jax.random.normal(nxt(), (DH,), jnp.float32)
    mu = 0.05 * jax.random.normal(nxt(), (DH,), jnp.float32)
    va = jax.random.uniform(nxt(), (DH,), minval=0.5, maxval=1.5)
    vlw_f, vlb_f = _fold_bn(vlw, vlb, g, be, mu, va)
    vl_w = jnp.transpose(vlw_f, (1, 2, 0)).reshape(9, DH)          # (9, DH)
    vl_b = vlb_f.reshape(1, DH)

    # talking heads (plain 1x1 convs over the head channel, no BN)
    th1_w = 0.2 * jax.random.normal(nxt(), (NUM_HEADS, NUM_HEADS), jnp.float32)
    th1_b = 0.05 * jax.random.normal(nxt(), (NUM_HEADS,), jnp.float32)
    th2_w = 0.2 * jax.random.normal(nxt(), (NUM_HEADS, NUM_HEADS), jnp.float32)
    th2_b = 0.05 * jax.random.normal(nxt(), (NUM_HEADS,), jnp.float32)

    # proj: ReLU -> 1x1 conv + BN
    pw, pb = conv1x1_bn(DIM, DH)
    proj_w = pw.T                                                  # (DH, DIM)
    proj_b = pb.reshape(1, DIM)

    # attention bias: gather precomputed once (bicubic resize is identity here)
    points = list(itertools.product(range(RESOLUTION), range(RESOLUTION)))
    offsets, idxs = {}, []
    for p1 in points:
        for p2 in points:
            off = (abs(p1[0] - p2[0]), abs(p1[1] - p2[1]))
            if off not in offsets:
                offsets[off] = len(offsets)
            idxs.append(offsets[off])
    ab_idx = jnp.array(idxs, jnp.int32).reshape(N_TOK, N_TOK)
    ab_seg = 0.1 * jax.random.normal(nxt(), (NUM_HEADS, len(offsets)), jnp.float32)
    bias = ab_seg[:, ab_idx]                                       # (nh, N, N)
    bias_pad = jnp.pad(bias, ((0, 0), (0, N_PAD - N_TOK), (0, N_PAD - N_TOK)))

    return dict(qkv_w=qkv_w, qkv_b=qkv_b, vl_w=vl_w, vl_b=vl_b,
                th1_w=th1_w, th1_b=th1_b, th2_w=th2_w, th2_b=th2_b,
                proj_w=proj_w, proj_b=proj_b, bias=bias_pad)


def prepare_kernel_params(p):
    """Fold constants for the fused kernel (done once at init, not per call)."""
    # talking-head-1 (and SCALE) folded into per-output-head lane scales over Q
    th1_scaled = p['th1_w'] * SCALE
    th1_lane = jnp.repeat(th1_scaled, KEY_DIM, axis=1)             # (nh, NH_KD)
    # talking-head-2 folded into per-input-head lane scales over the AV output
    th2_lane = jnp.repeat(p['th2_w'].T, D_HEAD, axis=1)            # (nh, DH)
    th2b_lane = jnp.repeat(p['th2_b'], D_HEAD)                     # (DH,)

    # bias pre-mixed through talking-head-1; padded key columns set to NEG_INF so
    # the masked softmax needs no extra column mask inside the kernel.
    bias49 = p['bias'][:, :N_TOK, :N_TOK]
    bias_mix = (jnp.einsum('ij,jnm->inm', p['th1_w'], bias49)
                + p['th1_b'].reshape(-1, 1, 1))
    bias_mixed = jnp.zeros((NUM_HEADS, N_PAD, N_PAD), jnp.float32)
    bias_mixed = bias_mixed.at[:, :N_TOK, :N_TOK].set(bias_mix)
    bias_mixed = bias_mixed.at[:, :, N_TOK:].set(NEG_INF)

    # small f32 row vectors packed into one (4,128) array (fewer input DMAs)
    rowvecs = np.zeros((4, 128), np.float32)
    rowvecs[0, :QKV_DIM] = np.asarray(p['qkv_b']).reshape(-1)
    rowvecs[1, :DH] = np.asarray(p['vl_b']).reshape(-1)
    rowvecs[2, :DH] = np.asarray(th2b_lane)
    rowvecs[3, :DIM] = np.asarray(p['proj_b']).reshape(-1)

    return dict(
        qkv_w=p['qkv_w'].astype(jnp.bfloat16),
        proj_w=p['proj_w'].astype(jnp.bfloat16),
        sbig=jnp.asarray(_build_shift_big(), jnp.bfloat16),
        bias_mixed=bias_mixed,
        vl_w=p['vl_w'],
        th1_lane=th1_lane,
        th2_lane=th2_lane,
        rowvecs=jnp.asarray(rowvecs),
    )


# ----------------------- pure-JAX reference (f32) ------------------------------
def reference_forward(x, p):
    b, c, h, w = x.shape
    n = h * w
    xt = jnp.transpose(x, (0, 2, 3, 1)).reshape(b, n, c)
    qkv = xt @ p['qkv_w'] + p['qkv_b']
    q = qkv[..., :NH_KD].reshape(b, n, NUM_HEADS, KEY_DIM).transpose(0, 2, 1, 3)
    k = qkv[..., NH_KD:2 * NH_KD].reshape(b, n, NUM_HEADS, KEY_DIM).transpose(0, 2, 1, 3)
    v = qkv[..., 2 * NH_KD:].reshape(b, n, NUM_HEADS, D_HEAD).transpose(0, 2, 1, 3)

    v_map = qkv[..., 2 * NH_KD:].reshape(b, h, w, DH)
    v_pad = jnp.pad(v_map, ((0, 0), (1, 1), (1, 1), (0, 0)))
    vl = jnp.zeros((b, h, w, DH), jnp.float32)
    for dy in range(3):
        for dx in range(3):
            vl = vl + v_pad[:, dy:dy + h, dx:dx + w, :] * p['vl_w'][dy * 3 + dx]
    vl = vl + p['vl_b'].reshape(1, 1, 1, DH)

    bias = p['bias'][:, :n, :n]
    s = jnp.einsum('bhnk,bhmk->bhnm', q, k) * SCALE + bias[None]
    s = jnp.einsum('ij,bjnm->binm', p['th1_w'], s) + p['th1_b'].reshape(1, -1, 1, 1)
    s = jax.nn.softmax(s, axis=-1)
    s = jnp.einsum('ij,bjnm->binm', p['th2_w'], s) + p['th2_b'].reshape(1, -1, 1, 1)
    av = jnp.einsum('bhnm,bhmd->bhnd', s, v)
    out = av.transpose(0, 2, 1, 3).reshape(b, n, DH) + vl.reshape(b, n, DH)
    out = jnp.maximum(out, 0.0)
    out = out @ p['proj_w'] + p['proj_b']
    return out.reshape(b, h, w, DIM).transpose(0, 3, 1, 2)


# ----------------------------------- main --------------------------------------
if __name__ == "__main__":
    root = jax.random.PRNGKey(0)
    kx, kparam = jax.random.split(root)
    x = jax.random.normal(kx, (BATCH, DIM, H, W), jnp.float32)
    params = build_params(kparam)
    kernel_params = prepare_kernel_params(params)

    out = attention4d_forward(x, kernel_params)
    out = jax.block_until_ready(out)
    assert out.shape == (BATCH, DIM, H, W)
    assert bool(jnp.all(jnp.isfinite(out)))

    ref = reference_forward(x, params)
    err = float(jnp.max(jnp.abs(out - ref)))
    assert err < 1e-1, f"max abs err vs f32 reference: {err}"
    print("KERNEL_OK")
</pallas_src>

<mosaic_0001>
module attributes {stable_mosaic.version = 11 : i64} {
  func.func @_attention4d_fused_kernel(%arg0: i32, %arg1: memref<112x32xbf16, #tpu.memory_space<vmem>>, %arg2: memref<32x128xbf16, #tpu.memory_space<vmem>>, %arg3: memref<56x512xbf16, #tpu.memory_space<vmem>>, %arg4: memref<64x32xbf16, #tpu.memory_space<vmem>>, %arg5: memref<4x56x56xf32, #tpu.memory_space<vmem>>, %arg6: memref<9x64xf32, #tpu.memory_space<vmem>>, %arg7: memref<4x32xf32, #tpu.memory_space<vmem>>, %arg8: memref<4x64xf32, #tpu.memory_space<vmem>>, %arg9: memref<4x128xf32, #tpu.memory_space<vmem>>, %arg10: memref<112x32xf32, #tpu.memory_space<vmem>>) attributes {dimension_semantics = [#tpu.dimension_semantics<parallel>], iteration_bounds = array<i64: 1>, scalar_prefetch = 0 : i64, scratch_operands = 0 : i64, tpu.core_type = #tpu.core_type<tc>, window_params = [{transform_indices = @transform_0, window_bounds = array<i64: 112, 32>}, {pipeline_mode = #tpu.pipeline_mode<synchronous>, transform_indices = @transform_1, window_bounds = array<i64: 32, 128>}, {pipeline_mode = #tpu.pipeline_mode<synchronous>, transform_indices = @transform_2, window_bounds = array<i64: 56, 512>}, {pipeline_mode = #tpu.pipeline_mode<synchronous>, transform_indices = @transform_3, window_bounds = array<i64: 64, 32>}, {pipeline_mode = #tpu.pipeline_mode<synchronous>, transform_indices = @transform_4, window_bounds = array<i64: 4, 56, 56>}, {pipeline_mode = #tpu.pipeline_mode<synchronous>, transform_indices = @transform_5, window_bounds = array<i64: 9, 64>}, {pipeline_mode = #tpu.pipeline_mode<synchronous>, transform_indices = @transform_6, window_bounds = array<i64: 4, 32>}, {pipeline_mode = #tpu.pipeline_mode<synchronous>, transform_indices = @transform_7, window_bounds = array<i64: 4, 64>}, {pipeline_mode = #tpu.pipeline_mode<synchronous>, transform_indices = @transform_8, window_bounds = array<i64: 4, 128>}, {transform_indices = @transform_9, window_bounds = array<i64: 112, 32>}]} {
    %c0 = arith.constant 0 : index
    %c0_0 = arith.constant 0 : index
    %0 = vector.load %arg1[%c0, %c0_0] : memref<112x32xbf16, #tpu.memory_space<vmem>>, vector<112x32xbf16>
    %c0_1 = arith.constant 0 : index
    %c0_2 = arith.constant 0 : index
    %1 = vector.load %arg2[%c0_1, %c0_2] : memref<32x128xbf16, #tpu.memory_space<vmem>>, vector<32x128xbf16>
    %cst = arith.constant dense<0.000000e+00> : vector<112x128xf32>
    %2 = tpu.matmul %0, %1, %cst {dimension_numbers = #tpu.dot_dimension_numbers<[1], [0], [0], [1], [0, 0, 1, 1], [], []>} : vector<112x32xbf16>, vector<32x128xbf16>, vector<112x128xf32> -> vector<112x128xf32>
    %c0_3 = arith.constant 0 : index
    %c0_4 = arith.constant 0 : index
    %3 = vector.load %arg9[%c0_3, %c0_4] : memref<4x128xf32, #tpu.memory_space<vmem>>, vector<1x128xf32>
    %4 = vector.broadcast %3 : vector<1x128xf32> to vector<112x128xf32>
    %5 = arith.addf %2, %4 : vector<112x128xf32>
    %6 = tpu.iota {dimensions = array<i32: 0>} : vector<56x1xi32>
    %c49_i32 = arith.constant 49 : i32
    %7 = vector.broadcast %c49_i32 : i32 to vector<56x1xi32>
    %8 = arith.cmpi slt, %6, %7 : vector<56x1xi32>
    %9 = tpu.concatenate %8, %8 in 0 : vector<56x1xi1>, vector<56x1xi1> -> vector<112x1xi1>
    %cst_5 = arith.constant 0.000000e+00 : f32
    %10 = vector.shape_cast %9 : vector<112x1xi1> to vector<112x1xi1>
    %11 = vector.broadcast %10 : vector<112x1xi1> to vector<112x128xi1>
    %12 = vector.broadcast %cst_5 : f32 to vector<112x128xf32>
    %13 = arith.select %11, %5, %12 : vector<112x128xi1>, vector<112x128xf32>
    %c1 = arith.constant 1 : index
    %c0_6 = arith.constant 0 : index
    %14 = vector.load %arg9[%c1, %c0_6] : memref<4x128xf32, #tpu.memory_space<vmem>>, vector<1x64xf32>
    %c2 = arith.constant 2 : index
    %c0_7 = arith.constant 0 : index
    %15 = vector.load %arg9[%c2, %c0_7] : memref<4x128xf32, #tpu.memory_space<vmem>>, vector<1x64xf32>
    %c3 = arith.constant 3 : index
    %c0_8 = arith.constant 0 : index
    %16 = vector.load %arg9[%c3, %c0_8] : memref<4x128xf32, #tpu.memory_space<vmem>>, vector<1x32xf32>
    %c0_9 = arith.constant 0 : index
    %c0_10 = arith.constant 0 : index
    %17 = vector.load %arg3[%c0_9, %c0_10] : memref<56x512xbf16, #tpu.memory_space<vmem>>, vector<56x512xbf16>
    %c0_11 = arith.constant 0 : index
    %c0_12 = arith.constant 0 : index
    %18 = vector.load %arg6[%c0_11, %c0_12] : memref<9x64xf32, #tpu.memory_space<vmem>>, vector<9x64xf32>
    %c0_13 = arith.constant 0 : index
    %c0_14 = arith.constant 0 : index
    %19 = vector.load %arg7[%c0_13, %c0_14] : memref<4x32xf32, #tpu.memory_space<vmem>>, vector<4x32xf32>
    %c0_15 = arith.constant 0 : index
    %c0_16 = arith.constant 0 : index
    %20 = vector.load %arg8[%c0_15, %c0_16] : memref<4x64xf32, #tpu.memory_space<vmem>>, vector<4x64xf32>
    %21 = vector.extract_strided_slice %13 {offsets = [0, 0], sizes = [56, 32], strides = [1, 1]} : vector<112x128xf32> to vector<56x32xf32>
    %22 = vector.extract_strided_slice %13 {offsets = [0, 32], sizes = [56, 32], strides = [1, 1]} : vector<112x128xf32> to vector<56x32xf32>
    %23 = arith.truncf %22 : vector<56x32xf32> to vector<56x32xbf16>
    %24 = vector.extract_strided_slice %13 {offsets = [0, 64], sizes = [56, 64], strides = [1, 1]} : vector<112x128xf32> to vector<56x64xf32>
    %25 = arith.truncf %24 : vector<56x64xf32> to vector<56x64xbf16>
    %26 = vector.extract_strided_slice %18 {offsets = [0, 0], sizes = [1, 64], strides = [1, 1]} : vector<9x64xf32> to vector<1x64xf32>
    %27 = vector.broadcast %26 : vector<1x64xf32> to vector<56x64xf32>
    %28 = arith.mulf %24, %27 : vector<56x64xf32>
    %29 = vector.extract_strided_slice %18 {offsets = [1, 0], sizes = [1, 64], strides = [1, 1]} : vector<9x64xf32> to vector<1x64xf32>
    %30 = vector.broadcast %29 : vector<1x64xf32> to vector<56x64xf32>
    %31 = arith.mulf %24, %30 : vector<56x64xf32>
    %32 = vector.extract_strided_slice %18 {offsets = [2, 0], sizes = [1, 64], strides = [1, 1]} : vector<9x64xf32> to vector<1x64xf32>
    %33 = vector.broadcast %32 : vector<1x64xf32> to vector<56x64xf32>
    %34 = arith.mulf %24, %33 : vector<56x64xf32>
    %35 = vector.extract_strided_slice %18 {offsets = [3, 0], sizes = [1, 64], strides = [1, 1]} : vector<9x64xf32> to vector<1x64xf32>
    %36 = vector.broadcast %35 : vector<1x64xf32> to vector<56x64xf32>
    %37 = arith.mulf %24, %36 : vector<56x64xf32>
    %38 = vector.extract_strided_slice %18 {offsets = [4, 0], sizes = [1, 64], strides = [1, 1]} : vector<9x64xf32> to vector<1x64xf32>
    %39 = vector.broadcast %38 : vector<1x64xf32> to vector<56x64xf32>
    %40 = arith.mulf %24, %39 : vector<56x64xf32>
    %41 = vector.extract_strided_slice %18 {offsets = [5, 0], sizes = [1, 64], strides = [1, 1]} : vector<9x64xf32> to vector<1x64xf32>
    %42 = vector.broadcast %41 : vector<1x64xf32> to vector<56x64xf32>
    %43 = arith.mulf %24, %42 : vector<56x64xf32>
    %44 = vector.extract_strided_slice %18 {offsets = [6, 0], sizes = [1, 64], strides = [1, 1]} : vector<9x64xf32> to vector<1x64xf32>
    %45 = vector.broadcast %44 : vector<1x64xf32> to vector<56x64xf32>
    %46 = arith.mulf %24, %45 : vector<56x64xf32>
    %47 = vector.extract_strided_slice %18 {offsets = [7, 0], sizes = [1, 64], strides = [1, 1]} : vector<9x64xf32> to vector<1x64xf32>
    %48 = vector.broadcast %47 : vector<1x64xf32> to vector<56x64xf32>
    %49 = arith.mulf %24, %48 : vector<56x64xf32>
    %50 = vector.extract_strided_slice %18 {offsets = [8, 0], sizes = [1, 64], strides = [1, 1]} : vector<9x64xf32> to vector<1x64xf32>
    %51 = vector.broadcast %50 : vector<1x64xf32> to vector<56x64xf32>
    %52 = arith.mulf %24, %51 : vector<56x64xf32>
    %cst_17 = arith.constant 0.000000e+00 : f32
    %53 = vector.broadcast %cst_17 : f32 to vector<8x64xf32>
    %54 = tpu.concatenate %28, %31, %34, %37, %40, %43, %46, %49, %52, %53 in 0 : vector<56x64xf32>, vector<56x64xf32>, vector<56x64xf32>, vector<56x64xf32>, vector<56x64xf32>, vector<56x64xf32>, vector<56x64xf32>, vector<56x64xf32>, vector<56x64xf32>, vector<8x64xf32> -> vector<512x64xf32>
    %55 = arith.truncf %54 : vector<512x64xf32> to vector<512x64xbf16>
    %cst_18 = arith.constant dense<0.000000e+00> : vector<56x64xf32>
    %56 = tpu.matmul %17, %55, %cst_18 {dimension_numbers = #tpu.dot_dimension_numbers<[1], [0], [0], [1], [0, 0, 1, 1], [], []>} : vector<56x512xbf16>, vector<512x64xbf16>, vector<56x64xf32> -> vector<56x64xf32>
    %57 = vector.broadcast %14 : vector<1x64xf32> to vector<56x64xf32>
    %58 = arith.addf %56, %57 : vector<56x64xf32>
    %cst_19 = arith.constant dense<0.000000e+00> : vector<64xf32>
    %59 = vector.multi_reduction <add>, %24, %cst_19 [0] : vector<56x64xf32> to vector<64xf32>
    %60 = vector.shape_cast %59 : vector<64xf32> to vector<1x64xf32>
    %61 = vector.extract_strided_slice %19 {offsets = [0, 0], sizes = [1, 32], strides = [1, 1]} : vector<4x32xf32> to vector<1x32xf32>
    %62 = vector.broadcast %61 : vector<1x32xf32> to vector<56x32xf32>
    %63 = arith.mulf %21, %62 : vector<56x32xf32>
    %64 = arith.truncf %63 : vector<56x32xf32> to vector<56x32xbf16>
    %cst_20 = arith.constant dense<0.000000e+00> : vector<56x56xf32>
    %65 = tpu.matmul %64, %23, %cst_20 {dimension_numbers = #tpu.dot_dimension_numbers<[1], [1], [0], [0], [0, 0, 1, 0], [], []>} : vector<56x32xbf16>, vector<56x32xbf16>, vector<56x56xf32> -> vector<56x56xf32>
    %c0_21 = arith.constant 0 : index
    %c0_22 = arith.constant 0 : index
    %c0_23 = arith.constant 0 : index
    %66 = vector.load %arg5[%c0_21, %c0_22, %c0_23] : memref<4x56x56xf32, #tpu.memory_space<vmem>>, vector<1x56x56xf32>
    %67 = vector.shape_cast %66 : vector<1x56x56xf32> to vector<56x56xf32>
    %68 = arith.addf %65, %67 : vector<56x56xf32>
    %cst_24 = arith.constant dense<0xFF800000> : vector<56xf32>
    %69 = vector.multi_reduction <maximumf>, %68, %cst_24 [1] : vector<56x56xf32> to vector<56xf32>
    %70 = vector.shape_cast %69 : vector<56xf32> to vector<56x1xf32>
    %71 = vector.broadcast %70 : vector<56x1xf32> to vector<56x56xf32>
    %72 = arith.subf %68, %71 : vector<56x56xf32>
    %73 = math.exp %72 : vector<56x56xf32>
    %cst_25 = arith.constant dense<0.000000e+00> : vector<56xf32>
    %74 = vector.multi_reduction <add>, %73, %cst_25 [1] : vector<56x56xf32> to vector<56xf32>
    %75 = vector.shape_cast %74 : vector<56xf32> to vector<56x1xf32>
    %76 = tpu.reciprocal %75 {approx = true} : vector<56x1xf32> -> vector<56x1xf32>
    %77 = vector.broadcast %76 : vector<56x1xf32> to vector<56x56xf32>
    %78 = arith.mulf %73, %77 : vector<56x56xf32>
    %79 = arith.truncf %78 : vector<56x56xf32> to vector<56x56xbf16>
    %cst_26 = arith.constant dense<0.000000e+00> : vector<56x64xf32>
    %80 = tpu.matmul %79, %25, %cst_26 {dimension_numbers = #tpu.dot_dimension_numbers<[1], [0], [0], [1], [0, 0, 1, 1], [], []>} : vector<56x56xbf16>, vector<56x64xbf16>, vector<56x64xf32> -> vector<56x64xf32>
    %81 = vector.extract_strided_slice %20 {offsets = [0, 0], sizes = [1, 64], strides = [1, 1]} : vector<4x64xf32> to vector<1x64xf32>
    %82 = vector.broadcast %81 : vector<1x64xf32> to vector<56x64xf32>
    %83 = arith.mulf %80, %82 : vector<56x64xf32>
    %84 = vector.extract_strided_slice %19 {offsets = [1, 0], sizes = [1, 32], strides = [1, 1]} : vector<4x32xf32> to vector<1x32xf32>
    %85 = vector.broadcast %84 : vector<1x32xf32> to vector<56x32xf32>
    %86 = arith.mulf %21, %85 : vector<56x32xf32>
    %87 = arith.truncf %86 : vector<56x32xf32> to vector<56x32xbf16>
    %cst_27 = arith.constant dense<0.000000e+00> : vector<56x56xf32>
    %88 = tpu.matmul %87, %23, %cst_27 {dimension_numbers = #tpu.dot_dimension_numbers<[1], [1], [0], [0], [0, 0, 1, 0], [], []>} : vector<56x32xbf16>, vector<56x32xbf16>, vector<56x56xf32> -> vector<56x56xf32>
    %c1_28 = arith.constant 1 : index
    %c0_29 = arith.constant 0 : index
    %c0_30 = arith.constant 0 : index
    %89 = vector.load %arg5[%c1_28, %c0_29, %c0_30] : memref<4x56x56xf32, #tpu.memory_space<vmem>>, vector<1x56x56xf32>
    %90 = vector.shape_cast %89 : vector<1x56x56xf32> to vector<56x56xf32>
    %91 = arith.addf %88, %90 : vector<56x56xf32>
    %cst_31 = arith.constant dense<0xFF800000> : vector<56xf32>
    %92 = vector.multi_reduction <maximumf>, %91, %cst_31 [1] : vector<56x56xf32> to vector<56xf32>
    %93 = vector.shape_cast %92 : vector<56xf32> to vector<56x1xf32>
    %94 = vector.broadcast %93 : vector<56x1xf32> to vector<56x56xf32>
    %95 = arith.subf %91, %94 : vector<56x56xf32>
    %96 = math.exp %95 : vector<56x56xf32>
    %cst_32 = arith.constant dense<0.000000e+00> : vector<56xf32>
    %97 = vector.multi_reduction <add>, %96, %cst_32 [1] : vector<56x56xf32> to vector<56xf32>
    %98 = vector.shape_cast %97 : vector<56xf32> to vector<56x1xf32>
    %99 = tpu.reciprocal %98 {approx = true} : vector<56x1xf32> -> vector<56x1xf32>
    %100 = vector.broadcast %99 : vector<56x1xf32> to vector<56x56xf32>
    %101 = arith.mulf %96, %100 : vector<56x56xf32>
    %102 = arith.truncf %101 : vector<56x56xf32> to vector<56x56xbf16>
    %cst_33 = arith.constant dense<0.000000e+00> : vector<56x64xf32>
    %103 = tpu.matmul %102, %25, %cst_33 {dimension_numbers = #tpu.dot_dimension_numbers<[1], [0], [0], [1], [0, 0, 1, 1], [], []>} : vector<56x56xbf16>, vector<56x64xbf16>, vector<56x64xf32> -> vector<56x64xf32>
    %104 = vector.extract_strided_slice %20 {offsets = [1, 0], sizes = [1, 64], strides = [1, 1]} : vector<4x64xf32> to vector<1x64xf32>
    %105 = vector.broadcast %104 : vector<1x64xf32> to vector<56x64xf32>
    %106 = arith.mulf %103, %105 : vector<56x64xf32>
    %107 = arith.addf %83, %106 : vector<56x64xf32>
    %108 = vector.extract_strided_slice %19 {offsets = [2, 0], sizes = [1, 32], strides = [1, 1]} : vector<4x32xf32> to vector<1x32xf32>
    %109 = vector.broadcast %108 : vector<1x32xf32> to vector<56x32xf32>
    %110 = arith.mulf %21, %109 : vector<56x32xf32>
    %111 = arith.truncf %110 : vector<56x32xf32> to vector<56x32xbf16>
    %cst_34 = arith.constant dense<0.000000e+00> : vector<56x56xf32>
    %112 = tpu.matmul %111, %23, %cst_34 {dimension_numbers = #tpu.dot_dimension_numbers<[1], [1], [0], [0], [0, 0, 1, 0], [], []>} : vector<56x32xbf16>, vector<56x32xbf16>, vector<56x56xf32> -> vector<56x56xf32>
    %c2_35 = arith.constant 2 : index
    %c0_36 = arith.constant 0 : index
    %c0_37 = arith.constant 0 : index
    %113 = vector.load %arg5[%c2_35, %c0_36, %c0_37] : memref<4x56x56xf32, #tpu.memory_space<vmem>>, vector<1x56x56xf32>
    %114 = vector.shape_cast %113 : vector<1x56x56xf32> to vector<56x56xf32>
    %115 = arith.addf %112, %114 : vector<56x56xf32>
    %cst_38 = arith.constant dense<0xFF800000> : vector<56xf32>
    %116 = vector.multi_reduction <maximumf>, %115, %cst_38 [1] : vector<56x56xf32> to vector<56xf32>
    %117 = vector.shape_cast %116 : vector<56xf32> to vector<56x1xf32>
    %118 = vector.broadcast %117 : vector<56x1xf32> to vector<56x56xf32>
    %119 = arith.subf %115, %118 : vector<56x56xf32>
    %120 = math.exp %119 : vector<56x56xf32>
    %cst_39 = arith.constant dense<0.000000e+00> : vector<56xf32>
    %121 = vector.multi_reduction <add>, %120, %cst_39 [1] : vector<56x56xf32> to vector<56xf32>
    %122 = vector.shape_cast %121 : vector<56xf32> to vector<56x1xf32>
    %123 = tpu.reciprocal %122 {approx = true} : vector<56x1xf32> -> vector<56x1xf32>
    %124 = vector.broadcast %123 : vector<56x1xf32> to vector<56x56xf32>
    %125 = arith.mulf %120, %124 : vector<56x56xf32>
    %126 = arith.truncf %125 : vector<56x56xf32> to vector<56x56xbf16>
    %cst_40 = arith.constant dense<0.000000e+00> : vector<56x64xf32>
    %127 = tpu.matmul %126, %25, %cst_40 {dimension_numbers = #tpu.dot_dimension_numbers<[1], [0], [0], [1], [0, 0, 1, 1], [], []>} : vector<56x56xbf16>, vector<56x64xbf16>, vector<56x64xf32> -> vector<56x64xf32>
    %128 = vector.extract_strided_slice %20 {offsets = [2, 0], sizes = [1, 64], strides = [1, 1]} : vector<4x64xf32> to vector<1x64xf32>
    %129 = vector.broadcast %128 : vector<1x64xf32> to vector<56x64xf32>
    %130 = arith.mulf %127, %129 : vector<56x64xf32>
    %131 = arith.addf %107, %130 : vector<56x64xf32>
    %132 = vector.extract_strided_slice %19 {offsets = [3, 0], sizes = [1, 32], strides = [1, 1]} : vector<4x32xf32> to vector<1x32xf32>
    %133 = vector.broadcast %132 : vector<1x32xf32> to vector<56x32xf32>
    %134 = arith.mulf %21, %133 : vector<56x32xf32>
    %135 = arith.truncf %134 : vector<56x32xf32> to vector<56x32xbf16>
    %cst_41 = arith.constant dense<0.000000e+00> : vector<56x56xf32>
    %136 = tpu.matmul %135, %23, %cst_41 {dimension_numbers = #tpu.dot_dimension_numbers<[1], [1], [0], [0], [0, 0, 1, 0], [], []>} : vector<56x32xbf16>, vector<56x32xbf16>, vector<56x56xf32> -> vector<56x56xf32>
    %c3_42 = arith.constant 3 : index
    %c0_43 = arith.constant 0 : index
    %c0_44 = arith.constant 0 : index
    %137 = vector.load %arg5[%c3_42, %c0_43, %c0_44] : memref<4x56x56xf32, #tpu.memory_space<vmem>>, vector<1x56x56xf32>
    %138 = vector.shape_cast %137 : vector<1x56x56xf32> to vector<56x56xf32>
    %139 = arith.addf %136, %138 : vector<56x56xf32>
    %cst_45 = arith.constant dense<0xFF800000> : vector<56xf32>
    %140 = vector.multi_reduction <maximumf>, %139, %cst_45 [1] : vector<56x56xf32> to vector<56xf32>
    %141 = vector.shape_cast %140 : vector<56xf32> to vector<56x1xf32>
    %142 = vector.broadcast %141 : vector<56x1xf32> to vector<56x56xf32>
    %143 = arith.subf %139, %142 : vector<56x56xf32>
    %144 = math.exp %143 : vector<56x56xf32>
    %cst_46 = arith.constant dense<0.000000e+00> : vector<56xf32>
    %145 = vector.multi_reduction <add>, %144, %cst_46 [1] : vector<56x56xf32> to vector<56xf32>
    %146 = vector.shape_cast %145 : vector<56xf32> to vector<56x1xf32>
    %147 = tpu.reciprocal %146 {approx = true} : vector<56x1xf32> -> vector<56x1xf32>
    %148 = vector.broadcast %147 : vector<56x1xf32> to vector<56x56xf32>
    %149 = arith.mulf %144, %148 : vector<56x56xf32>
    %150 = arith.truncf %149 : vector<56x56xf32> to vector<56x56xbf16>
    %cst_47 = arith.constant dense<0.000000e+00> : vector<56x64xf32>
    %151 = tpu.matmul %150, %25, %cst_47 {dimension_numbers = #tpu.dot_dimension_numbers<[1], [0], [0], [1], [0, 0, 1, 1], [], []>} : vector<56x56xbf16>, vector<56x64xbf16>, vector<56x64xf32> -> vector<56x64xf32>
    %152 = vector.extract_strided_slice %20 {offsets = [3, 0], sizes = [1, 64], strides = [1, 1]} : vector<4x64xf32> to vector<1x64xf32>
    %153 = vector.broadcast %152 : vector<1x64xf32> to vector<56x64xf32>
    %154 = arith.mulf %151, %153 : vector<56x64xf32>
    %155 = arith.addf %131, %154 : vector<56x64xf32>
    %156 = arith.mulf %15, %60 : vector<1x64xf32>
    %157 = vector.broadcast %156 : vector<1x64xf32> to vector<56x64xf32>
    %158 = arith.addf %155, %157 : vector<56x64xf32>
    %159 = arith.addf %158, %58 : vector<56x64xf32>
    %cst_48 = arith.constant 0.000000e+00 : f32
    %160 = vector.broadcast %cst_48 : f32 to vector<56x64xf32>
    %161 = arith.maximumf %159, %160 : vector<56x64xf32>
    %162 = vector.extract_strided_slice %13 {offsets = [56, 0], sizes = [56, 32], strides = [1, 1]} : vector<112x128xf32> to vector<56x32xf32>
    %163 = vector.extract_strided_slice %13 {offsets = [56, 32], sizes = [56, 32], strides = [1, 1]} : vector<112x128xf32> to vector<56x32xf32>
    %164 = arith.truncf %163 : vector<56x32xf32> to vector<56x32xbf16>
    %165 = vector.extract_strided_slice %13 {offsets = [56, 64], sizes = [56, 64], strides = [1, 1]} : vector<112x128xf32> to vector<56x64xf32>
    %166 = arith.truncf %165 : vector<56x64xf32> to vector<56x64xbf16>
    %167 = vector.extract_strided_slice %18 {offsets = [0, 0], sizes = [1, 64], strides = [1, 1]} : vector<9x64xf32> to vector<1x64xf32>
    %168 = vector.broadcast %167 : vector<1x64xf32> to vector<56x64xf32>
    %169 = arith.mulf %165, %168 : vector<56x64xf32>
    %170 = vector.extract_strided_slice %18 {offsets = [1, 0], sizes = [1, 64], strides = [1, 1]} : vector<9x64xf32> to vector<1x64xf32>
    %171 = vector.broadcast %170 : vector<1x64xf32> to vector<56x64xf32>
    %172 = arith.mulf %165, %171 : vector<56x64xf32>
    %173 = vector.extract_strided_slice %18 {offsets = [2, 0], sizes = [1, 64], strides = [1, 1]} : vector<9x64xf32> to vector<1x64xf32>
    %174 = vector.broadcast %173 : vector<1x64xf32> to vector<56x64xf32>
    %175 = arith.mulf %165, %174 : vector<56x64xf32>
    %176 = vector.extract_strided_slice %18 {offsets = [3, 0], sizes = [1, 64], strides = [1, 1]} : vector<9x64xf32> to vector<1x64xf32>
    %177 = vector.broadcast %176 : vector<1x64xf32> to vector<56x64xf32>
    %178 = arith.mulf %165, %177 : vector<56x64xf32>
    %179 = vector.extract_strided_slice %18 {offsets = [4, 0], sizes = [1, 64], strides = [1, 1]} : vector<9x64xf32> to vector<1x64xf32>
    %180 = vector.broadcast %179 : vector<1x64xf32> to vector<56x64xf32>
    %181 = arith.mulf %165, %180 : vector<56x64xf32>
    %182 = vector.extract_strided_slice %18 {offsets = [5, 0], sizes = [1, 64], strides = [1, 1]} : vector<9x64xf32> to vector<1x64xf32>
    %183 = vector.broadcast %182 : vector<1x64xf32> to vector<56x64xf32>
    %184 = arith.mulf %165, %183 : vector<56x64xf32>
    %185 = vector.extract_strided_slice %18 {offsets = [6, 0], sizes = [1, 64], strides = [1, 1]} : vector<9x64xf32> to vector<1x64xf32>
    %186 = vector.broadcast %185 : vector<1x64xf32> to vector<56x64xf32>
    %187 = arith.mulf %165, %186 : vector<56x64xf32>
    %188 = vector.extract_strided_slice %18 {offsets = [7, 0], sizes = [1, 64], strides = [1, 1]} : vector<9x64xf32> to vector<1x64xf32>
    %189 = vector.broadcast %188 : vector<1x64xf32> to vector<56x64xf32>
    %190 = arith.mulf %165, %189 : vector<56x64xf32>
    %191 = vector.extract_strided_slice %18 {offsets = [8, 0], sizes = [1, 64], strides = [1, 1]} : vector<9x64xf32> to vector<1x64xf32>
    %192 = vector.broadcast %191 : vector<1x64xf32> to vector<56x64xf32>
    %193 = arith.mulf %165, %192 : vector<56x64xf32>
    %cst_49 = arith.constant 0.000000e+00 : f32
    %194 = vector.broadcast %cst_49 : f32 to vector<8x64xf32>
    %195 = tpu.concatenate %169, %172, %175, %178, %181, %184, %187, %190, %193, %194 in 0 : vector<56x64xf32>, vector<56x64xf32>, vector<56x64xf32>, vector<56x64xf32>, vector<56x64xf32>, vector<56x64xf32>, vector<56x64xf32>, vector<56x64xf32>, vector<56x64xf32>, vector<8x64xf32> -> vector<512x64xf32>
    %196 = arith.truncf %195 : vector<512x64xf32> to vector<512x64xbf16>
    %cst_50 = arith.constant dense<0.000000e+00> : vector<56x64xf32>
    %197 = tpu.matmul %17, %196, %cst_50 {dimension_numbers = #tpu.dot_dimension_numbers<[1], [0], [0], [1], [0, 0, 1, 1], [], []>} : vector<56x512xbf16>, vector<512x64xbf16>, vector<56x64xf32> -> vector<56x64xf32>
    %198 = vector.broadcast %14 : vector<1x64xf32> to vector<56x64xf32>
    %199 = arith.addf %197, %198 : vector<56x64xf32>
    %cst_51 = arith.constant dense<0.000000e+00> : vector<64xf32>
    %200 = vector.multi_reduction <add>, %165, %cst_51 [0] : vector<56x64xf32> to vector<64xf32>
    %201 = vector.shape_cast %200 : vector<64xf32> to vector<1x64xf32>
    %202 = vector.extract_strided_slice %19 {offsets = [0, 0], sizes = [1, 32], strides = [1, 1]} : vector<4x32xf32> to vector<1x32xf32>
    %203 = vector.broadcast %202 : vector<1x32xf32> to vector<56x32xf32>
    %204 = arith.mulf %162, %203 : vector<56x32xf32>
    %205 = arith.truncf %204 : vector<56x32xf32> to vector<56x32xbf16>
    %cst_52 = arith.constant dense<0.000000e+00> : vector<56x56xf32>
    %206 = tpu.matmul %205, %164, %cst_52 {dimension_numbers = #tpu.dot_dimension_numbers<[1], [1], [0], [0], [0, 0, 1, 0], [], []>} : vector<56x32xbf16>, vector<56x32xbf16>, vector<56x56xf32> -> vector<56x56xf32>
    %c0_53 = arith.constant 0 : index
    %c0_54 = arith.constant 0 : index
    %c0_55 = arith.constant 0 : index
    %207 = vector.load %arg5[%c0_53, %c0_54, %c0_55] : memref<4x56x56xf32, #tpu.memory_space<vmem>>, vector<1x56x56xf32>
    %208 = vector.shape_cast %207 : vector<1x56x56xf32> to vector<56x56xf32>
    %209 = arith.addf %206, %208 : vector<56x56xf32>
    %cst_56 = arith.constant dense<0xFF800000> : vector<56xf32>
    %210 = vector.multi_reduction <maximumf>, %209, %cst_56 [1] : vector<56x56xf32> to vector<56xf32>
    %211 = vector.shape_cast %210 : vector<56xf32> to vector<56x1xf32>
    %212 = vector.broadcast %211 : vector<56x1xf32> to vector<56x56xf32>
    %213 = arith.subf %209, %212 : vector<56x56xf32>
    %214 = math.exp %213 : vector<56x56xf32>
    %cst_57 = arith.constant dense<0.000000e+00> : vector<56xf32>
    %215 = vector.multi_reduction <add>, %214, %cst_57 [1] : vector<56x56xf32> to vector<56xf32>
    %216 = vector.shape_cast %215 : vector<56xf32> to vector<56x1xf32>
    %217 = tpu.reciprocal %216 {approx = true} : vector<56x1xf32> -> vector<56x1xf32>
    %218 = vector.broadcast %217 : vector<56x1xf32> to vector<56x56xf32>
    %219 = arith.mulf %214, %218 : vector<56x56xf32>
    %220 = arith.truncf %219 : vector<56x56xf32> to vector<56x56xbf16>
    %cst_58 = arith.constant dense<0.000000e+00> : vector<56x64xf32>
    %221 = tpu.matmul %220, %166, %cst_58 {dimension_numbers = #tpu.dot_dimension_numbers<[1], [0], [0], [1], [0, 0, 1, 1], [], []>} : vector<56x56xbf16>, vector<56x64xbf16>, vector<56x64xf32> -> vector<56x64xf32>
    %222 = vector.extract_strided_slice %20 {offsets = [0, 0], sizes = [1, 64], strides = [1, 1]} : vector<4x64xf32> to vector<1x64xf32>
    %223 = vector.broadcast %222 : vector<1x64xf32> to vector<56x64xf32>
    %224 = arith.mulf %221, %223 : vector<56x64xf32>
    %225 = vector.extract_strided_slice %19 {offsets = [1, 0], sizes = [1, 32], strides = [1, 1]} : vector<4x32xf32> to vector<1x32xf32>
    %226 = vector.broadcast %225 : vector<1x32xf32> to vector<56x32xf32>
    %227 = arith.mulf %162, %226 : vector<56x32xf32>
    %228 = arith.truncf %227 : vector<56x32xf32> to vector<56x32xbf16>
    %cst_59 = arith.constant dense<0.000000e+00> : vector<56x56xf32>
    %229 = tpu.matmul %228, %164, %cst_59 {dimension_numbers = #tpu.dot_dimension_numbers<[1], [1], [0], [0], [0, 0, 1, 0], [], []>} : vector<56x32xbf16>, vector<56x32xbf16>, vector<56x56xf32> -> vector<56x56xf32>
    %c1_60 = arith.constant 1 : index
    %c0_61 = arith.constant 0 : index
    %c0_62 = arith.constant 0 : index
    %230 = vector.load %arg5[%c1_60, %c0_61, %c0_62] : memref<4x56x56xf32, #tpu.memory_space<vmem>>, vector<1x56x56xf32>
    %231 = vector.shape_cast %230 : vector<1x56x56xf32> to vector<56x56xf32>
    %232 = arith.addf %229, %231 : vector<56x56xf32>
    %cst_63 = arith.constant dense<0xFF800000> : vector<56xf32>
    %233 = vector.multi_reduction <maximumf>, %232, %cst_63 [1] : vector<56x56xf32> to vector<56xf32>
    %234 = vector.shape_cast %233 : vector<56xf32> to vector<56x1xf32>
    %235 = vector.broadcast %234 : vector<56x1xf32> to vector<56x56xf32>
    %236 = arith.subf %232, %235 : vector<56x56xf32>
    %237 = math.exp %236 : vector<56x56xf32>
    %cst_64 = arith.constant dense<0.000000e+00> : vector<56xf32>
    %238 = vector.multi_reduction <add>, %237, %cst_64 [1] : vector<56x56xf32> to vector<56xf32>
    %239 = vector.shape_cast %238 : vector<56xf32> to vector<56x1xf32>
    %240 = tpu.reciprocal %239 {approx = true} : vector<56x1xf32> -> vector<56x1xf32>
    %241 = vector.broadcast %240 : vector<56x1xf32> to vector<56x56xf32>
    %242 = arith.mulf %237, %241 : vector<56x56xf32>
    %243 = arith.truncf %242 : vector<56x56xf32> to vector<56x56xbf16>
    %cst_65 = arith.constant dense<0.000000e+00> : vector<56x64xf32>
    %244 = tpu.matmul %243, %166, %cst_65 {dimension_numbers = #tpu.dot_dimension_numbers<[1], [0], [0], [1], [0, 0, 1, 1], [], []>} : vector<56x56xbf16>, vector<56x64xbf16>, vector<56x64xf32> -> vector<56x64xf32>
    %245 = vector.extract_strided_slice %20 {offsets = [1, 0], sizes = [1, 64], strides = [1, 1]} : vector<4x64xf32> to vector<1x64xf32>
    %246 = vector.broadcast %245 : vector<1x64xf32> to vector<56x64xf32>
    %247 = arith.mulf %244, %246 : vector<56x64xf32>
    %248 = arith.addf %224, %247 : vector<56x64xf32>
    %249 = vector.extract_strided_slice %19 {offsets = [2, 0], sizes = [1, 32], strides = [1, 1]} : vector<4x32xf32> to vector<1x32xf32>
    %250 = vector.broadcast %249 : vector<1x32xf32> to vector<56x32xf32>
    %251 = arith.mulf %162, %250 : vector<56x32xf32>
    %252 = arith.truncf %251 : vector<56x32xf32> to vector<56x32xbf16>
    %cst_66 = arith.constant dense<0.000000e+00> : vector<56x56xf32>
    %253 = tpu.matmul %252, %164, %cst_66 {dimension_numbers = #tpu.dot_dimension_numbers<[1], [1], [0], [0], [0, 0, 1, 0], [], []>} : vector<56x32xbf16>, vector<56x32xbf16>, vector<56x56xf32> -> vector<56x56xf32>
    %c2_67 = arith.constant 2 : index
    %c0_68 = arith.constant 0 : index
    %c0_69 = arith.constant 0 : index
    %254 = vector.load %arg5[%c2_67, %c0_68, %c0_69] : memref<4x56x56xf32, #tpu.memory_space<vmem>>, vector<1x56x56xf32>
    %255 = vector.shape_cast %254 : vector<1x56x56xf32> to vector<56x56xf32>
    %256 = arith.addf %253, %255 : vector<56x56xf32>
    %cst_70 = arith.constant dense<0xFF800000> : vector<56xf32>
    %257 = vector.multi_reduction <maximumf>, %256, %cst_70 [1] : vector<56x56xf32> to vector<56xf32>
    %258 = vector.shape_cast %257 : vector<56xf32> to vector<56x1xf32>
    %259 = vector.broadcast %258 : vector<56x1xf32> to vector<56x56xf32>
    %260 = arith.subf %256, %259 : vector<56x56xf32>
    %261 = math.exp %260 : vector<56x56xf32>
    %cst_71 = arith.constant dense<0.000000e+00> : vector<56xf32>
    %262 = vector.multi_reduction <add>, %261, %cst_71 [1] : vector<56x56xf32> to vector<56xf32>
    %263 = vector.shape_cast %262 : vector<56xf32> to vector<56x1xf32>
    %264 = tpu.reciprocal %263 {approx = true} : vector<56x1xf32> -> vector<56x1xf32>
    %265 = vector.broadcast %264 : vector<56x1xf32> to vector<56x56xf32>
    %266 = arith.mulf %261, %265 : vector<56x56xf32>
    %267 = arith.truncf %266 : vector<56x56xf32> to vector<56x56xbf16>
    %cst_72 = arith.constant dense<0.000000e+00> : vector<56x64xf32>
    %268 = tpu.matmul %267, %166, %cst_72 {dimension_numbers = #tpu.dot_dimension_numbers<[1], [0], [0], [1], [0, 0, 1, 1], [], []>} : vector<56x56xbf16>, vector<56x64xbf16>, vector<56x64xf32> -> vector<56x64xf32>
    %269 = vector.extract_strided_slice %20 {offsets = [2, 0], sizes = [1, 64], strides = [1, 1]} : vector<4x64xf32> to vector<1x64xf32>
    %270 = vector.broadcast %269 : vector<1x64xf32> to vector<56x64xf32>
    %271 = arith.mulf %268, %270 : vector<56x64xf32>
    %272 = arith.addf %248, %271 : vector<56x64xf32>
    %273 = vector.extract_strided_slice %19 {offsets = [3, 0], sizes = [1, 32], strides = [1, 1]} : vector<4x32xf32> to vector<1x32xf32>
    %274 = vector.broadcast %273 : vector<1x32xf32> to vector<56x32xf32>
    %275 = arith.mulf %162, %274 : vector<56x32xf32>
    %276 = arith.truncf %275 : vector<56x32xf32> to vector<56x32xbf16>
    %cst_73 = arith.constant dense<0.000000e+00> : vector<56x56xf32>
    %277 = tpu.matmul %276, %164, %cst_73 {dimension_numbers = #tpu.dot_dimension_numbers<[1], [1], [0], [0], [0, 0, 1, 0], [], []>} : vector<56x32xbf16>, vector<56x32xbf16>, vector<56x56xf32> -> vector<56x56xf32>
    %c3_74 = arith.constant 3 : index
    %c0_75 = arith.constant 0 : index
    %c0_76 = arith.constant 0 : index
    %278 = vector.load %arg5[%c3_74, %c0_75, %c0_76] : memref<4x56x56xf32, #tpu.memory_space<vmem>>, vector<1x56x56xf32>
    %279 = vector.shape_cast %278 : vector<1x56x56xf32> to vector<56x56xf32>
    %280 = arith.addf %277, %279 : vector<56x56xf32>
    %cst_77 = arith.constant dense<0xFF800000> : vector<56xf32>
    %281 = vector.multi_reduction <maximumf>, %280, %cst_77 [1] : vector<56x56xf32> to vector<56xf32>
    %282 = vector.shape_cast %281 : vector<56xf32> to vector<56x1xf32>
    %283 = vector.broadcast %282 : vector<56x1xf32> to vector<56x56xf32>
    %284 = arith.subf %280, %283 : vector<56x56xf32>
    %285 = math.exp %284 : vector<56x56xf32>
    %cst_78 = arith.constant dense<0.000000e+00> : vector<56xf32>
    %286 = vector.multi_reduction <add>, %285, %cst_78 [1] : vector<56x56xf32> to vector<56xf32>
    %287 = vector.shape_cast %286 : vector<56xf32> to vector<56x1xf32>
    %288 = tpu.reciprocal %287 {approx = true} : vector<56x1xf32> -> vector<56x1xf32>
    %289 = vector.broadcast %288 : vector<56x1xf32> to vector<56x56xf32>
    %290 = arith.mulf %285, %289 : vector<56x56xf32>
    %291 = arith.truncf %290 : vector<56x56xf32> to vector<56x56xbf16>
    %cst_79 = arith.constant dense<0.000000e+00> : vector<56x64xf32>
    %292 = tpu.matmul %291, %166, %cst_79 {dimension_numbers = #tpu.dot_dimension_numbers<[1], [0], [0], [1], [0, 0, 1, 1], [], []>} : vector<56x56xbf16>, vector<56x64xbf16>, vector<56x64xf32> -> vector<56x64xf32>
    %293 = vector.extract_strided_slice %20 {offsets = [3, 0], sizes = [1, 64], strides = [1, 1]} : vector<4x64xf32> to vector<1x64xf32>
    %294 = vector.broadcast %293 : vector<1x64xf32> to vector<56x64xf32>
    %295 = arith.mulf %292, %294 : vector<56x64xf32>
    %296 = arith.addf %272, %295 : vector<56x64xf32>
    %297 = arith.mulf %15, %201 : vector<1x64xf32>
    %298 = vector.broadcast %297 : vector<1x64xf32> to vector<56x64xf32>
    %299 = arith.addf %296, %298 : vector<56x64xf32>
    %300 = arith.addf %299, %199 : vector<56x64xf32>
    %cst_80 = arith.constant 0.000000e+00 : f32
    %301 = vector.broadcast %cst_80 : f32 to vector<56x64xf32>
    %302 = arith.maximumf %300, %301 : vector<56x64xf32>
    %303 = tpu.concatenate %161, %302 in 0 : vector<56x64xf32>, vector<56x64xf32> -> vector<112x64xf32>
    %304 = arith.truncf %303 : vector<112x64xf32> to vector<112x64xbf16>
    %c0_81 = arith.constant 0 : index
    %c0_82 = arith.constant 0 : index
    %305 = vector.load %arg4[%c0_81, %c0_82] : memref<64x32xbf16, #tpu.memory_space<vmem>>, vector<64x32xbf16>
    %cst_83 = arith.constant dense<0.000000e+00> : vector<112x32xf32>
    %306 = tpu.matmul %304, %305, %cst_83 {dimension_numbers = #tpu.dot_dimension_numbers<[1], [0], [0], [1], [0, 0, 1, 1], [], []>} : vector<112x64xbf16>, vector<64x32xbf16>, vector<112x32xf32> -> vector<112x32xf32>
    %307 = vector.broadcast %16 : vector<1x32xf32> to vector<112x32xf32>
    %308 = arith.addf %306, %307 : vector<112x32xf32>
    %c0_84 = arith.constant 0 : index
    %c0_85 = arith.constant 0 : index
    %309 = vector.load %arg10[%c0_84, %c0_85] : memref<112x32xf32, #tpu.memory_space<vmem>>, vector<112x32xf32>
    tpu.vector_store %arg10[%c0_84, %c0_85], %308 {strides = array<i32>} : memref<112x32xf32, #tpu.memory_space<vmem>>, vector<112x32xf32>,
    return
  }
  func.func @transform_0(%arg0: i32) -> (i32, i32) {
    %c0_i32 = arith.constant 0 : i32
    %c0_i32_0 = arith.constant 0 : i32
    return %arg0, %c0_i32 : i32, i32
  }
  func.func @transform_1(%arg0: i32) -> (i32, i32) {
    %c0_i32 = arith.constant 0 : i32
    %c0_i32_0 = arith.constant 0 : i32
    %c0_i32_1 = arith.constant 0 : i32
    return %c0_i32, %c0_i32_0 : i32, i32
  }
  func.func @transform_2(%arg0: i32) -> (i32, i32) {
    %c0_i32 = arith.constant 0 : i32
    %c0_i32_0 = arith.constant 0 : i32
    %c0_i32_1 = arith.constant 0 : i32
    return %c0_i32, %c0_i32_0 : i32, i32
  }
  func.func @transform_3(%arg0: i32) -> (i32, i32) {
    %c0_i32 = arith.constant 0 : i32
    %c0_i32_0 = arith.constant 0 : i32
    %c0_i32_1 = arith.constant 0 : i32
    return %c0_i32, %c0_i32_0 : i32, i32
  }
  func.func @transform_4(%arg0: i32) -> (i32, i32, i32) {
    %c0_i32 = arith.constant 0 : i32
    %c0_i32_0 = arith.constant 0 : i32
    %c0_i32_1 = arith.constant 0 : i32
    %c0_i32_2 = arith.constant 0 : i32
    return %c0_i32, %c0_i32_0, %c0_i32_1 : i32, i32, i32
  }
  func.func @transform_5(%arg0: i32) -> (i32, i32) {
    %c0_i32 = arith.constant 0 : i32
    %c0_i32_0 = arith.constant 0 : i32
    %c0_i32_1 = arith.constant 0 : i32
    return %c0_i32, %c0_i32_0 : i32, i32
  }
  func.func @transform_6(%arg0: i32) -> (i32, i32) {
    %c0_i32 = arith.constant 0 : i32
    %c0_i32_0 = arith.constant 0 : i32
    %c0_i32_1 = arith.constant 0 : i32
    return %c0_i32, %c0_i32_0 : i32, i32
  }
  func.func @transform_7(%arg0: i32) -> (i32, i32) {
    %c0_i32 = arith.constant 0 : i32
    %c0_i32_0 = arith.constant 0 : i32
    %c0_i32_1 = arith.constant 0 : i32
    return %c0_i32, %c0_i32_0 : i32, i32
  }
  func.func @transform_8(%arg0: i32) -> (i32, i32) {
    %c0_i32 = arith.constant 0 : i32
    %c0_i32_0 = arith.constant 0 : i32
    %c0_i32_1 = arith.constant 0 : i32
    return %c0_i32, %c0_i32_0 : i32, i32
  }
  func.func @transform_9(%arg0: i32) -> (i32, i32) {
    %c0_i32 = arith.constant 0 : i32
    %c0_i32_0 = arith.constant 0 : i32
    return %arg0, %c0_i32 : i32, i32
  }
}

</mosaic_0001>

<llo_original>
// kernel: attention4d_forward.1
$region0: #{attention4d_forward.1}
  #allocation0 [shape = 'u32[]', space=smem, size = 0x4, offset = 0x4, fixed_abs, tag = 'smem constant byte address 0x4 - core index']
  #allocation1 [shape = 'u32[144,128]{1,0:T(1,128)}', space=vmem, size = 0x12000, scoped, tag = 'internal scratch']
  %s0 = inlined_call_operand.vmem [shape: bf16[112,32], index: 0, kind: input, shape index: {}]
  %s1 = inlined_call_operand.vmem [shape: bf16[32,128], index: 1, kind: input, shape index: {}]
  %s2 = inlined_call_operand.vmem [shape: bf16[56,512], index: 2, kind: input, shape index: {}]
  %s3 = inlined_call_operand.vmem [shape: bf16[64,32], index: 3, kind: input, shape index: {}]
  %s4 = inlined_call_operand.vmem [shape: f32[4,56,56], index: 4, kind: input, shape index: {}]
  %s5 = inlined_call_operand.vmem [shape: f32[9,64], index: 5, kind: input, shape index: {}]
  %s6 = inlined_call_operand.vmem [shape: f32[4,32], index: 6, kind: input, shape index: {}]
  %s7 = inlined_call_operand.vmem [shape: f32[4,64], index: 7, kind: input, shape index: {}]
  %s8 = inlined_call_operand.vmem [shape: f32[4,128], index: 8, kind: input, shape index: {}]
  %s9 = inlined_call_operand.vmem [shape: f32[112,32], index: 9, kind: output, shape index: {}]
  %s10 = sld [smem:[#allocation0]]
  $region46: #{attention4d_forward.1} parent=0
    _
  %s12 = ssub.s32 1, %s10
  %s13 = scalar_select 0, %s12, %s10
  // Predicated region
  $region2: #{attention4d_forward.1} parent=0 // pred_check
    _
  $region3: #{attention4d_forward.1} parent=0 // pred_check_branch
    %15 = sbr.rel (0) target = $region5
  $region4: #{attention4d_forward.1} parent=0 // pred_region
    _
  $region5: #{attention4d_forward.1} parent=0 // pred_fallthru
    _
  // Predicated region
  $region6: #{attention4d_forward.1} parent=0 // pred_check
    _
  $region7: #{attention4d_forward.1} parent=0 // pred_check_branch
    %17 = sbr.rel (0) target = $region9
  $region8: #{attention4d_forward.1} parent=0 // pred_region
    _
  $region9: #{attention4d_forward.1} parent=0 // pred_fallthru
    _
  // Predicated region
  $region10: #{attention4d_forward.1} parent=0 // pred_check
    _
  $region11: #{attention4d_forward.1} parent=0 // pred_check_branch
    %19 = sbr.rel (0) target = $region13
  $region12: #{attention4d_forward.1} parent=0 // pred_region
    _
  $region13: #{attention4d_forward.1} parent=0 // pred_fallthru
    _
  // Predicated region
  $region14: #{attention4d_forward.1} parent=0 // pred_check
    _
  $region15: #{attention4d_forward.1} parent=0 // pred_check_branch
    %21 = sbr.rel (0) target = $region17
  $region16: #{attention4d_forward.1} parent=0 // pred_region
    _
  $region17: #{attention4d_forward.1} parent=0 // pred_fallthru
    _
  // Predicated region
  $region18: #{attention4d_forward.1} parent=0 // pred_check
    _
  $region19: #{attention4d_forward.1} parent=0 // pred_check_branch
    %23 = sbr.rel (0) target = $region21
  $region20: #{attention4d_forward.1} parent=0 // pred_region
    _
  $region21: #{attention4d_forward.1} parent=0 // pred_fallthru
    _
  // Predicated region
  $region22: #{attention4d_forward.1} parent=0 // pred_check
    _
  $region23: #{attention4d_forward.1} parent=0 // pred_check_branch
    %25 = sbr.rel (0) target = $region25
  $region24: #{attention4d_forward.1} parent=0 // pred_region
    _
  $region25: #{attention4d_forward.1} parent=0 // pred_fallthru
    _
  // Predicated region
  $region26: #{attention4d_forward.1} parent=0 // pred_check
    _
  $region27: #{attention4d_forward.1} parent=0 // pred_check_branch
    %27 = sbr.rel (0) target = $region29
  $region28: #{attention4d_forward.1} parent=0 // pred_region
    _
  $region29: #{attention4d_forward.1} parent=0 // pred_fallthru
    _
  // Predicated region
  $region30: #{attention4d_forward.1} parent=0 // pred_check
    _
  $region31: #{attention4d_forward.1} parent=0 // pred_check_branch
    %29 = sbr.rel (0) target = $region33
  $region32: #{attention4d_forward.1} parent=0 // pred_region
    _
  $region33: #{attention4d_forward.1} parent=0 // pred_fallthru
    _
  // Predicated region
  $region34: #{attention4d_forward.1} parent=0 // pred_check
    _
  $region35: #{attention4d_forward.1} parent=0 // pred_check_branch
    %31 = sbr.rel (0) target = $region37
  $region36: #{attention4d_forward.1} parent=0 // pred_region
    _
  $region37: #{attention4d_forward.1} parent=0 // pred_fallthru
    _
  %v33 = vld [vmem:[%s0] sm:$0xf]
  %v34 = vld [vmem:[%s0 + $0x4] sm:$0xf]
  %v35 = vld [vmem:[%s0 + $0x8] sm:$0xf]
  %v36 = vld [vmem:[%s0 + $0xc] sm:$0xf]
  %v37 = vld [vmem:[%s0 + $0x10] sm:$0xf]
  %v38 = vld [vmem:[%s0 + $0x14] sm:$0xf]
  %v39 = vld [vmem:[%s0 + $0x18] sm:$0xf]
  %v40 = vld [vmem:[%s0 + $0x1c] sm:$0xf]
  %v41 = vld [vmem:[%s0 + $0x20] sm:$0xf]
  %v42 = vld [vmem:[%s0 + $0x24] sm:$0xf]
  %v43 = vld [vmem:[%s0 + $0x28] sm:$0xf]
  %v44 = vld [vmem:[%s0 + $0x2c] sm:$0xf]
  %v45 = vld [vmem:[%s0 + $0x30] sm:$0xf]
  %v46 = vld [vmem:[%s0 + $0x34] sm:$0xf]
  %v47 = vld [vmem:[%s1] sm:$0xf]
  %v48 = vld [vmem:[%s1 + $0x4] sm:$0xf]
  %v49 = vld [vmem:[%s1 + $0x8] sm:$0xf]
  %v50 = vld [vmem:[%s1 + $0xc] sm:$0xf]
  %v51 = vld [vmem:[%s8] sm:$0x1]
  %v52 = vlaneseq
  %v53 = vshrl.u32 %v52, 7
  %v54 = vsub.s32 0, %v53
  %v55 = vrot.slane %v51, %v54
  %v70 = vunpack.c.l.b16 %v33
  %v71 = vunpack.c.l.b16 %v34
  %v72 = vunpack.c.l.b16 %v35
  %v73 = vunpack.c.l.b16 %v36
  %v74 = vunpack.c.l.b16 %v37
  %v75 = vunpack.c.l.b16 %v38
  %v76 = vunpack.c.l.b16 %v39
  %v77 = vunpack.c.l.b16 %v40
  %v78 = vunpack.c.l.b16 %v41
  %v79 = vunpack.c.l.b16 %v42
  %v80 = vunpack.c.l.b16 %v43
  %v81 = vunpack.c.l.b16 %v44
  %v82 = vunpack.c.l.b16 %v45
  %v83 = vunpack.c.l.b16 %v46
  %v84 = vpack.c.b16 %v71, %v70
  %v85 = vpack.c.b16 %v73, %v72
  %v86 = vpack.c.b16 %v75, %v74
  %v87 = vpack.c.b16 %v77, %v76
  %v88 = vpack.c.b16 %v79, %v78
  %v89 = vpack.c.b16 %v81, %v80
  %v90 = vpack.c.b16 %v83, %v82
  %v95 = vunpack.c.l.b16 %v47
  %v96 = vunpack.c.l.b16 %v48
  %v97 = vunpack.c.l.b16 %v49
  %v98 = vunpack.c.l.b16 %v50
  %v99 = vpack.c.b16 %v96, %v95
  %v100 = vpack.c.b16 %v98, %v97
  %vm103 = vcmask 261120
  %v105 = vsel %vm103, %v84, 0
  %v108 = vsel %vm103, %v85, 0
  %v111 = vsel %vm103, %v86, 0
  %v114 = vsel %vm103, %v87, 0
  %v117 = vsel %vm103, %v88, 0
  %v120 = vsel %vm103, %v89, 0
  %v123 = vsel %vm103, %v90, 0
  %125 = vmatprep.subr.bf16.mxu0 0
  %126 = vmatpush1.bf16.msra.mxu0 %v99
  %127 = vmatprep.subr.bf16.mxu0 0
  %128 = vmatpush1.bf16.msra.mxu0 %v100
  %129 = vmatprep.subr.bf16.mxu0 0
  %130 = vmatpush1.bf16.msra.mxu0 0
  %131 = vmatprep.subr.bf16.mxu0 0
  %132 = vmatpush1.bf16.msra.mxu0 0
  %133 = vmatprep.subr.bf16.mxu0 0
  %134 = vmatpush1.bf16.msra.mxu0 0
  %135 = vmatprep.subr.bf16.mxu0 0
  %136 = vmatpush1.bf16.msra.mxu0 0
  %137 = vmatprep.subr.bf16.mxu0 0
  %138 = vmatpush1.bf16.msra.mxu0 0
  %139 = vmatprep.subr.bf16.mxu0 0
  %140 = vmatpush1.bf16.msra.mxu0 0
  %141 = vmatprep.subr.bf16.mxu0 0
  %142 = vmatpush1.bf16.msra.mxu0 0
  %143 = vmatprep.subr.bf16.mxu0 0
  %144 = vmatpush1.bf16.msra.mxu0 0
  %145 = vmatprep.subr.bf16.mxu0 0
  %146 = vmatpush1.bf16.msra.mxu0 0
  %147 = vmatprep.subr.bf16.mxu0 0
  %148 = vmatpush1.bf16.msra.mxu0 0
  %149 = vmatprep.subr.bf16.mxu0 0
  %150 = vmatpush1.bf16.msra.mxu0 0
  %151 = vmatprep.subr.bf16.mxu0 0
  %152 = vmatpush1.bf16.msra.mxu0 0
  %153 = vmatprep.subr.bf16.mxu0 0
  %154 = vmatpush1.bf16.msra.mxu0 0
  %155 = vmatprep.subr.bf16.mxu0 0
  %156 = vmatpush1.bf16.msra.mxu0 0
  %157 = vmatprep.mubr.bf16.mxu0 0
  %158 = vmatmul.mubr.bf16.gmra.mrb[0].mxu0 %v105
  %v159 = vpop.f32.mrb[0].mxu0
  %v160 = vadd.f32 %v55, %v159
  %v161 = vpop.f32.mrb[0].mxu0
  %v162 = vpop.f32.mrb[0].mxu0
  %v163 = vadd.f32 %v55, %v162
  %v164 = vpop.f32.mrb[0].mxu0
  %165 = vmatprep.mubr.bf16.mxu0 0
  %166 = vmatmul.mubr.bf16.gmra.mrb[0].mxu0 %v108
  %v167 = vpop.f32.mrb[0].mxu0
  %v168 = vadd.f32 %v55, %v167
  %v169 = vpop.f32.mrb[0].mxu0
  %v170 = vpop.f32.mrb[0].mxu0
  %v171 = vadd.f32 %v55, %v170
  %v172 = vpop.f32.mrb[0].mxu0
  %173 = vmatprep.mubr.bf16.mxu0 0
  %174 = vmatmul.mubr.bf16.gmra.mrb[0].mxu0 %v111
  %v175 = vpop.f32.mrb[0].mxu0
  %v176 = vadd.f32 %v55, %v175
  %v177 = vpop.f32.mrb[0].mxu0
  %v178 = vpop.f32.mrb[0].mxu0
  %v179 = vadd.f32 %v55, %v178
  %v180 = vpop.f32.mrb[0].mxu0
  %181 = vmatprep.mubr.bf16.mxu0 0
  %182 = vmatmul.mubr.bf16.gmra.mrb[0].mxu0 %v114
  %v183 = vpop.f32.mrb[0].mxu0
  %v184 = vadd.f32 %v55, %v183
  %v185 = vpop.f32.mrb[0].mxu0
  %v186 = vpop.f32.mrb[0].mxu0
  %v187 = vadd.f32 %v55, %v186
  %v188 = vpop.f32.mrb[0].mxu0
  %189 = vmatprep.mubr.bf16.mxu0 0
  %190 = vmatmul.mubr.bf16.gmra.mrb[0].mxu0 %v117
  %v191 = vpop.f32.mrb[0].mxu0
  %v192 = vadd.f32 %v55, %v191
  %v193 = vpop.f32.mrb[0].mxu0
  %v194 = vpop.f32.mrb[0].mxu0
  %v195 = vadd.f32 %v55, %v194
  %v196 = vpop.f32.mrb[0].mxu0
  %197 = vmatprep.mubr.bf16.mxu0 0
  %198 = vmatmul.mubr.bf16.gmra.mrb[0].mxu0 %v120
  %v199 = vpop.f32.mrb[0].mxu0
  %v200 = vadd.f32 %v55, %v199
  %v201 = vpop.f32.mrb[0].mxu0
  %v202 = vpop.f32.mrb[0].mxu0
  %v203 = vadd.f32 %v55, %v202
  %v204 = vpop.f32.mrb[0].mxu0
  %205 = vmatprep.mubr.bf16.mxu0 0
  %206 = vmatmul.mubr.bf16.gmra.mrb[0].mxu0 %v123
  %v207 = vpop.f32.mrb[0].mxu0
  %v208 = vadd.f32 %v55, %v207
  %v209 = vpop.f32.mrb[0].mxu0
  %v210 = vpop.f32.mrb[0].mxu0
  %v211 = vadd.f32 %v55, %v210
  %v212 = vpop.f32.mrb[0].mxu0
  %213 = vdwg.mxu0
  %v214 = vlaneseq
  %v215 = vshrl.u32 %v214, 7
  %v216 = vadd.s32 %v215, 8
  %v217 = vadd.s32 %v215, 16
  %v218 = vadd.s32 %v215, 24
  %v219 = vadd.s32 %v215, 32
  %v220 = vadd.s32 %v215, 40
  %v221 = vadd.s32 %v215, 48
  %vm222 = vcmp.lt.s32.totalorder %v215, 49
  %vm223 = vcmp.lt.s32.totalorder %v216, 49
  %vm224 = vcmp.lt.s32.totalorder %v217, 49
  %vm225 = vcmp.lt.s32.totalorder %v218, 49
  %vm226 = vcmp.lt.s32.totalorder %v219, 49
  %vm227 = vcmp.lt.s32.totalorder %v220, 49
  %vm228 = vcmp.lt.s32.totalorder %v221, 49
  %v229 = vsel %vm222, 1, 0
  %v230 = vsel %vm223, 1, 0
  %v231 = vsel %vm224, 1, 0
  %v232 = vsel %vm225, 1, 0
  %v233 = vsel %vm226, 1, 0
  %v234 = vsel %vm227, 1, 0
  %v235 = vsel %vm228, 1, 0
  %236 = vset.pattern.permute.xlu0 0
  %237 = vperm.xlu0 %236, %v229
  %v238 = vpop.permute.xlu0 %237
  %239 = vset.pattern.permute.xlu0 0
  %240 = vperm.xlu0 %239, %v230
  %v241 = vpop.permute.xlu0 %240
  %242 = vset.pattern.permute.xlu0 0
  %243 = vperm.xlu0 %242, %v231
  %v244 = vpop.permute.xlu0 %243
  %245 = vset.pattern.permute.xlu0 0
  %246 = vperm.xlu0 %245, %v232
  %v247 = vpop.permute.xlu0 %246
  %248 = vset.pattern.permute.xlu0 0
  %249 = vperm.xlu0 %248, %v233
  %v250 = vpop.permute.xlu0 %249
  %251 = vset.pattern.permute.xlu0 0
  %252 = vperm.xlu0 %251, %v234
  %v253 = vpop.permute.xlu0 %252
  %254 = vset.pattern.permute.xlu0 0
  %255 = vperm.xlu0 %254, %v235
  %v256 = vpop.permute.xlu0 %255
  %vm257 = vcmp.eq.s32.totalorder %v238, 1
  %vm258 = vcmp.eq.s32.totalorder %v241, 1
  %vm259 = vcmp.eq.s32.totalorder %v244, 1
  %vm260 = vcmp.eq.s32.totalorder %v247, 1
  %vm261 = vcmp.eq.s32.totalorder %v250, 1
  %vm262 = vcmp.eq.s32.totalorder %v253, 1
  %vm263 = vcmp.eq.s32.totalorder %v256, 1
  %v264 = vsel %vm257, %v160, 0.0
  %v265 = vsel %vm258, %v163, 0.0
  %v266 = vsel %vm259, %v168, 0.0
  %v267 = vsel %vm260, %v171, 0.0
  %v268 = vsel %vm261, %v176, 0.0
  %v269 = vsel %vm262, %v179, 0.0
  %v270 = vsel %vm263, %v184, 0.0
  %v271 = vsel %vm257, %v187, 0.0
  %v272 = vsel %vm258, %v192, 0.0
  %v273 = vsel %vm259, %v195, 0.0
  %v274 = vsel %vm260, %v200, 0.0
  %v275 = vsel %vm261, %v203, 0.0
  %v276 = vsel %vm262, %v208, 0.0
  %v277 = vsel %vm263, %v211, 0.0
  %v278 = vld [vmem:[%s8 + $0x1] sm:$0x1]
  %v279 = vld [vmem:[%s8 + $0x2] sm:$0x1]
  %v280 = vld [vmem:[%s8 + $0x3] sm:$0x1]
  %v281 = vld [vmem:[%s2] sm:$0xff]
  %v282 = vld [vmem:[%s2 + $0x8] sm:$0xff]
  %v283 = vld [vmem:[%s2 + $0x10] sm:$0xff]
  %v284 = vld [vmem:[%s2 + $0x18] sm:$0xff]
  %v285 = vld [vmem:[%s2 + $0x20] sm:$0xff]
  %v286 = vld [vmem:[%s2 + $0x28] sm:$0xff]
  %v287 = vld [vmem:[%s2 + $0x30] sm:$0xff]
  %v288 = vld [vmem:[%s2 + $0x38] sm:$0xff]
  %v289 = vld [vmem:[%s2 + $0x40] sm:$0xff]
  %v290 = vld [vmem:[%s2 + $0x48] sm:$0xff]
  %v291 = vld [vmem:[%s2 + $0x50] sm:$0xff]
  %v292 = vld [vmem:[%s2 + $0x58] sm:$0xff]
  %v293 = vld [vmem:[%s2 + $0x60] sm:$0xff]
  %v294 = vld [vmem:[%s2 + $0x68] sm:$0xff]
  %v295 = vld [vmem:[%s5] sm:$0xff]
  %v296 = vld [vmem:[%s5 + $0x8] sm:$0x1]
  %v297 = vld [vmem:[%s6] sm:$0xf]
  %v298 = vld [vmem:[%s7] sm:$0xf]
  %v299 = vpack.c.bf16 %v265, %v264
  %v300 = vpack.c.bf16 %v267, %v266
  %v301 = vpack.c.bf16 %v269, %v268
  %v302 = vpack.c.bf16 %v270, %v270
  %v303 = vlaneseq
  %v304 = vshrl.u32 %v303, 7
  %v305 = vsub.s32 0, %v304
  %v306 = vrot.slane %v295, %v305
  %308 = vrot.lane.b32.xlu0 %v306, 64
  %v309 = vpop.permute.xlu0 %308
  %v311 = vmul.f32 %v264, %v309
  %v312 = vmul.f32 %v265, %v309
  %v313 = vmul.f32 %v266, %v309
  %v314 = vmul.f32 %v267, %v309
  %v315 = vmul.f32 %v268, %v309
  %v316 = vmul.f32 %v269, %v309
  %v317 = vmul.f32 %v270, %v309
  %v318 = vlaneseq
  %v319 = vshrl.u32 %v318, 7
  %v320 = vsub.s32 1, %v319
  %v321 = vrot.slane %v295, %v320
  %323 = vrot.lane.b32.xlu0 %v321, 64
  %v324 = vpop.permute.xlu0 %323
  %v326 = vmul.f32 %v264, %v324
  %v327 = vmul.f32 %v265, %v324
  %v328 = vmul.f32 %v266, %v324
  %v329 = vmul.f32 %v267, %v324
  %v330 = vmul.f32 %v268, %v324
  %v331 = vmul.f32 %v269, %v324
  %v332 = vmul.f32 %v270, %v324
  %v333 = vlaneseq
  %v334 = vshrl.u32 %v333, 7
  %v335 = vsub.s32 2, %v334
  %v336 = vrot.slane %v295, %v335
  %338 = vrot.lane.b32.xlu0 %v336, 64
  %v339 = vpop.permute.xlu0 %338
  %v341 = vmul.f32 %v264, %v339
  %v342 = vmul.f32 %v265, %v339
  %v343 = vmul.f32 %v266, %v339
  %v344 = vmul.f32 %v267, %v339
  %v345 = vmul.f32 %v268, %v339
  %v346 = vmul.f32 %v269, %v339
  %v347 = vmul.f32 %v270, %v339
  %v348 = vlaneseq
  %v349 = vshrl.u32 %v348, 7
  %v350 = vsub.s32 3, %v349
  %v351 = vrot.slane %v295, %v350
  %353 = vrot.lane.b32.xlu0 %v351, 64
  %v354 = vpop.permute.xlu0 %353
  %v356 = vmul.f32 %v264, %v354
  %v357 = vmul.f32 %v265, %v354
  %v358 = vmul.f32 %v266, %v354
  %v359 = vmul.f32 %v267, %v354
  %v360 = vmul.f32 %v268, %v354
  %v361 = vmul.f32 %v269, %v354
  %v362 = vmul.f32 %v270, %v354
  %v363 = vlaneseq
  %v364 = vshrl.u32 %v363, 7
  %v365 = vsub.s32 4, %v364
  %v366 = vrot.slane %v295, %v365
  %368 = vrot.lane.b32.xlu0 %v366, 64
  %v369 = vpop.permute.xlu0 %368
  %v371 = vmul.f32 %v264, %v369
  %v372 = vmul.f32 %v265, %v369
  %v373 = vmul.f32 %v266, %v369
  %v374 = vmul.f32 %v267, %v369
  %v375 = vmul.f32 %v268, %v369
  %v376 = vmul.f32 %v269, %v369
  %v377 = vmul.f32 %v270, %v369
  %v378 = vlaneseq
  %v379 = vshrl.u32 %v378, 7
  %v380 = vsub.s32 5, %v379
  %v381 = vrot.slane %v295, %v380
  %383 = vrot.lane.b32.xlu0 %v381, 64
  %v384 = vpop.permute.xlu0 %383
  %v386 = vmul.f32 %v264, %v384
  %v387 = vmul.f32 %v265, %v384
  %v388 = vmul.f32 %v266, %v384
  %v389 = vmul.f32 %v267, %v384
  %v390 = vmul.f32 %v268, %v384
  %v391 = vmul.f32 %v269, %v384
  %v392 = vmul.f32 %v270, %v384
  %v393 = vlaneseq
  %v394 = vshrl.u32 %v393, 7
  %v395 = vsub.s32 6, %v394
  %v396 = vrot.slane %v295, %v395
  %398 = vrot.lane.b32.xlu0 %v396, 64
  %v399 = vpop.permute.xlu0 %398
  %v401 = vmul.f32 %v264, %v399
  %v402 = vmul.f32 %v265, %v399
  %v403 = vmul.f32 %v266, %v399
  %v404 = vmul.f32 %v267, %v399
  %v405 = vmul.f32 %v268, %v399
  %v406 = vmul.f32 %v269, %v399
  %v407 = vmul.f32 %v270, %v399
  %v408 = vlaneseq
  %v409 = vshrl.u32 %v408, 7
  %v410 = vsub.s32 7, %v409
  %v411 = vrot.slane %v295, %v410
  %413 = vrot.lane.b32.xlu0 %v411, 64
  %v414 = vpop.permute.xlu0 %413
  %v416 = vmul.f32 %v264, %v414
  %v417 = vmul.f32 %v265, %v414
  %v418 = vmul.f32 %v266, %v414
  %v419 = vmul.f32 %v267, %v414
  %v420 = vmul.f32 %v268, %v414
  %v421 = vmul.f32 %v269, %v414
  %v422 = vmul.f32 %v270, %v414
  %v423 = vlaneseq
  %v424 = vshrl.u32 %v423, 7
  %v425 = vsub.s32 0, %v424
  %v426 = vrot.slane %v296, %v425
  %428 = vrot.lane.b32.xlu0 %v426, 64
  %v429 = vpop.permute.xlu0 %428
  %v431 = vmul.f32 %v264, %v429
  %v432 = vmul.f32 %v265, %v429
  %v433 = vmul.f32 %v266, %v429
  %v434 = vmul.f32 %v267, %v429
  %v435 = vmul.f32 %v268, %v429
  %v436 = vmul.f32 %v269, %v429
  %v437 = vmul.f32 %v270, %v429
  %v438 = vpack.c.bf16 %v312, %v311
  %v439 = vpack.c.bf16 %v314, %v313
  %v440 = vpack.c.bf16 %v316, %v315
  %v441 = vpack.c.bf16 %v326, %v317
  %v442 = vpack.c.bf16 %v328, %v327
  %v443 = vpack.c.bf16 %v330, %v329
  %v444 = vpack.c.bf16 %v332, %v331
  %v445 = vpack.c.bf16 %v342, %v341
  %v446 = vpack.c.bf16 %v344, %v343
  %v447 = vpack.c.bf16 %v346, %v345
  %v448 = vpack.c.bf16 %v356, %v347
  %v449 = vpack.c.bf16 %v358, %v357
  %v450 = vpack.c.bf16 %v360, %v359
  %v451 = vpack.c.bf16 %v362, %v361
  %v452 = vpack.c.bf16 %v372, %v371
  %v453 = vpack.c.bf16 %v374, %v373
  %v454 = vpack.c.bf16 %v376, %v375
  %v455 = vpack.c.bf16 %v386, %v377
  %v456 = vpack.c.bf16 %v388, %v387
  %v457 = vpack.c.bf16 %v390, %v389
  %v458 = vpack.c.bf16 %v392, %v391
  %v459 = vpack.c.bf16 %v402, %v401
  %v460 = vpack.c.bf16 %v404, %v403
  %v461 = vpack.c.bf16 %v406, %v405
  %v462 = vpack.c.bf16 %v416, %v407
  %v463 = vpack.c.bf16 %v418, %v417
  %v464 = vpack.c.bf16 %v420, %v419
  %v465 = vpack.c.bf16 %v422, %v421
  %v466 = vpack.c.bf16 %v432, %v431
  %v467 = vpack.c.bf16 %v434, %v433
  %v468 = vpack.c.bf16 %v436, %v435
  %v469 = vpack.c.bf16 0.0, %v437
  %v470 = vlaneseq
  %v471 = vshrl.u32 %v470, 7
  %v472 = vsub.s32 0, %v471
  %v473 = vrot.slane %v278, %v472
  %v488 = vunpack.c.l.b16 %v281
  %v489 = vunpack.c.h.b16 %v281
  %v490 = vunpack.c.l.b16 %v282
  %v491 = vunpack.c.h.b16 %v282
  %v492 = vunpack.c.l.b16 %v283
  %v493 = vunpack.c.h.b16 %v283
  %v494 = vunpack.c.l.b16 %v284
  %v495 = vunpack.c.h.b16 %v284
  %v496 = vunpack.c.l.b16 %v285
  %v497 = vunpack.c.h.b16 %v285
  %v498 = vunpack.c.l.b16 %v286
  %v499 = vunpack.c.h.b16 %v286
  %v500 = vunpack.c.l.b16 %v287
  %v501 = vunpack.c.h.b16 %v287
  %v502 = vunpack.c.l.b16 %v288
  %v503 = vunpack.c.h.b16 %v288
  %v504 = vunpack.c.l.b16 %v289
  %v505 = vunpack.c.h.b16 %v289
  %v506 = vunpack.c.l.b16 %v290
  %v507 = vunpack.c.h.b16 %v290
  %v508 = vunpack.c.l.b16 %v291
  %v509 = vunpack.c.h.b16 %v291
  %v510 = vunpack.c.l.b16 %v292
  %v511 = vunpack.c.h.b16 %v292
  %v512 = vunpack.c.l.b16 %v293
  %v513 = vunpack.c.h.b16 %v293
  %v514 = vunpack.c.l.b16 %v294
  %v515 = vunpack.c.h.b16 %v294
  %v516 = vpack.c.b16 %v492, %v488
  %v517 = vpack.c.b16 %v493, %v489
  %v518 = vpack.c.b16 %v494, %v490
  %v519 = vpack.c.b16 %v495, %v491
  %v520 = vpack.c.b16 %v500, %v496
  %v521 = vpack.c.b16 %v501, %v497
  %v522 = vpack.c.b16 %v502, %v498
  %v523 = vpack.c.b16 %v503, %v499
  %v524 = vpack.c.b16 %v508, %v504
  %v525 = vpack.c.b16 %v509, %v505
  %v526 = vpack.c.b16 %v510, %v506
  %v527 = vpack.c.b16 %v511, %v507
  %v528 = vpack.c.b16 %v512, %v512
  %v529 = vpack.c.b16 %v513, %v513
  %v530 = vpack.c.b16 %v514, %v514
  %v531 = vpack.c.b16 %v515, %v515
  %580 = vrot.lane.b32.xlu0 %v438, 64
  %v581 = vpop.permute.xlu0 %580
  %582 = vrot.lane.b32.xlu0 %v439, 64
  %v583 = vpop.permute.xlu0 %582
  %584 = vrot.lane.b32.xlu0 %v440, 64
  %v585 = vpop.permute.xlu0 %584
  %586 = vrot.lane.b32.xlu0 %v441, 64
  %v587 = vpop.permute.xlu0 %586
  %588 = vrot.lane.b32.xlu0 %v442, 64
  %v589 = vpop.permute.xlu0 %588
  %590 = vrot.lane.b32.xlu0 %v443, 64
  %v591 = vpop.permute.xlu0 %590
  %592 = vrot.lane.b32.xlu0 %v444, 64
  %v593 = vpop.permute.xlu0 %592
  %594 = vrot.lane.b32.xlu0 %v445, 64
  %v595 = vpop.permute.xlu0 %594
  %596 = vrot.lane.b32.xlu0 %v446, 64
  %v597 = vpop.permute.xlu0 %596
  %598 = vrot.lane.b32.xlu0 %v447, 64
  %v599 = vpop.permute.xlu0 %598
  %600 = vrot.lane.b32.xlu0 %v448, 64
  %v601 = vpop.permute.xlu0 %600
  %602 = vrot.lane.b32.xlu0 %v449, 64
  %v603 = vpop.permute.xlu0 %602
  %604 = vrot.lane.b32.xlu0 %v450, 64
  %v605 = vpop.permute.xlu0 %604
  %606 = vrot.lane.b32.xlu0 %v451, 64
  %v607 = vpop.permute.xlu0 %606
  %608 = vrot.lane.b32.xlu0 %v452, 64
  %v609 = vpop.permute.xlu0 %608
  %610 = vrot.lane.b32.xlu0 %v453, 64
  %v611 = vpop.permute.xlu0 %610
  %612 = vrot.lane.b32.xlu0 %v454, 64
  %v613 = vpop.permute.xlu0 %612
  %614 = vrot.lane.b32.xlu0 %v455, 64
  %v615 = vpop.permute.xlu0 %614
  %616 = vrot.lane.b32.xlu0 %v456, 64
  %v617 = vpop.permute.xlu0 %616
  %618 = vrot.lane.b32.xlu0 %v457, 64
  %v619 = vpop.permute.xlu0 %618
  %620 = vrot.lane.b32.xlu0 %v458, 64
  %v621 = vpop.permute.xlu0 %620
  %622 = vrot.lane.b32.xlu0 %v459, 64
  %v623 = vpop.permute.xlu0 %622
  %624 = vrot.lane.b32.xlu0 %v460, 64
  %v625 = vpop.permute.xlu0 %624
  %626 = vrot.lane.b32.xlu0 %v461, 64
  %v627 = vpop.permute.xlu0 %626
  %628 = vrot.lane.b32.xlu0 %v462, 64
  %v629 = vpop.permute.xlu0 %628
  %630 = vrot.lane.b32.xlu0 %v463, 64
  %v631 = vpop.permute.xlu0 %630
  %632 = vrot.lane.b32.xlu0 %v464, 64
  %v633 = vpop.permute.xlu0 %632
  %634 = vrot.lane.b32.xlu0 %v465, 64
  %v635 = vpop.permute.xlu0 %634
  %636 = vrot.lane.b32.xlu0 %v466, 64
  %v637 = vpop.permute.xlu0 %636
  %638 = vrot.lane.b32.xlu0 %v467, 64
  %v639 = vpop.permute.xlu0 %638
  %640 = vrot.lane.b32.xlu0 %v468, 64
  %v641 = vpop.permute.xlu0 %640
  %642 = vrot.lane.b32.xlu0 %v469, 64
  %v643 = vpop.permute.xlu0 %642
  %676 = vmatprep.subr.bf16.mxu0 0
  %677 = vmatpush1.bf16.msra.mxu0 %v581
  %678 = vmatprep.subr.bf16.mxu0 0
  %679 = vmatpush1.bf16.msra.mxu0 %v583
  %680 = vmatprep.subr.bf16.mxu0 0
  %681 = vmatpush1.bf16.msra.mxu0 %v585
  %682 = vmatprep.subr.bf16.mxu0 0
  %683 = vmatpush1.bf16.msra.mxu0 %v587
  %684 = vmatprep.subr.bf16.mxu0 0
  %685 = vmatpush1.bf16.msra.mxu0 %v589
  %686 = vmatprep.subr.bf16.mxu0 0
  %687 = vmatpush1.bf16.msra.mxu0 %v591
  %688 = vmatprep.subr.bf16.mxu0 0
  %689 = vmatpush1.bf16.msra.mxu0 %v593
  %690 = vmatprep.subr.bf16.mxu0 0
  %691 = vmatpush1.bf16.msra.mxu0 %v595
  %692 = vmatprep.subr.bf16.mxu0 0
  %693 = vmatpush1.bf16.msra.mxu0 %v597
  %694 = vmatprep.subr.bf16.mxu0 0
  %695 = vmatpush1.bf16.msra.mxu0 %v599
  %696 = vmatprep.subr.bf16.mxu0 0
  %697 = vmatpush1.bf16.msra.mxu0 %v601
  %698 = vmatprep.subr.bf16.mxu0 0
  %699 = vmatpush1.bf16.msra.mxu0 %v603
  %700 = vmatprep.subr.bf16.mxu0 0
  %701 = vmatpush1.bf16.msra.mxu0 %v605
  %702 = vmatprep.subr.bf16.mxu0 0
  %703 = vmatpush1.bf16.msra.mxu0 %v607
  %704 = vmatprep.subr.bf16.mxu0 0
  %705 = vmatpush1.bf16.msra.mxu0 %v609
  %706 = vmatprep.subr.bf16.mxu0 0
  %707 = vmatpush1.bf16.msra.mxu0 %v611
  %708 = vmatprep.mubr.bf16.mxu0 %v517
  %709 = vmatmul.mubr.bf16.gmra.mrb[0].mxu0 %v516
  %v710 = vpop.f32.mrb[0].mxu0
  %v711 = vadd.f32 %v473, %v710
  %v712 = vpop.f32.mrb[0].mxu0
  %v713 = vpop.f32.mrb[0].mxu0
  %v714 = vadd.f32 %v473, %v713
  %v715 = vpop.f32.mrb[0].mxu0
  %716 = vmatprep.mubr.bf16.mxu0 %v521
  %717 = vmatmul.mubr.bf16.gmra.mrb[0].mxu0 %v520
  %v718 = vpop.f32.mrb[0].mxu0
  %v719 = vadd.f32 %v473, %v718
  %v720 = vpop.f32.mrb[0].mxu0
  %v721 = vpop.f32.mrb[0].mxu0
  %v722 = vadd.f32 %v473, %v721
  %v723 = vpop.f32.mrb[0].mxu0
  %724 = vmatprep.mubr.bf16.mxu0 %v525
  %725 = vmatmul.mubr.bf16.gmra.mrb[0].mxu0 %v524
  %v726 = vpop.f32.mrb[0].mxu0
  %v727 = vadd.f32 %v473, %v726
  %v728 = vpop.f32.mrb[0].mxu0
  %v729 = vpop.f32.mrb[0].mxu0
  %v730 = vadd.f32 %v473, %v729
  %v731 = vpop.f32.mrb[0].mxu0
  %732 = vmatprep.mubr.bf16.mxu0 %v529
  %733 = vmatmul.mubr.bf16.gmra.mrb[0].mxu0 %v528
  %v734 = vpop.f32.mrb[0].mxu0
  %v735 = vadd.f32 %v473, %v734
  %v736 = vpop.f32.mrb[0].mxu0
  %v737 = vpop.f32.mrb[0].mxu0
  %v738 = vpop.f32.mrb[0].mxu0
  %739 = vdwg.mxu0
  %740 = vmatprep.subr.bf16.mxu0 0
  %741 = vmatpush1.bf16.msra.mxu0 %v613
  %742 = vmatprep.subr.bf16.mxu0 0
  %743 = vmatpush1.bf16.msra.mxu0 %v615
  %744 = vmatprep.subr.bf16.mxu0 0
  %745 = vmatpush1.bf16.msra.mxu0 %v617
  %746 = vmatprep.subr.bf16.mxu0 0
  %747 = vmatpush1.bf16.msra.mxu0 %v619
  %748 = vmatprep.subr.bf16.mxu0 0
  %749 = vmatpush1.bf16.msra.mxu0 %v621
  %750 = vmatprep.subr.bf16.mxu0 0
  %751 = vmatpush1.bf16.msra.mxu0 %v623
  %752 = vmatprep.subr.bf16.mxu0 0
  %753 = vmatpush1.bf16.msra.mxu0 %v625
  %754 = vmatprep.subr.bf16.mxu0 0
  %755 = vmatpush1.bf16.msra.mxu0 %v627
  %756 = vmatprep.subr.bf16.mxu0 0
  %757 = vmatpush1.bf16.msra.mxu0 %v629
  %758 = vmatprep.subr.bf16.mxu0 0
  %759 = vmatpush1.bf16.msra.mxu0 %v631
  %760 = vmatprep.subr.bf16.mxu0 0
  %761 = vmatpush1.bf16.msra.mxu0 %v633
  %762 = vmatprep.subr.bf16.mxu0 0
  %763 = vmatpush1.bf16.msra.mxu0 %v635
  %764 = vmatprep.subr.bf16.mxu0 0
  %765 = vmatpush1.bf16.msra.mxu0 %v637
  %766 = vmatprep.subr.bf16.mxu0 0
  %767 = vmatpush1.bf16.msra.mxu0 %v639
  %768 = vmatprep.subr.bf16.mxu0 0
  %769 = vmatpush1.bf16.msra.mxu0 %v641
  %770 = vmatprep.subr.bf16.mxu0 0
  %771 = vmatpush1.bf16.msra.mxu0 %v643
  %772 = vmatprep.mubr.bf16.mxu0 %v519
  %773 = vmatmul.mubr.bf16.gmra.mrb[0].mxu0 %v518
  %v774 = vpop.f32.mrb[0].mxu0
  %v775 = vadd.f32 %v711, %v774
  %v776 = vpop.f32.mrb[0].mxu0
  %v777 = vpop.f32.mrb[0].mxu0
  %v778 = vadd.f32 %v714, %v777
  %v779 = vpop.f32.mrb[0].mxu0
  %780 = vmatprep.mubr.bf16.mxu0 %v523
  %781 = vmatmul.mubr.bf16.gmra.mrb[0].mxu0 %v522
  %v782 = vpop.f32.mrb[0].mxu0
  %v783 = vadd.f32 %v719, %v782
  %v784 = vpop.f32.mrb[0].mxu0
  %v785 = vpop.f32.mrb[0].mxu0
  %v786 = vadd.f32 %v722, %v785
  %v787 = vpop.f32.mrb[0].mxu0
  %788 = vmatprep.mubr.bf16.mxu0 %v527
  %789 = vmatmul.mubr.bf16.gmra.mrb[0].mxu0 %v526
  %v790 = vpop.f32.mrb[0].mxu0
  %v791 = vadd.f32 %v727, %v790
  %v792 = vpop.f32.mrb[0].mxu0
  %v793 = vpop.f32.mrb[0].mxu0
  %v794 = vadd.f32 %v730, %v793
  %v795 = vpop.f32.mrb[0].mxu0
  %796 = vmatprep.mubr.bf16.mxu0 %v531
  %797 = vmatmul.mubr.bf16.gmra.mrb[0].mxu0 %v530
  %v798 = vpop.f32.mrb[0].mxu0
  %v799 = vadd.f32 %v735, %v798
  %v800 = vpop.f32.mrb[0].mxu0
  %v801 = vpop.f32.mrb[0].mxu0
  %v802 = vpop.f32.mrb[0].mxu0
  %803 = vdwg.mxu0
  %vm804 = vcmask 1048064
  %v805 = vsel %vm804, %v264, 0.0
  %v806 = vsel %vm804, %v265, 0.0
  %v807 = vadd.f32 %v805, %v806
  %v808 = vsel %vm804, %v266, 0.0
  %v809 = vadd.f32 %v807, %v808
  %v810 = vsel %vm804, %v267, 0.0
  %v811 = vadd.f32 %v809, %v810
  %v812 = vsel %vm804, %v268, 0.0
  %v813 = vadd.f32 %v811, %v812
  %v814 = vsel %vm804, %v269, 0.0
  %v815 = vadd.f32 %v813, %v814
  %v816 = vsel %vm804, %v270, 0.0
  %v817 = vadd.f32 %v815, %v816
  %v818 = vrot.slane %v817, 4
  %v819 = vadd.f32 %v817, %v818
  %v820 = vrot.slane %v819, 2
  %v821 = vadd.f32 %v819, %v820
  %v822 = vrot.slane %v821, 1
  %v823 = vadd.f32 %v821, %v822
  %v824 = vlaneseq
  %v825 = vshrl.u32 %v824, 7
  %v826 = vsub.s32 0, %v825
  %v827 = vrot.slane %v297, %v826
  %v828 = vmul.f32 %v264, %v827
  %v829 = vmul.f32 %v265, %v827
  %v830 = vmul.f32 %v266, %v827
  %v831 = vmul.f32 %v267, %v827
  %v832 = vmul.f32 %v268, %v827
  %v833 = vmul.f32 %v269, %v827
  %v834 = vmul.f32 %v270, %v827
  %v835 = vpack.c.bf16 %v829, %v828
  %v836 = vpack.c.bf16 %v831, %v830
  %v837 = vpack.c.bf16 %v833, %v832
  %v838 = vpack.c.bf16 %v834, %v834
  %v839 = vld [vmem:[%s4] sm:$0xff]
  %v840 = vld [vmem:[%s4 + $0x8] sm:$0xff]
  %v841 = vld [vmem:[%s4 + $0x10] sm:$0xff]
  %v842 = vld [vmem:[%s4 + $0x18] sm:$0xff]
  %v843 = vld [vmem:[%s4 + $0x20] sm:$0xff]
  %v844 = vld [vmem:[%s4 + $0x28] sm:$0xff]
  %v845 = vld [vmem:[%s4 + $0x30] sm:$0xff]
  %850 = vrot.lane.b32.xlu0 %v299, 96
  %v851 = vpop.permute.xlu0 %850
  %852 = vrot.lane.b32.xlu0 %v300, 96
  %v853 = vpop.permute.xlu0 %852
  %854 = vrot.lane.b32.xlu0 %v301, 96
  %v855 = vpop.permute.xlu0 %854
  %856 = vrot.lane.b32.xlu0 %v302, 96
  %v857 = vpop.permute.xlu0 %856
  %v859 = vsel %vm103, %v835, 0
  %v862 = vsel %vm103, %v836, 0
  %v865 = vsel %vm103, %v837, 0
  %v868 = vsel %vm103, %v838, 0
  %v871 = vsel %vm103, %v851, 0
  %v874 = vsel %vm103, %v853, 0
  %v877 = vsel %vm103, %v855, 0
  %v880 = vsel %vm103, %v857, 0
  %882 = vmatprep.subr.bf16.mxu0 0
  %883 = vmatpush1.bf16.xpose.msra.mxu0 %v871
  %884 = vmatprep.subr.bf16.mxu0 0
  %885 = vmatpush1.bf16.xpose.msra.mxu0 %v874
  %886 = vmatprep.subr.bf16.mxu0 0
  %887 = vmatpush1.bf16.xpose.msra.mxu0 %v877
  %888 = vmatprep.subr.bf16.mxu0 0
  %889 = vmatpush1.bf16.xpose.msra.mxu0 %v880
  %890 = vmatprep.subr.bf16.mxu0 0
  %891 = vmatpush1.bf16.xpose.msra.mxu0 0
  %892 = vmatprep.subr.bf16.mxu0 0
  %893 = vmatpush1.bf16.xpose.msra.mxu0 0
  %894 = vmatprep.subr.bf16.mxu0 0
  %895 = vmatpush1.bf16.xpose.msra.mxu0 0
  %896 = vmatprep.subr.bf16.mxu0 0
  %897 = vmatpush1.bf16.xpose.msra.mxu0 0
  %898 = vmatprep.subr.bf16.mxu0 0
  %899 = vmatpush1.bf16.xpose.msra.mxu0 0
  %900 = vmatprep.subr.bf16.mxu0 0
  %901 = vmatpush1.bf16.xpose.msra.mxu0 0
  %902 = vmatprep.subr.bf16.mxu0 0
  %903 = vmatpush1.bf16.xpose.msra.mxu0 0
  %904 = vmatprep.subr.bf16.mxu0 0
  %905 = vmatpush1.bf16.xpose.msra.mxu0 0
  %906 = vmatprep.subr.bf16.mxu0 0
  %907 = vmatpush1.bf16.xpose.msra.mxu0 0
  %908 = vmatprep.subr.bf16.mxu0 0
  %909 = vmatpush1.bf16.xpose.msra.mxu0 0
  %910 = vmatprep.subr.bf16.mxu0 0
  %911 = vmatpush1.bf16.xpose.msra.mxu0 0
  %912 = vmatprep.subr.bf16.mxu0 0
  %913 = vmatpush1.bf16.xpose.msra.mxu0 0
  %914 = vmatprep.mubr.bf16.mxu0 0
  %915 = vmatmul.mubr.bf16.gmra.mrb[0].mxu0 %v859
  %v916 = vpop.f32.mrb[0].mxu0
  %v917 = vadd.f32 %v839, %v916
  %v918 = vpop.f32.mrb[0].mxu0
  %v919 = vpop.f32.mrb[0].mxu0
  %v920 = vadd.f32 %v840, %v919
  %v921 = vpop.f32.mrb[0].mxu0
  %922 = vmatprep.mubr.bf16.mxu0 0
  %923 = vmatmul.mubr.bf16.gmra.mrb[0].mxu0 %v862
  %v924 = vpop.f32.mrb[0].mxu0
  %v925 = vadd.f32 %v841, %v924
  %v926 = vpop.f32.mrb[0].mxu0
  %v927 = vpop.f32.mrb[0].mxu0
  %v928 = vadd.f32 %v842, %v927
  %v929 = vpop.f32.mrb[0].mxu0
  %930 = vmatprep.mubr.bf16.mxu0 0
  %931 = vmatmul.mubr.bf16.gmra.mrb[0].mxu0 %v865
  %v932 = vpop.f32.mrb[0].mxu0
  %v933 = vadd.f32 %v843, %v932
  %v934 = vpop.f32.mrb[0].mxu0
  %v935 = vpop.f32.mrb[0].mxu0
  %v936 = vadd.f32 %v844, %v935
  %v937 = vpop.f32.mrb[0].mxu0
  %938 = vmatprep.mubr.bf16.mxu0 0
  %939 = vmatmul.mubr.bf16.gmra.mrb[0].mxu0 %v868
  %v940 = vpop.f32.mrb[0].mxu0
  %v941 = vadd.f32 %v845, %v940
  %v942 = vpop.f32.mrb[0].mxu0
  %v943 = vpop.f32.mrb[0].mxu0
  %v944 = vpop.f32.mrb[0].mxu0
  %945 = vdwg.mxu0
  %vm946 = vcmask 457728
  %v947 = vsel %vm946, %v917, -inf
  %948 = vmax.xlane.f32.xlu0 %v947
  %v949 = vpop.xlane.xlu0 %948
  %v950 = vsel %vm946, %v920, -inf
  %951 = vmax.xlane.f32.xlu0 %v950
  %v952 = vpop.xlane.xlu0 %951
  %v953 = vsel %vm946, %v925, -inf
  %954 = vmax.xlane.f32.xlu0 %v953
  %v955 = vpop.xlane.xlu0 %954
  %v956 = vsel %vm946, %v928, -inf
  %957 = vmax.xlane.f32.xlu0 %v956
  %v958 = vpop.xlane.xlu0 %957
  %v959 = vsel %vm946, %v933, -inf
  %960 = vmax.xlane.f32.xlu0 %v959
  %v961 = vpop.xlane.xlu0 %960
  %v962 = vsel %vm946, %v936, -inf
  %963 = vmax.xlane.f32.xlu0 %v962
  %v964 = vpop.xlane.xlu0 %963
  %v965 = vsel %vm946, %v941, -inf
  %966 = vmax.xlane.f32.xlu0 %v965
  %v967 = vpop.xlane.xlu0 %966
  %v968 = vsub.f32 %v917, %v949
  %v969 = vsub.f32 %v920, %v952
  %v970 = vsub.f32 %v925, %v955
  %v971 = vsub.f32 %v928, %v958
  %v972 = vsub.f32 %v933, %v961
  %v973 = vsub.f32 %v936, %v964
  %v974 = vsub.f32 %v941, %v967
  %v975 = vmul.f32 %v968, 1.442695
  %v976 = vpow.pop %v975
  %v977 = vmul.f32 %v969, 1.442695
  %v978 = vpow.pop %v977
  %v979 = vmul.f32 %v970, 1.442695
  %v980 = vpow.pop %v979
  %v981 = vmul.f32 %v971, 1.442695
  %v982 = vpow.pop %v981
  %v983 = vmul.f32 %v972, 1.442695
  %v984 = vpow.pop %v983
  %v985 = vmul.f32 %v973, 1.442695
  %v986 = vpow.pop %v985
  %v987 = vmul.f32 %v974, 1.442695
  %v988 = vpow.pop %v987
  %v989 = vsel %vm946, %v976, 0.0
  %990 = vadd.xlane.f32.xlu0 %v989
  %v991 = vpop.xlane.xlu0 %990
  %v992 = vsel %vm946, %v978, 0.0
  %993 = vadd.xlane.f32.xlu0 %v992
  %v994 = vpop.xlane.xlu0 %993
  %v995 = vsel %vm946, %v980, 0.0
  %996 = vadd.xlane.f32.xlu0 %v995
  %v997 = vpop.xlane.xlu0 %996
  %v998 = vsel %vm946, %v982, 0.0
  %999 = vadd.xlane.f32.xlu0 %v998
  %v1000 = vpop.xlane.xlu0 %999
  %v1001 = vsel %vm946, %v984, 0.0
  %1002 = vadd.xlane.f32.xlu0 %v1001
  %v1003 = vpop.xlane.xlu0 %1002
  %v1004 = vsel %vm946, %v986, 0.0
  %1005 = vadd.xlane.f32.xlu0 %v1004
  %v1006 = vpop.xlane.xlu0 %1005
  %v1007 = vsel %vm946, %v988, 0.0
  %1008 = vadd.xlane.f32.xlu0 %v1007
  %v1009 = vpop.xlane.xlu0 %1008
  %v1010 = vrcp.pop %v991
  %v1011 = vrcp.pop %v994
  %v1012 = vrcp.pop %v997
  %v1013 = vrcp.pop %v1000
  %v1014 = vrcp.pop %v1003
  %v1015 = vrcp.pop %v1006
  %v1016 = vrcp.pop %v1009
  %v1017 = vmul.f32 %v976, %v1010
  %v1018 = vmul.f32 %v978, %v1011
  %v1019 = vmul.f32 %v980, %v1012
  %v1020 = vmul.f32 %v982, %v1013
  %v1021 = vmul.f32 %v984, %v1014
  %v1022 = vmul.f32 %v986, %v1015
  %v1023 = vmul.f32 %v988, %v1016
  %v1024 = vpack.c.bf16 %v1018, %v1017
  %v1025 = vpack.c.bf16 %v1020, %v1019
  %v1026 = vpack.c.bf16 %v1022, %v1021
  %v1027 = vpack.c.bf16 %v1023, %v1023
  %1028 = vrot.lane.b32.xlu0 %v299, 64
  %v1029 = vpop.permute.xlu0 %1028
  %1030 = vrot.lane.b32.xlu0 %v300, 64
  %v1031 = vpop.permute.xlu0 %1030
  %1032 = vrot.lane.b32.xlu0 %v301, 64
  %v1033 = vpop.permute.xlu0 %1032
  %1034 = vrot.lane.b32.xlu0 %v302, 64
  %v1035 = vpop.permute.xlu0 %1034
  %v1040 = vsel %vm946, %v1024, 0
  %v1043 = vsel %vm946, %v1025, 0
  %v1046 = vsel %vm946, %v1026, 0
  %v1049 = vsel %vm946, %v1027, 0
  %vm1051 = vcmask 1043456
  %v1053 = vsel %vm1051, %v1035, 0
  %1055 = vmatprep.subr.bf16.mxu0 0
  %1056 = vmatpush1.bf16.msra.mxu0 %v1029
  %1057 = vmatprep.subr.bf16.mxu0 0
  %1058 = vmatpush1.bf16.msra.mxu0 %v1031
  %1059 = vmatprep.subr.bf16.mxu0 0
  %1060 = vmatpush1.bf16.msra.mxu0 %v1033
  %1061 = vmatprep.subr.bf16.mxu0 0
  %1062 = vmatpush1.bf16.msra.mxu0 %v1053
  %1063 = vmatprep.subr.bf16.mxu0 0
  %1064 = vmatpush1.bf16.msra.mxu0 0
  %1065 = vmatprep.subr.bf16.mxu0 0
  %1066 = vmatpush1.bf16.msra.mxu0 0
  %1067 = vmatprep.subr.bf16.mxu0 0
  %1068 = vmatpush1.bf16.msra.mxu0 0
  %1069 = vmatprep.subr.bf16.mxu0 0
  %1070 = vmatpush1.bf16.msra.mxu0 0
  %1071 = vmatprep.subr.bf16.mxu0 0
  %1072 = vmatpush1.bf16.msra.mxu0 0
  %1073 = vmatprep.subr.bf16.mxu0 0
  %1074 = vmatpush1.bf16.msra.mxu0 0
  %1075 = vmatprep.subr.bf16.mxu0 0
  %1076 = vmatpush1.bf16.msra.mxu0 0
  %1077 = vmatprep.subr.bf16.mxu0 0
  %1078 = vmatpush1.bf16.msra.mxu0 0
  %1079 = vmatprep.subr.bf16.mxu0 0
  %1080 = vmatpush1.bf16.msra.mxu0 0
  %1081 = vmatprep.subr.bf16.mxu0 0
  %1082 = vmatpush1.bf16.msra.mxu0 0
  %1083 = vmatprep.subr.bf16.mxu0 0
  %1084 = vmatpush1.bf16.msra.mxu0 0
  %1085 = vmatprep.subr.bf16.mxu0 0
  %1086 = vmatpush1.bf16.msra.mxu0 0
  %1087 = vmatprep.mubr.bf16.mxu0 0
  %1088 = vmatmul.mubr.bf16.gmra.mrb[0].mxu0 %v1040
  %v1089 = vpop.f32.mrb[0].mxu0
  %v1090 = vadd.f32 0.0, %v1089
  %v1091 = vpop.f32.mrb[0].mxu0
  %v1092 = vpop.f32.mrb[0].mxu0
  %v1093 = vadd.f32 0.0, %v1092
  %v1094 = vpop.f32.mrb[0].mxu0
  %1095 = vmatprep.mubr.bf16.mxu0 0
  %1096 = vmatmul.mubr.bf16.gmra.mrb[0].mxu0 %v1043
  %v1097 = vpop.f32.mrb[0].mxu0
  %v1098 = vadd.f32 0.0, %v1097
  %v1099 = vpop.f32.mrb[0].mxu0
  %v1100 = vpop.f32.mrb[0].mxu0
  %v1101 = vadd.f32 0.0, %v1100
  %v1102 = vpop.f32.mrb[0].mxu0
  %1103 = vmatprep.mubr.bf16.mxu0 0
  %1104 = vmatmul.mubr.bf16.gmra.mrb[0].mxu0 %v1046
  %v1105 = vpop.f32.mrb[0].mxu0
  %v1106 = vadd.f32 0.0, %v1105
  %v1107 = vpop.f32.mrb[0].mxu0
  %v1108 = vpop.f32.mrb[0].mxu0
  %v1109 = vadd.f32 0.0, %v1108
  %v1110 = vpop.f32.mrb[0].mxu0
  %1111 = vmatprep.mubr.bf16.mxu0 0
  %1112 = vmatmul.mubr.bf16.gmra.mrb[0].mxu0 %v1049
  %v1113 = vpop.f32.mrb[0].mxu0
  %v1114 = vadd.f32 0.0, %v1113
  %v1115 = vpop.f32.mrb[0].mxu0
  %v1116 = vpop.f32.mrb[0].mxu0
  %v1117 = vpop.f32.mrb[0].mxu0
  %1118 = vdwg.mxu0
  %v1119 = vlaneseq
  %v1120 = vshrl.u32 %v1119, 7
  %v1121 = vsub.s32 0, %v1120
  %v1122 = vrot.slane %v298, %v1121
  %v1123 = vmul.f32 %v1090, %v1122
  %v1124 = vmul.f32 %v1093, %v1122
  %v1125 = vmul.f32 %v1098, %v1122
  %v1126 = vmul.f32 %v1101, %v1122
  %v1127 = vmul.f32 %v1106, %v1122
  %v1128 = vmul.f32 %v1109, %v1122
  %v1129 = vmul.f32 %v1114, %v1122
  %v1130 = vlaneseq
  %v1131 = vshrl.u32 %v1130, 7
  %v1132 = vsub.s32 1, %v1131
  %v1133 = vrot.slane %v297, %v1132
  %v1134 = vmul.f32 %v264, %v1133
  %v1135 = vmul.f32 %v265, %v1133
  %v1136 = vmul.f32 %v266, %v1133
  %v1137 = vmul.f32 %v267, %v1133
  %v1138 = vmul.f32 %v268, %v1133
  %v1139 = vmul.f32 %v269, %v1133
  %v1140 = vmul.f32 %v270, %v1133
  %v1141 = vpack.c.bf16 %v1135, %v1134
  %v1142 = vpack.c.bf16 %v1137, %v1136
  %v1143 = vpack.c.bf16 %v1139, %v1138
  %v1144 = vpack.c.bf16 %v1140, %v1140
  %s1145 = scalar_lea.vmem %s4, 56
  %v1146 = vld [vmem:[%s1145] sm:$0xff]
  %v1147 = vld [vmem:[%s1145 + $0x8] sm:$0xff]
  %v1148 = vld [vmem:[%s1145 + $0x10] sm:$0xff]
  %v1149 = vld [vmem:[%s1145 + $0x18] sm:$0xff]
  %v1150 = vld [vmem:[%s1145 + $0x20] sm:$0xff]
  %v1151 = vld [vmem:[%s1145 + $0x28] sm:$0xff]
  %v1152 = vld [vmem:[%s1145 + $0x30] sm:$0xff]
  %v1154 = vsel %vm103, %v1141, 0
  %v1157 = vsel %vm103, %v1142, 0
  %v1160 = vsel %vm103, %v1143, 0
  %v1163 = vsel %vm103, %v1144, 0
  %1165 = vmatprep.subr.bf16.mxu0 0
  %1166 = vmatpush1.bf16.xpose.msra.mxu0 %v871
  %1167 = vmatprep.subr.bf16.mxu0 0
  %1168 = vmatpush1.bf16.xpose.msra.mxu0 %v874
  %1169 = vmatprep.subr.bf16.mxu0 0
  %1170 = vmatpush1.bf16.xpose.msra.mxu0 %v877
  %1171 = vmatprep.subr.bf16.mxu0 0
  %1172 = vmatpush1.bf16.xpose.msra.mxu0 %v880
  %1173 = vmatprep.subr.bf16.mxu0 0
  %1174 = vmatpush1.bf16.xpose.msra.mxu0 0
  %1175 = vmatprep.subr.bf16.mxu0 0
  %1176 = vmatpush1.bf16.xpose.msra.mxu0 0
  %1177 = vmatprep.subr.bf16.mxu0 0
  %1178 = vmatpush1.bf16.xpose.msra.mxu0 0
  %1179 = vmatprep.subr.bf16.mxu0 0
  %1180 = vmatpush1.bf16.xpose.msra.mxu0 0
  %1181 = vmatprep.subr.bf16.mxu0 0
  %1182 = vmatpush1.bf16.xpose.msra.mxu0 0
  %1183 = vmatprep.subr.bf16.mxu0 0
  %1184 = vmatpush1.bf16.xpose.msra.mxu0 0
  %1185 = vmatprep.subr.bf16.mxu0 0
  %1186 = vmatpush1.bf16.xpose.msra.mxu0 0
  %1187 = vmatprep.subr.bf16.mxu0 0
  %1188 = vmatpush1.bf16.xpose.msra.mxu0 0
  %1189 = vmatprep.subr.bf16.mxu0 0
  %1190 = vmatpush1.bf16.xpose.msra.mxu0 0
  %1191 = vmatprep.subr.bf16.mxu0 0
  %1192 = vmatpush1.bf16.xpose.msra.mxu0 0
  %1193 = vmatprep.subr.bf16.mxu0 0
  %1194 = vmatpush1.bf16.xpose.msra.mxu0 0
  %1195 = vmatprep.subr.bf16.mxu0 0
  %1196 = vmatpush1.bf16.xpose.msra.mxu0 0
  %1197 = vmatprep.mubr.bf16.mxu0 0
  %1198 = vmatmul.mubr.bf16.gmra.mrb[0].mxu0 %v1154
  %v1199 = vpop.f32.mrb[0].mxu0
  %v1200 = vadd.f32 %v1146, %v1199
  %v1201 = vpop.f32.mrb[0].mxu0
  %v1202 = vpop.f32.mrb[0].mxu0
  %v1203 = vadd.f32 %v1147, %v1202
  %v1204 = vpop.f32.mrb[0].mxu0
  %1205 = vmatprep.mubr.bf16.mxu0 0
  %1206 = vmatmul.mubr.bf16.gmra.mrb[0].mxu0 %v1157
  %v1207 = vpop.f32.mrb[0].mxu0
  %v1208 = vadd.f32 %v1148, %v1207
  %v1209 = vpop.f32.mrb[0].mxu0
  %v1210 = vpop.f32.mrb[0].mxu0
  %v1211 = vadd.f32 %v1149, %v1210
  %v1212 = vpop.f32.mrb[0].mxu0
  %1213 = vmatprep.mubr.bf16.mxu0 0
  %1214 = vmatmul.mubr.bf16.gmra.mrb[0].mxu0 %v1160
  %v1215 = vpop.f32.mrb[0].mxu0
  %v1216 = vadd.f32 %v1150, %v1215
  %v1217 = vpop.f32.mrb[0].mxu0
  %v1218 = vpop.f32.mrb[0].mxu0
  %v1219 = vadd.f32 %v1151, %v1218
  %v1220 = vpop.f32.mrb[0].mxu0
  %1221 = vmatprep.mubr.bf16.mxu0 0
  %1222 = vmatmul.mubr.bf16.gmra.mrb[0].mxu0 %v1163
  %v1223 = vpop.f32.mrb[0].mxu0
  %v1224 = vadd.f32 %v1152, %v1223
  %v1225 = vpop.f32.mrb[0].mxu0
  %v1226 = vpop.f32.mrb[0].mxu0
  %v1227 = vpop.f32.mrb[0].mxu0
  %1228 = vdwg.mxu0
  %v1229 = vsel %vm946, %v1200, -inf
  %1230 = vmax.xlane.f32.xlu0 %v1229
  %v1231 = vpop.xlane.xlu0 %1230
  %v1232 = vsel %vm946, %v1203, -inf
  %1233 = vmax.xlane.f32.xlu0 %v1232
  %v1234 = vpop.xlane.xlu0 %1233
  %v1235 = vsel %vm946, %v1208, -inf
  %1236 = vmax.xlane.f32.xlu0 %v1235
  %v1237 = vpop.xlane.xlu0 %1236
  %v1238 = vsel %vm946, %v1211, -inf
  %1239 = vmax.xlane.f32.xlu0 %v1238
  %v1240 = vpop.xlane.xlu0 %1239
  %v1241 = vsel %vm946, %v1216, -inf
  %1242 = vmax.xlane.f32.xlu0 %v1241
  %v1243 = vpop.xlane.xlu0 %1242
  %v1244 = vsel %vm946, %v1219, -inf
  %1245 = vmax.xlane.f32.xlu0 %v1244
  %v1246 = vpop.xlane.xlu0 %1245
  %v1247 = vsel %vm946, %v1224, -inf
  %1248 = vmax.xlane.f32.xlu0 %v1247
  %v1249 = vpop.xlane.xlu0 %1248
  %v1250 = vsub.f32 %v1200, %v1231
  %v1251 = vsub.f32 %v1203, %v1234
  %v1252 = vsub.f32 %v1208, %v1237
  %v1253 = vsub.f32 %v1211, %v1240
  %v1254 = vsub.f32 %v1216, %v1243
  %v1255 = vsub.f32 %v1219, %v1246
  %v1256 = vsub.f32 %v1224, %v1249
  %v1257 = vmul.f32 %v1250, 1.442695
  %v1258 = vpow.pop %v1257
  %v1259 = vmul.f32 %v1251, 1.442695
  %v1260 = vpow.pop %v1259
  %v1261 = vmul.f32 %v1252, 1.442695
  %v1262 = vpow.pop %v1261
  %v1263 = vmul.f32 %v1253, 1.442695
  %v1264 = vpow.pop %v1263
  %v1265 = vmul.f32 %v1254, 1.442695
  %v1266 = vpow.pop %v1265
  %v1267 = vmul.f32 %v1255, 1.442695
  %v1268 = vpow.pop %v1267
  %v1269 = vmul.f32 %v1256, 1.442695
  %v1270 = vpow.pop %v1269
  %v1271 = vsel %vm946, %v1258, 0.0
  %1272 = vadd.xlane.f32.xlu0 %v1271
  %v1273 = vpop.xlane.xlu0 %1272
  %v1274 = vsel %vm946, %v1260, 0.0
  %1275 = vadd.xlane.f32.xlu0 %v1274
  %v1276 = vpop.xlane.xlu0 %1275
  %v1277 = vsel %vm946, %v1262, 0.0
  %1278 = vadd.xlane.f32.xlu0 %v1277
  %v1279 = vpop.xlane.xlu0 %1278
  %v1280 = vsel %vm946, %v1264, 0.0
  %1281 = vadd.xlane.f32.xlu0 %v1280
  %v1282 = vpop.xlane.xlu0 %1281
  %v1283 = vsel %vm946, %v1266, 0.0
  %1284 = vadd.xlane.f32.xlu0 %v1283
  %v1285 = vpop.xlane.xlu0 %1284
  %v1286 = vsel %vm946, %v1268, 0.0
  %1287 = vadd.xlane.f32.xlu0 %v1286
  %v1288 = vpop.xlane.xlu0 %1287
  %v1289 = vsel %vm946, %v1270, 0.0
  %1290 = vadd.xlane.f32.xlu0 %v1289
  %v1291 = vpop.xlane.xlu0 %1290
  %v1292 = vrcp.pop %v1273
  %v1293 = vrcp.pop %v1276
  %v1294 = vrcp.pop %v1279
  %v1295 = vrcp.pop %v1282
  %v1296 = vrcp.pop %v1285
  %v1297 = vrcp.pop %v1288
  %v1298 = vrcp.pop %v1291
  %v1299 = vmul.f32 %v1258, %v1292
  %v1300 = vmul.f32 %v1260, %v1293
  %v1301 = vmul.f32 %v1262, %v1294
  %v1302 = vmul.f32 %v1264, %v1295
  %v1303 = vmul.f32 %v1266, %v1296
  %v1304 = vmul.f32 %v1268, %v1297
  %v1305 = vmul.f32 %v1270, %v1298
  %v1306 = vpack.c.bf16 %v1300, %v1299
  %v1307 = vpack.c.bf16 %v1302, %v1301
  %v1308 = vpack.c.bf16 %v1304, %v1303
  %v1309 = vpack.c.bf16 %v1305, %v1305
  %v1311 = vsel %vm946, %v1306, 0
  %v1314 = vsel %vm946, %v1307, 0
  %v1317 = vsel %vm946, %v1308, 0
  %v1320 = vsel %vm946, %v1309, 0
  %1322 = vmatprep.subr.bf16.mxu0 0
  %1323 = vmatpush1.bf16.msra.mxu0 %v1029
  %1324 = vmatprep.subr.bf16.mxu0 0
  %1325 = vmatpush1.bf16.msra.mxu0 %v1031
  %1326 = vmatprep.subr.bf16.mxu0 0
  %1327 = vmatpush1.bf16.msra.mxu0 %v1033
  %1328 = vmatprep.subr.bf16.mxu0 0
  %1329 = vmatpush1.bf16.msra.mxu0 %v1053
  %1330 = vmatprep.subr.bf16.mxu0 0
  %1331 = vmatpush1.bf16.msra.mxu0 0
  %1332 = vmatprep.subr.bf16.mxu0 0
  %1333 = vmatpush1.bf16.msra.mxu0 0
  %1334 = vmatprep.subr.bf16.mxu0 0
  %1335 = vmatpush1.bf16.msra.mxu0 0
  %1336 = vmatprep.subr.bf16.mxu0 0
  %1337 = vmatpush1.bf16.msra.mxu0 0
  %1338 = vmatprep.subr.bf16.mxu0 0
  %1339 = vmatpush1.bf16.msra.mxu0 0
  %1340 = vmatprep.subr.bf16.mxu0 0
  %1341 = vmatpush1.bf16.msra.mxu0 0
  %1342 = vmatprep.subr.bf16.mxu0 0
  %1343 = vmatpush1.bf16.msra.mxu0 0
  %1344 = vmatprep.subr.bf16.mxu0 0
  %1345 = vmatpush1.bf16.msra.mxu0 0
  %1346 = vmatprep.subr.bf16.mxu0 0
  %1347 = vmatpush1.bf16.msra.mxu0 0
  %1348 = vmatprep.subr.bf16.mxu0 0
  %1349 = vmatpush1.bf16.msra.mxu0 0
  %1350 = vmatprep.subr.bf16.mxu0 0
  %1351 = vmatpush1.bf16.msra.mxu0 0
  %1352 = vmatprep.subr.bf16.mxu0 0
  %1353 = vmatpush1.bf16.msra.mxu0 0
  %1354 = vmatprep.mubr.bf16.mxu0 0
  %1355 = vmatmul.mubr.bf16.gmra.mrb[0].mxu0 %v1311
  %v1356 = vpop.f32.mrb[0].mxu0
  %v1357 = vadd.f32 0.0, %v1356
  %v1358 = vpop.f32.mrb[0].mxu0
  %v1359 = vpop.f32.mrb[0].mxu0
  %v1360 = vadd.f32 0.0, %v1359
  %v1361 = vpop.f32.mrb[0].mxu0
  %1362 = vmatprep.mubr.bf16.mxu0 0
  %1363 = vmatmul.mubr.bf16.gmra.mrb[0].mxu0 %v1314
  %v1364 = vpop.f32.mrb[0].mxu0
  %v1365 = vadd.f32 0.0, %v1364
  %v1366 = vpop.f32.mrb[0].mxu0
  %v1367 = vpop.f32.mrb[0].mxu0
  %v1368 = vadd.f32 0.0, %v1367
  %v1369 = vpop.f32.mrb[0].mxu0
  %1370 = vmatprep.mubr.bf16.mxu0 0
  %1371 = vmatmul.mubr.bf16.gmra.mrb[0].mxu0 %v1317
  %v1372 = vpop.f32.mrb[0].mxu0
  %v1373 = vadd.f32 0.0, %v1372
  %v1374 = vpop.f32.mrb[0].mxu0
  %v1375 = vpop.f32.mrb[0].mxu0
  %v1376 = vadd.f32 0.0, %v1375
  %v1377 = vpop.f32.mrb[0].mxu0
  %1378 = vmatprep.mubr.bf16.mxu0 0
  %1379 = vmatmul.mubr.bf16.gmra.mrb[0].mxu0 %v1320
  %v1380 = vpop.f32.mrb[0].mxu0
  %v1381 = vadd.f32 0.0, %v1380
  %v1382 = vpop.f32.mrb[0].mxu0
  %v1383 = vpop.f32.mrb[0].mxu0
  %v1384 = vpop.f32.mrb[0].mxu0
  %1385 = vdwg.mxu0
  %v1386 = vlaneseq
  %v1387 = vshrl.u32 %v1386, 7
  %v1388 = vsub.s32 1, %v1387
  %v1389 = vrot.slane %v298, %v1388
  %v1390 = vmul.f32 %v1357, %v1389
  %v1391 = vmul.f32 %v1360, %v1389
  %v1392 = vmul.f32 %v1365, %v1389
  %v1393 = vmul.f32 %v1368, %v1389
  %v1394 = vmul.f32 %v1373, %v1389
  %v1395 = vmul.f32 %v1376, %v1389
  %v1396 = vmul.f32 %v1381, %v1389
  %v1397 = vadd.f32 %v1123, %v1390
  %v1398 = vadd.f32 %v1124, %v1391
  %v1399 = vadd.f32 %v1125, %v1392
  %v1400 = vadd.f32 %v1126, %v1393
  %v1401 = vadd.f32 %v1127, %v1394
  %v1402 = vadd.f32 %v1128, %v1395
  %v1403 = vadd.f32 %v1129, %v1396
  %v1404 = vlaneseq
  %v1405 = vshrl.u32 %v1404, 7
  %v1406 = vsub.s32 2, %v1405
  %v1407 = vrot.slane %v297, %v1406
  %v1408 = vmul.f32 %v264, %v1407
  %v1409 = vmul.f32 %v265, %v1407
  %v1410 = vmul.f32 %v266, %v1407
  %v1411 = vmul.f32 %v267, %v1407
  %v1412 = vmul.f32 %v268, %v1407
  %v1413 = vmul.f32 %v269, %v1407
  %v1414 = vmul.f32 %v270, %v1407
  %v1415 = vpack.c.bf16 %v1409, %v1408
  %v1416 = vpack.c.bf16 %v1411, %v1410
  %v1417 = vpack.c.bf16 %v1413, %v1412
  %v1418 = vpack.c.bf16 %v1414, %v1414
  %s1419 = scalar_lea.vmem %s4, 112
  %v1420 = vld [vmem:[%s1419] sm:$0xff]
  %v1421 = vld [vmem:[%s1419 + $0x8] sm:$0xff]
  %v1422 = vld [vmem:[%s1419 + $0x10] sm:$0xff]
  %v1423 = vld [vmem:[%s1419 + $0x18] sm:$0xff]
  %v1424 = vld [vmem:[%s1419 + $0x20] sm:$0xff]
  %v1425 = vld [vmem:[%s1419 + $0x28] sm:$0xff]
  %v1426 = vld [vmem:[%s1419 + $0x30] sm:$0xff]
  %v1428 = vsel %vm103, %v1415, 0
  %v1431 = vsel %vm103, %v1416, 0
  %v1434 = vsel %vm103, %v1417, 0
  %v1437 = vsel %vm103, %v1418, 0
  %1439 = vmatprep.subr.bf16.mxu0 0
  %1440 = vmatpush1.bf16.xpose.msra.mxu0 %v871
  %1441 = vmatprep.subr.bf16.mxu0 0
  %1442 = vmatpush1.bf16.xpose.msra.mxu0 %v874
  %1443 = vmatprep.subr.bf16.mxu0 0
  %1444 = vmatpush1.bf16.xpose.msra.mxu0 %v877
  %1445 = vmatprep.subr.bf16.mxu0 0
  %1446 = vmatpush1.bf16.xpose.msra.mxu0 %v880
  %1447 = vmatprep.subr.bf16.mxu0 0
  %1448 = vmatpush1.bf16.xpose.msra.mxu0 0
  %1449 = vmatprep.subr.bf16.mxu0 0
  %1450 = vmatpush1.bf16.xpose.msra.mxu0 0
  %1451 = vmatprep.subr.bf16.mxu0 0
  %1452 = vmatpush1.bf16.xpose.msra.mxu0 0
  %1453 = vmatprep.subr.bf16.mxu0 0
  %1454 = vmatpush1.bf16.xpose.msra.mxu0 0
  %1455 = vmatprep.subr.bf16.mxu0 0
  %1456 = vmatpush1.bf16.xpose.msra.mxu0 0
  %1457 = vmatprep.subr.bf16.mxu0 0
  %1458 = vmatpush1.bf16.xpose.msra.mxu0 0
  %1459 = vmatprep.subr.bf16.mxu0 0
  %1460 = vmatpush1.bf16.xpose.msra.mxu0 0
  %1461 = vmatprep.subr.bf16.mxu0 0
  %1462 = vmatpush1.bf16.xpose.msra.mxu0 0
  %1463 = vmatprep.subr.bf16.mxu0 0
  %1464 = vmatpush1.bf16.xpose.msra.mxu0 0
  %1465 = vmatprep.subr.bf16.mxu0 0
  %1466 = vmatpush1.bf16.xpose.msra.mxu0 0
  %1467 = vmatprep.subr.bf16.mxu0 0
  %1468 = vmatpush1.bf16.xpose.msra.mxu0 0
  %1469 = vmatprep.subr.bf16.mxu0 0
  %1470 = vmatpush1.bf16.xpose.msra.mxu0 0
  %1471 = vmatprep.mubr.bf16.mxu0 0
  %1472 = vmatmul.mubr.bf16.gmra.mrb[0].mxu0 %v1428
  %v1473 = vpop.f32.mrb[0].mxu0
  %v1474 = vadd.f32 %v1420, %v1473
  %v1475 = vpop.f32.mrb[0].mxu0
  %v1476 = vpop.f32.mrb[0].mxu0
  %v1477 = vadd.f32 %v1421, %v1476
  %v1478 = vpop.f32.mrb[0].mxu0
  %1479 = vmatprep.mubr.bf16.mxu0 0
  %1480 = vmatmul.mubr.bf16.gmra.mrb[0].mxu0 %v1431
  %v1481 = vpop.f32.mrb[0].mxu0
  %v1482 = vadd.f32 %v1422, %v1481
  %v1483 = vpop.f32.mrb[0].mxu0
  %v1484 = vpop.f32.mrb[0].mxu0
  %v1485 = vadd.f32 %v1423, %v1484
  %v1486 = vpop.f32.mrb[0].mxu0
  %1487 = vmatprep.mubr.bf16.mxu0 0
  %1488 = vmatmul.mubr.bf16.gmra.mrb[0].mxu0 %v1434
  %v1489 = vpop.f32.mrb[0].mxu0
  %v1490 = vadd.f32 %v1424, %v1489
  %v1491 = vpop.f32.mrb[0].mxu0
  %v1492 = vpop.f32.mrb[0].mxu0
  %v1493 = vadd.f32 %v1425, %v1492
  %v1494 = vpop.f32.mrb[0].mxu0
  %1495 = vmatprep.mubr.bf16.mxu0 0
  %1496 = vmatmul.mubr.bf16.gmra.mrb[0].mxu0 %v1437
  %v1497 = vpop.f32.mrb[0].mxu0
  %v1498 = vadd.f32 %v1426, %v1497
  %v1499 = vpop.f32.mrb[0].mxu0
  %v1500 = vpop.f32.mrb[0].mxu0
  %v1501 = vpop.f32.mrb[0].mxu0
  %1502 = vdwg.mxu0
  %v1503 = vsel %vm946, %v1474, -inf
  %1504 = vmax.xlane.f32.xlu0 %v1503
  %v1505 = vpop.xlane.xlu0 %1504
  %v1506 = vsel %vm946, %v1477, -inf
  %1507 = vmax.xlane.f32.xlu0 %v1506
  %v1508 = vpop.xlane.xlu0 %1507
  %v1509 = vsel %vm946, %v1482, -inf
  %1510 = vmax.xlane.f32.xlu0 %v1509
  %v1511 = vpop.xlane.xlu0 %1510
  %v1512 = vsel %vm946, %v1485, -inf
  %1513 = vmax.xlane.f32.xlu0 %v1512
  %v1514 = vpop.xlane.xlu0 %1513
  %v1515 = vsel %vm946, %v1490, -inf
  %1516 = vmax.xlane.f32.xlu0 %v1515
  %v1517 = vpop.xlane.xlu0 %1516
  %v1518 = vsel %vm946, %v1493, -inf
  %1519 = vmax.xlane.f32.xlu0 %v1518
  %v1520 = vpop.xlane.xlu0 %1519
  %v1521 = vsel %vm946, %v1498, -inf
  %1522 = vmax.xlane.f32.xlu0 %v1521
  %v1523 = vpop.xlane.xlu0 %1522
  %v1524 = vsub.f32 %v1474, %v1505
  %v1525 = vsub.f32 %v1477, %v1508
  %v1526 = vsub.f32 %v1482, %v1511
  %v1527 = vsub.f32 %v1485, %v1514
  %v1528 = vsub.f32 %v1490, %v1517
  %v1529 = vsub.f32 %v1493, %v1520
  %v1530 = vsub.f32 %v1498, %v1523
  %v1531 = vmul.f32 %v1524, 1.442695
  %v1532 = vpow.pop %v1531
  %v1533 = vmul.f32 %v1525, 1.442695
  %v1534 = vpow.pop %v1533
  %v1535 = vmul.f32 %v1526, 1.442695
  %v1536 = vpow.pop %v1535
  %v1537 = vmul.f32 %v1527, 1.442695
  %v1538 = vpow.pop %v1537
  %v1539 = vmul.f32 %v1528, 1.442695
  %v1540 = vpow.pop %v1539
  %v1541 = vmul.f32 %v1529, 1.442695
  %v1542 = vpow.pop %v1541
  %v1543 = vmul.f32 %v1530, 1.442695
  %v1544 = vpow.pop %v1543
  %v1545 = vsel %vm946, %v1532, 0.0
  %1546 = vadd.xlane.f32.xlu0 %v1545
  %v1547 = vpop.xlane.xlu0 %1546
  %v1548 = vsel %vm946, %v1534, 0.0
  %1549 = vadd.xlane.f32.xlu0 %v1548
  %v1550 = vpop.xlane.xlu0 %1549
  %v1551 = vsel %vm946, %v1536, 0.0
  %1552 = vadd.xlane.f32.xlu0 %v1551
  %v1553 = vpop.xlane.xlu0 %1552
  %v1554 = vsel %vm946, %v1538, 0.0
  %1555 = vadd.xlane.f32.xlu0 %v1554
  %v1556 = vpop.xlane.xlu0 %1555
  %v1557 = vsel %vm946, %v1540, 0.0
  %1558 = vadd.xlane.f32.xlu0 %v1557
  %v1559 = vpop.xlane.xlu0 %1558
  %v1560 = vsel %vm946, %v1542, 0.0
  %1561 = vadd.xlane.f32.xlu0 %v1560
  %v1562 = vpop.xlane.xlu0 %1561
  %v1563 = vsel %vm946, %v1544, 0.0
  %1564 = vadd.xlane.f32.xlu0 %v1563
  %v1565 = vpop.xlane.xlu0 %1564
  %v1566 = vrcp.pop %v1547
  %v1567 = vrcp.pop %v1550
  %v1568 = vrcp.pop %v1553
  %v1569 = vrcp.pop %v1556
  %v1570 = vrcp.pop %v1559
  %v1571 = vrcp.pop %v1562
  %v1572 = vrcp.pop %v1565
  %v1573 = vmul.f32 %v1532, %v1566
  %v1574 = vmul.f32 %v1534, %v1567
  %v1575 = vmul.f32 %v1536, %v1568
  %v1576 = vmul.f32 %v1538, %v1569
  %v1577 = vmul.f32 %v1540, %v1570
  %v1578 = vmul.f32 %v1542, %v1571
  %v1579 = vmul.f32 %v1544, %v1572
  %v1580 = vpack.c.bf16 %v1574, %v1573
  %v1581 = vpack.c.bf16 %v1576, %v1575
  %v1582 = vpack.c.bf16 %v1578, %v1577
  %v1583 = vpack.c.bf16 %v1579, %v1579
  %v1585 = vsel %vm946, %v1580, 0
  %v1588 = vsel %vm946, %v1581, 0
  %v1591 = vsel %vm946, %v1582, 0
  %v1594 = vsel %vm946, %v1583, 0
  %1596 = vmatprep.subr.bf16.mxu0 0
  %1597 = vmatpush1.bf16.msra.mxu0 %v1029
  %1598 = vmatprep.subr.bf16.mxu0 0
  %1599 = vmatpush1.bf16.msra.mxu0 %v1031
  %1600 = vmatprep.subr.bf16.mxu0 0
  %1601 = vmatpush1.bf16.msra.mxu0 %v1033
  %1602 = vmatprep.subr.bf16.mxu0 0
  %1603 = vmatpush1.bf16.msra.mxu0 %v1053
  %1604 = vmatprep.subr.bf16.mxu0 0
  %1605 = vmatpush1.bf16.msra.mxu0 0
  %1606 = vmatprep.subr.bf16.mxu0 0
  %1607 = vmatpush1.bf16.msra.mxu0 0
  %1608 = vmatprep.subr.bf16.mxu0 0
  %1609 = vmatpush1.bf16.msra.mxu0 0
  %1610 = vmatprep.subr.bf16.mxu0 0
  %1611 = vmatpush1.bf16.msra.mxu0 0
  %1612 = vmatprep.subr.bf16.mxu0 0
  %1613 = vmatpush1.bf16.msra.mxu0 0
  %1614 = vmatprep.subr.bf16.mxu0 0
  %1615 = vmatpush1.bf16.msra.mxu0 0
  %1616 = vmatprep.subr.bf16.mxu0 0
  %1617 = vmatpush1.bf16.msra.mxu0 0
  %1618 = vmatprep.subr.bf16.mxu0 0
  %1619 = vmatpush1.bf16.msra.mxu0 0
  %1620 = vmatprep.subr.bf16.mxu0 0
  %1621 = vmatpush1.bf16.msra.mxu0 0
  %1622 = vmatprep.subr.bf16.mxu0 0
  %1623 = vmatpush1.bf16.msra.mxu0 0
  %1624 = vmatprep.subr.bf16.mxu0 0
  %1625 = vmatpush1.bf16.msra.mxu0 0
  %1626 = vmatprep.subr.bf16.mxu0 0
  %1627 = vmatpush1.bf16.msra.mxu0 0
  %1628 = vmatprep.mubr.bf16.mxu0 0
  %1629 = vmatmul.mubr.bf16.gmra.mrb[0].mxu0 %v1585
  %v1630 = vpop.f32.mrb[0].mxu0
  %v1631 = vadd.f32 0.0, %v1630
  %v1632 = vpop.f32.mrb[0].mxu0
  %v1633 = vpop.f32.mrb[0].mxu0
  %v1634 = vadd.f32 0.0, %v1633
  %v1635 = vpop.f32.mrb[0].mxu0
  %1636 = vmatprep.mubr.bf16.mxu0 0
  %1637 = vmatmul.mubr.bf16.gmra.mrb[0].mxu0 %v1588
  %v1638 = vpop.f32.mrb[0].mxu0
  %v1639 = vadd.f32 0.0, %v1638
  %v1640 = vpop.f32.mrb[0].mxu0
  %v1641 = vpop.f32.mrb[0].mxu0
  %v1642 = vadd.f32 0.0, %v1641
  %v1643 = vpop.f32.mrb[0].mxu0
  %1644 = vmatprep.mubr.bf16.mxu0 0
  %1645 = vmatmul.mubr.bf16.gmra.mrb[0].mxu0 %v1591
  %v1646 = vpop.f32.mrb[0].mxu0
  %v1647 = vadd.f32 0.0, %v1646
  %v1648 = vpop.f32.mrb[0].mxu0
  %v1649 = vpop.f32.mrb[0].mxu0
  %v1650 = vadd.f32 0.0, %v1649
  %v1651 = vpop.f32.mrb[0].mxu0
  %1652 = vmatprep.mubr.bf16.mxu0 0
  %1653 = vmatmul.mubr.bf16.gmra.mrb[0].mxu0 %v1594
  %v1654 = vpop.f32.mrb[0].mxu0
  %v1655 = vadd.f32 0.0, %v1654
  %v1656 = vpop.f32.mrb[0].mxu0
  %v1657 = vpop.f32.mrb[0].mxu0
  %v1658 = vpop.f32.mrb[0].mxu0
  %1659 = vdwg.mxu0
  %v1660 = vlaneseq
  %v1661 = vshrl.u32 %v1660, 7
  %v1662 = vsub.s32 2, %v1661
  %v1663 = vrot.slane %v298, %v1662
  %v1664 = vmul.f32 %v1631, %v1663
  %v1665 = vmul.f32 %v1634, %v1663
  %v1666 = vmul.f32 %v1639, %v1663
  %v1667 = vmul.f32 %v1642, %v1663
  %v1668 = vmul.f32 %v1647, %v1663
  %v1669 = vmul.f32 %v1650, %v1663
  %v1670 = vmul.f32 %v1655, %v1663
  %v1671 = vadd.f32 %v1397, %v1664
  %v1672 = vadd.f32 %v1398, %v1665
  %v1673 = vadd.f32 %v1399, %v1666
  %v1674 = vadd.f32 %v1400, %v1667
  %v1675 = vadd.f32 %v1401, %v1668
  %v1676 = vadd.f32 %v1402, %v1669
  %v1677 = vadd.f32 %v1403, %v1670
  %v1678 = vlaneseq
  %v1679 = vshrl.u32 %v1678, 7
  %v1680 = vsub.s32 3, %v1679
  %v1681 = vrot.slane %v297, %v1680
  %v1682 = vmul.f32 %v264, %v1681
  %v1683 = vmul.f32 %v265, %v1681
  %v1684 = vmul.f32 %v266, %v1681
  %v1685 = vmul.f32 %v267, %v1681
  %v1686 = vmul.f32 %v268, %v1681
  %v1687 = vmul.f32 %v269, %v1681
  %v1688 = vmul.f32 %v270, %v1681
  %v1689 = vpack.c.bf16 %v1683, %v1682
  %v1690 = vpack.c.bf16 %v1685, %v1684
  %v1691 = vpack.c.bf16 %v1687, %v1686
  %v1692 = vpack.c.bf16 %v1688, %v1688
  %s1693 = scalar_lea.vmem %s4, 168
  %v1694 = vld [vmem:[%s1693] sm:$0xff]
  %v1695 = vld [vmem:[%s1693 + $0x8] sm:$0xff]
  %v1696 = vld [vmem:[%s1693 + $0x10] sm:$0xff]
  %v1697 = vld [vmem:[%s1693 + $0x18] sm:$0xff]
  %v1698 = vld [vmem:[%s1693 + $0x20] sm:$0xff]
  %v1699 = vld [vmem:[%s1693 + $0x28] sm:$0xff]
  %v1700 = vld [vmem:[%s1693 + $0x30] sm:$0xff]
  %v1702 = vsel %vm103, %v1689, 0
  %v1705 = vsel %vm103, %v1690, 0
  %v1708 = vsel %vm103, %v1691, 0
  %v1711 = vsel %vm103, %v1692, 0
  %1713 = vmatprep.subr.bf16.mxu0 0
  %1714 = vmatpush1.bf16.xpose.msra.mxu0 %v871
  %1715 = vmatprep.subr.bf16.mxu0 0
  %1716 = vmatpush1.bf16.xpose.msra.mxu0 %v874
  %1717 = vmatprep.subr.bf16.mxu0 0
  %1718 = vmatpush1.bf16.xpose.msra.mxu0 %v877
  %1719 = vmatprep.subr.bf16.mxu0 0
  %1720 = vmatpush1.bf16.xpose.msra.mxu0 %v880
  %1721 = vmatprep.subr.bf16.mxu0 0
  %1722 = vmatpush1.bf16.xpose.msra.mxu0 0
  %1723 = vmatprep.subr.bf16.mxu0 0
  %1724 = vmatpush1.bf16.xpose.msra.mxu0 0
  %1725 = vmatprep.subr.bf16.mxu0 0
  %1726 = vmatpush1.bf16.xpose.msra.mxu0 0
  %1727 = vmatprep.subr.bf16.mxu0 0
  %1728 = vmatpush1.bf16.xpose.msra.mxu0 0
  %1729 = vmatprep.subr.bf16.mxu0 0
  %1730 = vmatpush1.bf16.xpose.msra.mxu0 0
  %1731 = vmatprep.subr.bf16.mxu0 0
  %1732 = vmatpush1.bf16.xpose.msra.mxu0 0
  %1733 = vmatprep.subr.bf16.mxu0 0
  %1734 = vmatpush1.bf16.xpose.msra.mxu0 0
  %1735 = vmatprep.subr.bf16.mxu0 0
  %1736 = vmatpush1.bf16.xpose.msra.mxu0 0
  %1737 = vmatprep.subr.bf16.mxu0 0
  %1738 = vmatpush1.bf16.xpose.msra.mxu0 0
  %1739 = vmatprep.subr.bf16.mxu0 0
  %1740 = vmatpush1.bf16.xpose.msra.mxu0 0
  %1741 = vmatprep.subr.bf16.mxu0 0
  %1742 = vmatpush1.bf16.xpose.msra.mxu0 0
  %1743 = vmatprep.subr.bf16.mxu0 0
  %1744 = vmatpush1.bf16.xpose.msra.mxu0 0
  %1745 = vmatprep.mubr.bf16.mxu0 0
  %1746 = vmatmul.mubr.bf16.gmra.mrb[0].mxu0 %v1702
  %v1747 = vpop.f32.mrb[0].mxu0
  %v1748 = vadd.f32 %v1694, %v1747
  %v1749 = vpop.f32.mrb[0].mxu0
  %v1750 = vpop.f32.mrb[0].mxu0
  %v1751 = vadd.f32 %v1695, %v1750
  %v1752 = vpop.f32.mrb[0].mxu0
  %1753 = vmatprep.mubr.bf16.mxu0 0
  %1754 = vmatmul.mubr.bf16.gmra.mrb[0].mxu0 %v1705
  %v1755 = vpop.f32.mrb[0].mxu0
  %v1756 = vadd.f32 %v1696, %v1755
  %v1757 = vpop.f32.mrb[0].mxu0
  %v1758 = vpop.f32.mrb[0].mxu0
  %v1759 = vadd.f32 %v1697, %v1758
  %v1760 = vpop.f32.mrb[0].mxu0
  %1761 = vmatprep.mubr.bf16.mxu0 0
  %1762 = vmatmul.mubr.bf16.gmra.mrb[0].mxu0 %v1708
  %v1763 = vpop.f32.mrb[0].mxu0
  %v1764 = vadd.f32 %v1698, %v1763
  %v1765 = vpop.f32.mrb[0].mxu0
  %v1766 = vpop.f32.mrb[0].mxu0
  %v1767 = vadd.f32 %v1699, %v1766
  %v1768 = vpop.f32.mrb[0].mxu0
  %1769 = vmatprep.mubr.bf16.mxu0 0
  %1770 = vmatmul.mubr.bf16.gmra.mrb[0].mxu0 %v1711
  %v1771 = vpop.f32.mrb[0].mxu0
  %v1772 = vadd.f32 %v1700, %v1771
  %v1773 = vpop.f32.mrb[0].mxu0
  %v1774 = vpop.f32.mrb[0].mxu0
  %v1775 = vpop.f32.mrb[0].mxu0
  %1776 = vdwg.mxu0
  %v1777 = vsel %vm946, %v1748, -inf
  %1778 = vmax.xlane.f32.xlu0 %v1777
  %v1779 = vpop.xlane.xlu0 %1778
  %v1780 = vsel %vm946, %v1751, -inf
  %1781 = vmax.xlane.f32.xlu0 %v1780
  %v1782 = vpop.xlane.xlu0 %1781
  %v1783 = vsel %vm946, %v1756, -inf
  %1784 = vmax.xlane.f32.xlu0 %v1783
  %v1785 = vpop.xlane.xlu0 %1784
  %v1786 = vsel %vm946, %v1759, -inf
  %1787 = vmax.xlane.f32.xlu0 %v1786
  %v1788 = vpop.xlane.xlu0 %1787
  %v1789 = vsel %vm946, %v1764, -inf
  %1790 = vmax.xlane.f32.xlu0 %v1789
  %v1791 = vpop.xlane.xlu0 %1790
  %v1792 = vsel %vm946, %v1767, -inf
  %1793 = vmax.xlane.f32.xlu0 %v1792
  %v1794 = vpop.xlane.xlu0 %1793
  %v1795 = vsel %vm946, %v1772, -inf
  %1796 = vmax.xlane.f32.xlu0 %v1795
  %v1797 = vpop.xlane.xlu0 %1796
  %v1798 = vsub.f32 %v1748, %v1779
  %v1799 = vsub.f32 %v1751, %v1782
  %v1800 = vsub.f32 %v1756, %v1785
  %v1801 = vsub.f32 %v1759, %v1788
  %v1802 = vsub.f32 %v1764, %v1791
  %v1803 = vsub.f32 %v1767, %v1794
  %v1804 = vsub.f32 %v1772, %v1797
  %v1805 = vmul.f32 %v1798, 1.442695
  %v1806 = vpow.pop %v1805
  %v1807 = vmul.f32 %v1799, 1.442695
  %v1808 = vpow.pop %v1807
  %v1809 = vmul.f32 %v1800, 1.442695
  %v1810 = vpow.pop %v1809
  %v1811 = vmul.f32 %v1801, 1.442695
  %v1812 = vpow.pop %v1811
  %v1813 = vmul.f32 %v1802, 1.442695
  %v1814 = vpow.pop %v1813
  %v1815 = vmul.f32 %v1803, 1.442695
  %v1816 = vpow.pop %v1815
  %v1817 = vmul.f32 %v1804, 1.442695
  %v1818 = vpow.pop %v1817
  %v1819 = vsel %vm946, %v1806, 0.0
  %1820 = vadd.xlane.f32.xlu0 %v1819
  %v1821 = vpop.xlane.xlu0 %1820
  %v1822 = vsel %vm946, %v1808, 0.0
  %1823 = vadd.xlane.f32.xlu0 %v1822
  %v1824 = vpop.xlane.xlu0 %1823
  %v1825 = vsel %vm946, %v1810, 0.0
  %1826 = vadd.xlane.f32.xlu0 %v1825
  %v1827 = vpop.xlane.xlu0 %1826
  %v1828 = vsel %vm946, %v1812, 0.0
  %1829 = vadd.xlane.f32.xlu0 %v1828
  %v1830 = vpop.xlane.xlu0 %1829
  %v1831 = vsel %vm946, %v1814, 0.0
  %1832 = vadd.xlane.f32.xlu0 %v1831
  %v1833 = vpop.xlane.xlu0 %1832
  %v1834 = vsel %vm946, %v1816, 0.0
  %1835 = vadd.xlane.f32.xlu0 %v1834
  %v1836 = vpop.xlane.xlu0 %1835
  %v1837 = vsel %vm946, %v1818, 0.0
  %1838 = vadd.xlane.f32.xlu0 %v1837
  %v1839 = vpop.xlane.xlu0 %1838
  %v1840 = vrcp.pop %v1821
  %v1841 = vrcp.pop %v1824
  %v1842 = vrcp.pop %v1827
  %v1843 = vrcp.pop %v1830
  %v1844 = vrcp.pop %v1833
  %v1845 = vrcp.pop %v1836
  %v1846 = vrcp.pop %v1839
  %v1847 = vmul.f32 %v1806, %v1840
  %v1848 = vmul.f32 %v1808, %v1841
  %v1849 = vmul.f32 %v1810, %v1842
  %v1850 = vmul.f32 %v1812, %v1843
  %v1851 = vmul.f32 %v1814, %v1844
  %v1852 = vmul.f32 %v1816, %v1845
  %v1853 = vmul.f32 %v1818, %v1846
  %v1854 = vpack.c.bf16 %v1848, %v1847
  %v1855 = vpack.c.bf16 %v1850, %v1849
  %v1856 = vpack.c.bf16 %v1852, %v1851
  %v1857 = vpack.c.bf16 %v1853, %v1853
  %v1859 = vsel %vm946, %v1854, 0
  %v1862 = vsel %vm946, %v1855, 0
  %v1865 = vsel %vm946, %v1856, 0
  %v1868 = vsel %vm946, %v1857, 0
  %1870 = vmatprep.subr.bf16.mxu0 0
  %1871 = vmatpush1.bf16.msra.mxu0 %v1029
  %1872 = vmatprep.subr.bf16.mxu0 0
  %1873 = vmatpush1.bf16.msra.mxu0 %v1031
  %1874 = vmatprep.subr.bf16.mxu0 0
  %1875 = vmatpush1.bf16.msra.mxu0 %v1033
  %1876 = vmatprep.subr.bf16.mxu0 0
  %1877 = vmatpush1.bf16.msra.mxu0 %v1053
  %1878 = vmatprep.subr.bf16.mxu0 0
  %1879 = vmatpush1.bf16.msra.mxu0 0
  %1880 = vmatprep.subr.bf16.mxu0 0
  %1881 = vmatpush1.bf16.msra.mxu0 0
  %1882 = vmatprep.subr.bf16.mxu0 0
  %1883 = vmatpush1.bf16.msra.mxu0 0
  %1884 = vmatprep.subr.bf16.mxu0 0
  %1885 = vmatpush1.bf16.msra.mxu0 0
  %1886 = vmatprep.subr.bf16.mxu0 0
  %1887 = vmatpush1.bf16.msra.mxu0 0
  %1888 = vmatprep.subr.bf16.mxu0 0
  %1889 = vmatpush1.bf16.msra.mxu0 0
  %1890 = vmatprep.subr.bf16.mxu0 0
  %1891 = vmatpush1.bf16.msra.mxu0 0
  %1892 = vmatprep.subr.bf16.mxu0 0
  %1893 = vmatpush1.bf16.msra.mxu0 0
  %1894 = vmatprep.subr.bf16.mxu0 0
  %1895 = vmatpush1.bf16.msra.mxu0 0
  %1896 = vmatprep.subr.bf16.mxu0 0
  %1897 = vmatpush1.bf16.msra.mxu0 0
  %1898 = vmatprep.subr.bf16.mxu0 0
  %1899 = vmatpush1.bf16.msra.mxu0 0
  %1900 = vmatprep.subr.bf16.mxu0 0
  %1901 = vmatpush1.bf16.msra.mxu0 0
  %1902 = vmatprep.mubr.bf16.mxu0 0
  %1903 = vmatmul.mubr.bf16.gmra.mrb[0].mxu0 %v1859
  %v1904 = vpop.f32.mrb[0].mxu0
  %v1905 = vadd.f32 0.0, %v1904
  %v1906 = vpop.f32.mrb[0].mxu0
  %v1907 = vpop.f32.mrb[0].mxu0
  %v1908 = vadd.f32 0.0, %v1907
  %v1909 = vpop.f32.mrb[0].mxu0
  %1910 = vmatprep.mubr.bf16.mxu0 0
  %1911 = vmatmul.mubr.bf16.gmra.mrb[0].mxu0 %v1862
  %v1912 = vpop.f32.mrb[0].mxu0
  %v1913 = vadd.f32 0.0, %v1912
  %v1914 = vpop.f32.mrb[0].mxu0
  %v1915 = vpop.f32.mrb[0].mxu0
  %v1916 = vadd.f32 0.0, %v1915
  %v1917 = vpop.f32.mrb[0].mxu0
  %1918 = vmatprep.mubr.bf16.mxu0 0
  %1919 = vmatmul.mubr.bf16.gmra.mrb[0].mxu0 %v1865
  %v1920 = vpop.f32.mrb[0].mxu0
  %v1921 = vadd.f32 0.0, %v1920
  %v1922 = vpop.f32.mrb[0].mxu0
  %v1923 = vpop.f32.mrb[0].mxu0
  %v1924 = vadd.f32 0.0, %v1923
  %v1925 = vpop.f32.mrb[0].mxu0
  %1926 = vmatprep.mubr.bf16.mxu0 0
  %1927 = vmatmul.mubr.bf16.gmra.mrb[0].mxu0 %v1868
  %v1928 = vpop.f32.mrb[0].mxu0
  %v1929 = vadd.f32 0.0, %v1928
  %v1930 = vpop.f32.mrb[0].mxu0
  %v1931 = vpop.f32.mrb[0].mxu0
  %v1932 = vpop.f32.mrb[0].mxu0
  %1933 = vdwg.mxu0
  %v1934 = vlaneseq
  %v1935 = vshrl.u32 %v1934, 7
  %v1936 = vsub.s32 3, %v1935
  %v1937 = vrot.slane %v298, %v1936
  %v1938 = vmul.f32 %v1905, %v1937
  %v1939 = vmul.f32 %v1908, %v1937
  %v1940 = vmul.f32 %v1913, %v1937
  %v1941 = vmul.f32 %v1916, %v1937
  %v1942 = vmul.f32 %v1921, %v1937
  %v1943 = vmul.f32 %v1924, %v1937
  %v1944 = vmul.f32 %v1929, %v1937
  %v1945 = vadd.f32 %v1671, %v1938
  %v1946 = vadd.f32 %v1672, %v1939
  %v1947 = vadd.f32 %v1673, %v1940
  %v1948 = vadd.f32 %v1674, %v1941
  %v1949 = vadd.f32 %v1675, %v1942
  %v1950 = vadd.f32 %v1676, %v1943
  %v1951 = vadd.f32 %v1677, %v1944
  %1953 = vrot.lane.b32.xlu0 %v823, 64
  %v1954 = vpop.permute.xlu0 %1953
  %v1956 = vmul.f32 %v279, %v1954
  %v1957 = vlaneseq
  %v1958 = vshrl.u32 %v1957, 7
  %v1959 = vsub.s32 0, %v1958
  %v1960 = vrot.slane %v1956, %v1959
  %v1961 = vadd.f32 %v1945, %v1960
  %v1962 = vadd.f32 %v1946, %v1960
  %v1963 = vadd.f32 %v1947, %v1960
  %v1964 = vadd.f32 %v1948, %v1960
  %v1965 = vadd.f32 %v1949, %v1960
  %v1966 = vadd.f32 %v1950, %v1960
  %v1967 = vadd.f32 %v1951, %v1960
  %v1968 = vadd.f32 %v1961, %v775
  %v1969 = vadd.f32 %v1962, %v778
  %v1970 = vadd.f32 %v1963, %v783
  %v1971 = vadd.f32 %v1964, %v786
  %v1972 = vadd.f32 %v1965, %v791
  %v1973 = vadd.f32 %v1966, %v794
  %v1974 = vadd.f32 %v1967, %v799
  %v1975 = vmax.f32 %v1968, 0.0
  %v1976 = vmax.f32 %v1969, 0.0
  %v1977 = vmax.f32 %v1970, 0.0
  %v1978 = vmax.f32 %v1971, 0.0
  %v1979 = vmax.f32 %v1972, 0.0
  %v1980 = vmax.f32 %v1973, 0.0
  %v1981 = vmax.f32 %v1974, 0.0
  %v1982 = vpack.c.bf16 %v272, %v271
  %v1983 = vpack.c.bf16 %v274, %v273
  %v1984 = vpack.c.bf16 %v276, %v275
  %v1985 = vpack.c.bf16 %v277, %v277
  %v1986 = vmul.f32 %v271, %v309
  %v1987 = vmul.f32 %v272, %v309
  %v1988 = vmul.f32 %v273, %v309
  %v1989 = vmul.f32 %v274, %v309
  %v1990 = vmul.f32 %v275, %v309
  %v1991 = vmul.f32 %v276, %v309
  %v1992 = vmul.f32 %v277, %v309
  %v1993 = vmul.f32 %v271, %v324
  %v1994 = vmul.f32 %v272, %v324
  %v1995 = vmul.f32 %v273, %v324
  %v1996 = vmul.f32 %v274, %v324
  %v1997 = vmul.f32 %v275, %v324
  %v1998 = vmul.f32 %v276, %v324
  %v1999 = vmul.f32 %v277, %v324
  %v2000 = vmul.f32 %v271, %v339
  %v2001 = vmul.f32 %v272, %v339
  %v2002 = vmul.f32 %v273, %v339
  %v2003 = vmul.f32 %v274, %v339
  %v2004 = vmul.f32 %v275, %v339
  %v2005 = vmul.f32 %v276, %v339
  %v2006 = vmul.f32 %v277, %v339
  %v2007 = vmul.f32 %v271, %v354
  %v2008 = vmul.f32 %v272, %v354
  %v2009 = vmul.f32 %v273, %v354
  %v2010 = vmul.f32 %v274, %v354
  %v2011 = vmul.f32 %v275, %v354
  %v2012 = vmul.f32 %v276, %v354
  %v2013 = vmul.f32 %v277, %v354
  %v2014 = vmul.f32 %v271, %v369
  %v2015 = vmul.f32 %v272, %v369
  %v2016 = vmul.f32 %v273, %v369
  %v2017 = vmul.f32 %v274, %v369
  %v2018 = vmul.f32 %v275, %v369
  %v2019 = vmul.f32 %v276, %v369
  %v2020 = vmul.f32 %v277, %v369
  %v2021 = vmul.f32 %v271, %v384
  %v2022 = vmul.f32 %v272, %v384
  %v2023 = vmul.f32 %v273, %v384
  %v2024 = vmul.f32 %v274, %v384
  %v2025 = vmul.f32 %v275, %v384
  %v2026 = vmul.f32 %v276, %v384
  %v2027 = vmul.f32 %v277, %v384
  %v2028 = vmul.f32 %v271, %v399
  %v2029 = vmul.f32 %v272, %v399
  %v2030 = vmul.f32 %v273, %v399
  %v2031 = vmul.f32 %v274, %v399
  %v2032 = vmul.f32 %v275, %v399
  %v2033 = vmul.f32 %v276, %v399
  %v2034 = vmul.f32 %v277, %v399
  %v2035 = vmul.f32 %v271, %v414
  %v2036 = vmul.f32 %v272, %v414
  %v2037 = vmul.f32 %v273, %v414
  %v2038 = vmul.f32 %v274, %v414
  %v2039 = vmul.f32 %v275, %v414
  %v2040 = vmul.f32 %v276, %v414
  %v2041 = vmul.f32 %v277, %v414
  %v2042 = vmul.f32 %v271, %v429
  %v2043 = vmul.f32 %v272, %v429
  %v2044 = vmul.f32 %v273, %v429
  %v2045 = vmul.f32 %v274, %v429
  %v2046 = vmul.f32 %v275, %v429
  %v2047 = vmul.f32 %v276, %v429
  %v2048 = vmul.f32 %v277, %v429
  %v2049 = vpack.c.bf16 %v1987, %v1986
  %v2050 = vpack.c.bf16 %v1989, %v1988
  %v2051 = vpack.c.bf16 %v1991, %v1990
  %v2052 = vpack.c.bf16 %v1993, %v1992
  %v2053 = vpack.c.bf16 %v1995, %v1994
  %v2054 = vpack.c.bf16 %v1997, %v1996
  %v2055 = vpack.c.bf16 %v1999, %v1998
  %v2056 = vpack.c.bf16 %v2001, %v2000
  %v2057 = vpack.c.bf16 %v2003, %v2002
  %v2058 = vpack.c.bf16 %v2005, %v2004
  %v2059 = vpack.c.bf16 %v2007, %v2006
  %v2060 = vpack.c.bf16 %v2009, %v2008
  %v2061 = vpack.c.bf16 %v2011, %v2010
  %v2062 = vpack.c.bf16 %v2013, %v2012
  %v2063 = vpack.c.bf16 %v2015, %v2014
  %v2064 = vpack.c.bf16 %v2017, %v2016
  %v2065 = vpack.c.bf16 %v2019, %v2018
  %v2066 = vpack.c.bf16 %v2021, %v2020
  %v2067 = vpack.c.bf16 %v2023, %v2022
  %v2068 = vpack.c.bf16 %v2025, %v2024
  %v2069 = vpack.c.bf16 %v2027, %v2026
  %v2070 = vpack.c.bf16 %v2029, %v2028
  %v2071 = vpack.c.bf16 %v2031, %v2030
  %v2072 = vpack.c.bf16 %v2033, %v2032
  %v2073 = vpack.c.bf16 %v2035, %v2034
  %v2074 = vpack.c.bf16 %v2037, %v2036
  %v2075 = vpack.c.bf16 %v2039, %v2038
  %v2076 = vpack.c.bf16 %v2041, %v2040
  %v2077 = vpack.c.bf16 %v2043, %v2042
  %v2078 = vpack.c.bf16 %v2045, %v2044
  %v2079 = vpack.c.bf16 %v2047, %v2046
  %v2080 = vpack.c.bf16 0.0, %v2048
  %2113 = vrot.lane.b32.xlu0 %v2049, 64
  %v2114 = vpop.permute.xlu0 %2113
  %2115 = vrot.lane.b32.xlu0 %v2050, 64
  %v2116 = vpop.permute.xlu0 %2115
  %2117 = vrot.lane.b32.xlu0 %v2051, 64
  %v2118 = vpop.permute.xlu0 %2117
  %2119 = vrot.lane.b32.xlu0 %v2052, 64
  %v2120 = vpop.permute.xlu0 %2119
  %2121 = vrot.lane.b32.xlu0 %v2053, 64
  %v2122 = vpop.permute.xlu0 %2121
  %2123 = vrot.lane.b32.xlu0 %v2054, 64
  %v2124 = vpop.permute.xlu0 %2123
  %2125 = vrot.lane.b32.xlu0 %v2055, 64
  %v2126 = vpop.permute.xlu0 %2125
  %2127 = vrot.lane.b32.xlu0 %v2056, 64
  %v2128 = vpop.permute.xlu0 %2127
  %2129 = vrot.lane.b32.xlu0 %v2057, 64
  %v2130 = vpop.permute.xlu0 %2129
  %2131 = vrot.lane.b32.xlu0 %v2058, 64
  %v2132 = vpop.permute.xlu0 %2131
  %2133 = vrot.lane.b32.xlu0 %v2059, 64
  %v2134 = vpop.permute.xlu0 %2133
  %2135 = vrot.lane.b32.xlu0 %v2060, 64
  %v2136 = vpop.permute.xlu0 %2135
  %2137 = vrot.lane.b32.xlu0 %v2061, 64
  %v2138 = vpop.permute.xlu0 %2137
  %2139 = vrot.lane.b32.xlu0 %v2062, 64
  %v2140 = vpop.permute.xlu0 %2139
  %2141 = vrot.lane.b32.xlu0 %v2063, 64
  %v2142 = vpop.permute.xlu0 %2141
  %2143 = vrot.lane.b32.xlu0 %v2064, 64
  %v2144 = vpop.permute.xlu0 %2143
  %2145 = vrot.lane.b32.xlu0 %v2065, 64
  %v2146 = vpop.permute.xlu0 %2145
  %2147 = vrot.lane.b32.xlu0 %v2066, 64
  %v2148 = vpop.permute.xlu0 %2147
  %2149 = vrot.lane.b32.xlu0 %v2067, 64
  %v2150 = vpop.permute.xlu0 %2149
  %2151 = vrot.lane.b32.xlu0 %v2068, 64
  %v2152 = vpop.permute.xlu0 %2151
  %2153 = vrot.lane.b32.xlu0 %v2069, 64
  %v2154 = vpop.permute.xlu0 %2153
  %2155 = vrot.lane.b32.xlu0 %v2070, 64
  %v2156 = vpop.permute.xlu0 %2155
  %2157 = vrot.lane.b32.xlu0 %v2071, 64
  %v2158 = vpop.permute.xlu0 %2157
  %2159 = vrot.lane.b32.xlu0 %v2072, 64
  %v2160 = vpop.permute.xlu0 %2159
  %2161 = vrot.lane.b32.xlu0 %v2073, 64
  %v2162 = vpop.permute.xlu0 %2161
  %2163 = vrot.lane.b32.xlu0 %v2074, 64
  %v2164 = vpop.permute.xlu0 %2163
  %2165 = vrot.lane.b32.xlu0 %v2075, 64
  %v2166 = vpop.permute.xlu0 %2165
  %2167 = vrot.lane.b32.xlu0 %v2076, 64
  %v2168 = vpop.permute.xlu0 %2167
  %2169 = vrot.lane.b32.xlu0 %v2077, 64
  %v2170 = vpop.permute.xlu0 %2169
  %2171 = vrot.lane.b32.xlu0 %v2078, 64
  %v2172 = vpop.permute.xlu0 %2171
  %2173 = vrot.lane.b32.xlu0 %v2079, 64
  %v2174 = vpop.permute.xlu0 %2173
  %2175 = vrot.lane.b32.xlu0 %v2080, 64
  %v2176 = vpop.permute.xlu0 %2175
  %2209 = vmatprep.subr.bf16.mxu0 0
  %2210 = vmatpush1.bf16.msra.mxu0 %v2114
  %2211 = vmatprep.subr.bf16.mxu0 0
  %2212 = vmatpush1.bf16.msra.mxu0 %v2116
  %2213 = vmatprep.subr.bf16.mxu0 0
  %2214 = vmatpush1.bf16.msra.mxu0 %v2118
  %2215 = vmatprep.subr.bf16.mxu0 0
  %2216 = vmatpush1.bf16.msra.mxu0 %v2120
  %2217 = vmatprep.subr.bf16.mxu0 0
  %2218 = vmatpush1.bf16.msra.mxu0 %v2122
  %2219 = vmatprep.subr.bf16.mxu0 0
  %2220 = vmatpush1.bf16.msra.mxu0 %v2124
  %2221 = vmatprep.subr.bf16.mxu0 0
  %2222 = vmatpush1.bf16.msra.mxu0 %v2126
  %2223 = vmatprep.subr.bf16.mxu0 0
  %2224 = vmatpush1.bf16.msra.mxu0 %v2128
  %2225 = vmatprep.subr.bf16.mxu0 0
  %2226 = vmatpush1.bf16.msra.mxu0 %v2130
  %2227 = vmatprep.subr.bf16.mxu0 0
  %2228 = vmatpush1.bf16.msra.mxu0 %v2132
  %2229 = vmatprep.subr.bf16.mxu0 0
  %2230 = vmatpush1.bf16.msra.mxu0 %v2134
  %2231 = vmatprep.subr.bf16.mxu0 0
  %2232 = vmatpush1.bf16.msra.mxu0 %v2136
  %2233 = vmatprep.subr.bf16.mxu0 0
  %2234 = vmatpush1.bf16.msra.mxu0 %v2138
  %2235 = vmatprep.subr.bf16.mxu0 0
  %2236 = vmatpush1.bf16.msra.mxu0 %v2140
  %2237 = vmatprep.subr.bf16.mxu0 0
  %2238 = vmatpush1.bf16.msra.mxu0 %v2142
  %2239 = vmatprep.subr.bf16.mxu0 0
  %2240 = vmatpush1.bf16.msra.mxu0 %v2144
  %2241 = vmatprep.mubr.bf16.mxu0 %v517
  %2242 = vmatmul.mubr.bf16.gmra.mrb[0].mxu0 %v516
  %v2243 = vpop.f32.mrb[0].mxu0
  %v2244 = vadd.f32 %v473, %v2243
  %v2245 = vpop.f32.mrb[0].mxu0
  %v2246 = vpop.f32.mrb[0].mxu0
  %v2247 = vadd.f32 %v473, %v2246
  %v2248 = vpop.f32.mrb[0].mxu0
  %2249 = vmatprep.mubr.bf16.mxu0 %v521
  %2250 = vmatmul.mubr.bf16.gmra.mrb[0].mxu0 %v520
  %v2251 = vpop.f32.mrb[0].mxu0
  %v2252 = vadd.f32 %v473, %v2251
  %v2253 = vpop.f32.mrb[0].mxu0
  %v2254 = vpop.f32.mrb[0].mxu0
  %v2255 = vadd.f32 %v473, %v2254
  %v2256 = vpop.f32.mrb[0].mxu0
  %2257 = vmatprep.mubr.bf16.mxu0 %v525
  %2258 = vmatmul.mubr.bf16.gmra.mrb[0].mxu0 %v524
  %v2259 = vpop.f32.mrb[0].mxu0
  %v2260 = vadd.f32 %v473, %v2259
  %v2261 = vpop.f32.mrb[0].mxu0
  %v2262 = vpop.f32.mrb[0].mxu0
  %v2263 = vadd.f32 %v473, %v2262
  %v2264 = vpop.f32.mrb[0].mxu0
  %2265 = vmatprep.mubr.bf16.mxu0 %v529
  %2266 = vmatmul.mubr.bf16.gmra.mrb[0].mxu0 %v528
  %v2267 = vpop.f32.mrb[0].mxu0
  %v2268 = vadd.f32 %v473, %v2267
  %v2269 = vpop.f32.mrb[0].mxu0
  %v2270 = vpop.f32.mrb[0].mxu0
  %v2271 = vpop.f32.mrb[0].mxu0
  %2272 = vdwg.mxu0
  %2273 = vmatprep.subr.bf16.mxu0 0
  %2274 = vmatpush1.bf16.msra.mxu0 %v2146
  %2275 = vmatprep.subr.bf16.mxu0 0
  %2276 = vmatpush1.bf16.msra.mxu0 %v2148
  %2277 = vmatprep.subr.bf16.mxu0 0
  %2278 = vmatpush1.bf16.msra.mxu0 %v2150
  %2279 = vmatprep.subr.bf16.mxu0 0
  %2280 = vmatpush1.bf16.msra.mxu0 %v2152
  %2281 = vmatprep.subr.bf16.mxu0 0
  %2282 = vmatpush1.bf16.msra.mxu0 %v2154
  %2283 = vmatprep.subr.bf16.mxu0 0
  %2284 = vmatpush1.bf16.msra.mxu0 %v2156
  %2285 = vmatprep.subr.bf16.mxu0 0
  %2286 = vmatpush1.bf16.msra.mxu0 %v2158
  %2287 = vmatprep.subr.bf16.mxu0 0
  %2288 = vmatpush1.bf16.msra.mxu0 %v2160
  %2289 = vmatprep.subr.bf16.mxu0 0
  %2290 = vmatpush1.bf16.msra.mxu0 %v2162
  %2291 = vmatprep.subr.bf16.mxu0 0
  %2292 = vmatpush1.bf16.msra.mxu0 %v2164
  %2293 = vmatprep.subr.bf16.mxu0 0
  %2294 = vmatpush1.bf16.msra.mxu0 %v2166
  %2295 = vmatprep.subr.bf16.mxu0 0
  %2296 = vmatpush1.bf16.msra.mxu0 %v2168
  %2297 = vmatprep.subr.bf16.mxu0 0
  %2298 = vmatpush1.bf16.msra.mxu0 %v2170
  %2299 = vmatprep.subr.bf16.mxu0 0
  %2300 = vmatpush1.bf16.msra.mxu0 %v2172
  %2301 = vmatprep.subr.bf16.mxu0 0
  %2302 = vmatpush1.bf16.msra.mxu0 %v2174
  %2303 = vmatprep.subr.bf16.mxu0 0
  %2304 = vmatpush1.bf16.msra.mxu0 %v2176
  %2305 = vmatprep.mubr.bf16.mxu0 %v519
  %2306 = vmatmul.mubr.bf16.gmra.mrb[0].mxu0 %v518
  %v2307 = vpop.f32.mrb[0].mxu0
  %v2308 = vadd.f32 %v2244, %v2307
  %v2309 = vpop.f32.mrb[0].mxu0
  %v2310 = vpop.f32.mrb[0].mxu0
  %v2311 = vadd.f32 %v2247, %v2310
  %v2312 = vpop.f32.mrb[0].mxu0
  %2313 = vmatprep.mubr.bf16.mxu0 %v523
  %2314 = vmatmul.mubr.bf16.gmra.mrb[0].mxu0 %v522
  %v2315 = vpop.f32.mrb[0].mxu0
  %v2316 = vadd.f32 %v2252, %v2315
  %v2317 = vpop.f32.mrb[0].mxu0
  %v2318 = vpop.f32.mrb[0].mxu0
  %v2319 = vadd.f32 %v2255, %v2318
  %v2320 = vpop.f32.mrb[0].mxu0
  %2321 = vmatprep.mubr.bf16.mxu0 %v527
  %2322 = vmatmul.mubr.bf16.gmra.mrb[0].mxu0 %v526
  %v2323 = vpop.f32.mrb[0].mxu0
  %v2324 = vadd.f32 %v2260, %v2323
  %v2325 = vpop.f32.mrb[0].mxu0
  %v2326 = vpop.f32.mrb[0].mxu0
  %v2327 = vadd.f32 %v2263, %v2326
  %v2328 = vpop.f32.mrb[0].mxu0
  %2329 = vmatprep.mubr.bf16.mxu0 %v531
  %2330 = vmatmul.mubr.bf16.gmra.mrb[0].mxu0 %v530
  %v2331 = vpop.f32.mrb[0].mxu0
  %v2332 = vadd.f32 %v2268, %v2331
  %v2333 = vpop.f32.mrb[0].mxu0
  %v2334 = vpop.f32.mrb[0].mxu0
  %v2335 = vpop.f32.mrb[0].mxu0
  %2336 = vdwg.mxu0
  %v2337 = vsel %vm804, %v271, 0.0
  %v2338 = vsel %vm804, %v272, 0.0
  %v2339 = vadd.f32 %v2337, %v2338
  %v2340 = vsel %vm804, %v273, 0.0
  %v2341 = vadd.f32 %v2339, %v2340
  %v2342 = vsel %vm804, %v274, 0.0
  %v2343 = vadd.f32 %v2341, %v2342
  %v2344 = vsel %vm804, %v275, 0.0
  %v2345 = vadd.f32 %v2343, %v2344
  %v2346 = vsel %vm804, %v276, 0.0
  %v2347 = vadd.f32 %v2345, %v2346
  %v2348 = vsel %vm804, %v277, 0.0
  %v2349 = vadd.f32 %v2347, %v2348
  %v2350 = vrot.slane %v2349, 4
  %v2351 = vadd.f32 %v2349, %v2350
  %v2352 = vrot.slane %v2351, 2
  %v2353 = vadd.f32 %v2351, %v2352
  %v2354 = vrot.slane %v2353, 1
  %v2355 = vadd.f32 %v2353, %v2354
  %v2356 = vmul.f32 %v271, %v827
  %v2357 = vmul.f32 %v272, %v827
  %v2358 = vmul.f32 %v273, %v827
  %v2359 = vmul.f32 %v274, %v827
  %v2360 = vmul.f32 %v275, %v827
  %v2361 = vmul.f32 %v276, %v827
  %v2362 = vmul.f32 %v277, %v827
  %v2363 = vpack.c.bf16 %v2357, %v2356
  %v2364 = vpack.c.bf16 %v2359, %v2358
  %v2365 = vpack.c.bf16 %v2361, %v2360
  %v2366 = vpack.c.bf16 %v2362, %v2362
  %2371 = vrot.lane.b32.xlu0 %v1982, 96
  %v2372 = vpop.permute.xlu0 %2371
  %2373 = vrot.lane.b32.xlu0 %v1983, 96
  %v2374 = vpop.permute.xlu0 %2373
  %2375 = vrot.lane.b32.xlu0 %v1984, 96
  %v2376 = vpop.permute.xlu0 %2375
  %2377 = vrot.lane.b32.xlu0 %v1985, 96
  %v2378 = vpop.permute.xlu0 %2377
  %v2380 = vsel %vm103, %v2363, 0
  %v2383 = vsel %vm103, %v2364, 0
  %v2386 = vsel %vm103, %v2365, 0
  %v2389 = vsel %vm103, %v2366, 0
  %v2392 = vsel %vm103, %v2372, 0
  %v2395 = vsel %vm103, %v2374, 0
  %v2398 = vsel %vm103, %v2376, 0
  %v2401 = vsel %vm103, %v2378, 0
  %2403 = vmatprep.subr.bf16.mxu0 0
  %2404 = vmatpush1.bf16.xpose.msra.mxu0 %v2392
  %2405 = vmatprep.subr.bf16.mxu0 0
  %2406 = vmatpush1.bf16.xpose.msra.mxu0 %v2395
  %2407 = vmatprep.subr.bf16.mxu0 0
  %2408 = vmatpush1.bf16.xpose.msra.mxu0 %v2398
  %2409 = vmatprep.subr.bf16.mxu0 0
  %2410 = vmatpush1.bf16.xpose.msra.mxu0 %v2401
  %2411 = vmatprep.subr.bf16.mxu0 0
  %2412 = vmatpush1.bf16.xpose.msra.mxu0 0
  %2413 = vmatprep.subr.bf16.mxu0 0
  %2414 = vmatpush1.bf16.xpose.msra.mxu0 0
  %2415 = vmatprep.subr.bf16.mxu0 0
  %2416 = vmatpush1.bf16.xpose.msra.mxu0 0
  %2417 = vmatprep.subr.bf16.mxu0 0
  %2418 = vmatpush1.bf16.xpose.msra.mxu0 0
  %2419 = vmatprep.subr.bf16.mxu0 0
  %2420 = vmatpush1.bf16.xpose.msra.mxu0 0
  %2421 = vmatprep.subr.bf16.mxu0 0
  %2422 = vmatpush1.bf16.xpose.msra.mxu0 0
  %2423 = vmatprep.subr.bf16.mxu0 0
  %2424 = vmatpush1.bf16.xpose.msra.mxu0 0
  %2425 = vmatprep.subr.bf16.mxu0 0
  %2426 = vmatpush1.bf16.xpose.msra.mxu0 0
  %2427 = vmatprep.subr.bf16.mxu0 0
  %2428 = vmatpush1.bf16.xpose.msra.mxu0 0
  %2429 = vmatprep.subr.bf16.mxu0 0
  %2430 = vmatpush1.bf16.xpose.msra.mxu0 0
  %2431 = vmatprep.subr.bf16.mxu0 0
  %2432 = vmatpush1.bf16.xpose.msra.mxu0 0
  %2433 = vmatprep.subr.bf16.mxu0 0
  %2434 = vmatpush1.bf16.xpose.msra.mxu0 0
  %2435 = vmatprep.mubr.bf16.mxu0 0
  %2436 = vmatmul.mubr.bf16.gmra.mrb[0].mxu0 %v2380
  %v2437 = vpop.f32.mrb[0].mxu0
  %v2438 = vadd.f32 %v839, %v2437
  %v2439 = vpop.f32.mrb[0].mxu0
  %v2440 = vpop.f32.mrb[0].mxu0
  %v2441 = vadd.f32 %v840, %v2440
  %v2442 = vpop.f32.mrb[0].mxu0
  %2443 = vmatprep.mubr.bf16.mxu0 0
  %2444 = vmatmul.mubr.bf16.gmra.mrb[0].mxu0 %v2383
  %v2445 = vpop.f32.mrb[0].mxu0
  %v2446 = vadd.f32 %v841, %v2445
  %v2447 = vpop.f32.mrb[0].mxu0
  %v2448 = vpop.f32.mrb[0].mxu0
  %v2449 = vadd.f32 %v842, %v2448
  %v2450 = vpop.f32.mrb[0].mxu0
  %2451 = vmatprep.mubr.bf16.mxu0 0
  %2452 = vmatmul.mubr.bf16.gmra.mrb[0].mxu0 %v2386
  %v2453 = vpop.f32.mrb[0].mxu0
  %v2454 = vadd.f32 %v843, %v2453
  %v2455 = vpop.f32.mrb[0].mxu0
  %v2456 = vpop.f32.mrb[0].mxu0
  %v2457 = vadd.f32 %v844, %v2456
  %v2458 = vpop.f32.mrb[0].mxu0
  %2459 = vmatprep.mubr.bf16.mxu0 0
  %2460 = vmatmul.mubr.bf16.gmra.mrb[0].mxu0 %v2389
  %v2461 = vpop.f32.mrb[0].mxu0
  %v2462 = vadd.f32 %v845, %v2461
  %v2463 = vpop.f32.mrb[0].mxu0
  %v2464 = vpop.f32.mrb[0].mxu0
  %v2465 = vpop.f32.mrb[0].mxu0
  %2466 = vdwg.mxu0
  %v2467 = vsel %vm946, %v2438, -inf
  %2468 = vmax.xlane.f32.xlu0 %v2467
  %v2469 = vpop.xlane.xlu0 %2468
  %v2470 = vsel %vm946, %v2441, -inf
  %2471 = vmax.xlane.f32.xlu0 %v2470
  %v2472 = vpop.xlane.xlu0 %2471
  %v2473 = vsel %vm946, %v2446, -inf
  %2474 = vmax.xlane.f32.xlu0 %v2473
  %v2475 = vpop.xlane.xlu0 %2474
  %v2476 = vsel %vm946, %v2449, -inf
  %2477 = vmax.xlane.f32.xlu0 %v2476
  %v2478 = vpop.xlane.xlu0 %2477
  %v2479 = vsel %vm946, %v2454, -inf
  %2480 = vmax.xlane.f32.xlu0 %v2479
  %v2481 = vpop.xlane.xlu0 %2480
  %v2482 = vsel %vm946, %v2457, -inf
  %2483 = vmax.xlane.f32.xlu0 %v2482
  %v2484 = vpop.xlane.xlu0 %2483
  %v2485 = vsel %vm946, %v2462, -inf
  %2486 = vmax.xlane.f32.xlu0 %v2485
  %v2487 = vpop.xlane.xlu0 %2486
  %v2488 = vsub.f32 %v2438, %v2469
  %v2489 = vsub.f32 %v2441, %v2472
  %v2490 = vsub.f32 %v2446, %v2475
  %v2491 = vsub.f32 %v2449, %v2478
  %v2492 = vsub.f32 %v2454, %v2481
  %v2493 = vsub.f32 %v2457, %v2484
  %v2494 = vsub.f32 %v2462, %v2487
  %v2495 = vmul.f32 %v2488, 1.442695
  %v2496 = vpow.pop %v2495
  %v2497 = vmul.f32 %v2489, 1.442695
  %v2498 = vpow.pop %v2497
  %v2499 = vmul.f32 %v2490, 1.442695
  %v2500 = vpow.pop %v2499
  %v2501 = vmul.f32 %v2491, 1.442695
  %v2502 = vpow.pop %v2501
  %v2503 = vmul.f32 %v2492, 1.442695
  %v2504 = vpow.pop %v2503
  %v2505 = vmul.f32 %v2493, 1.442695
  %v2506 = vpow.pop %v2505
  %v2507 = vmul.f32 %v2494, 1.442695
  %v2508 = vpow.pop %v2507
  %v2509 = vsel %vm946, %v2496, 0.0
  %2510 = vadd.xlane.f32.xlu0 %v2509
  %v2511 = vpop.xlane.xlu0 %2510
  %v2512 = vsel %vm946, %v2498, 0.0
  %2513 = vadd.xlane.f32.xlu0 %v2512
  %v2514 = vpop.xlane.xlu0 %2513
  %v2515 = vsel %vm946, %v2500, 0.0
  %2516 = vadd.xlane.f32.xlu0 %v2515
  %v2517 = vpop.xlane.xlu0 %2516
  %v2518 = vsel %vm946, %v2502, 0.0
  %2519 = vadd.xlane.f32.xlu0 %v2518
  %v2520 = vpop.xlane.xlu0 %2519
  %v2521 = vsel %vm946, %v2504, 0.0
  %2522 = vadd.xlane.f32.xlu0 %v2521
  %v2523 = vpop.xlane.xlu0 %2522
  %v2524 = vsel %vm946, %v2506, 0.0
  %2525 = vadd.xlane.f32.xlu0 %v2524
  %v2526 = vpop.xlane.xlu0 %2525
  %v2527 = vsel %vm946, %v2508, 0.0
  %2528 = vadd.xlane.f32.xlu0 %v2527
  %v2529 = vpop.xlane.xlu0 %2528
  %v2530 = vrcp.pop %v2511
  %v2531 = vrcp.pop %v2514
  %v2532 = vrcp.pop %v2517
  %v2533 = vrcp.pop %v2520
  %v2534 = vrcp.pop %v2523
  %v2535 = vrcp.pop %v2526
  %v2536 = vrcp.pop %v2529
  %v2537 = vmul.f32 %v2496, %v2530
  %v2538 = vmul.f32 %v2498, %v2531
  %v2539 = vmul.f32 %v2500, %v2532
  %v2540 = vmul.f32 %v2502, %v2533
  %v2541 = vmul.f32 %v2504, %v2534
  %v2542 = vmul.f32 %v2506, %v2535
  %v2543 = vmul.f32 %v2508, %v2536
  %v2544 = vpack.c.bf16 %v2538, %v2537
  %v2545 = vpack.c.bf16 %v2540, %v2539
  %v2546 = vpack.c.bf16 %v2542, %v2541
  %v2547 = vpack.c.bf16 %v2543, %v2543
  %2548 = vrot.lane.b32.xlu0 %v1982, 64
  %v2549 = vpop.permute.xlu0 %2548
  %2550 = vrot.lane.b32.xlu0 %v1983, 64
  %v2551 = vpop.permute.xlu0 %2550
  %2552 = vrot.lane.b32.xlu0 %v1984, 64
  %v2553 = vpop.permute.xlu0 %2552
  %2554 = vrot.lane.b32.xlu0 %v1985, 64
  %v2555 = vpop.permute.xlu0 %2554
  %v2560 = vsel %vm946, %v2544, 0
  %v2563 = vsel %vm946, %v2545, 0
  %v2566 = vsel %vm946, %v2546, 0
  %v2569 = vsel %vm946, %v2547, 0
  %v2572 = vsel %vm1051, %v2555, 0
  %2574 = vmatprep.subr.bf16.mxu0 0
  %2575 = vmatpush1.bf16.msra.mxu0 %v2549
  %2576 = vmatprep.subr.bf16.mxu0 0
  %2577 = vmatpush1.bf16.msra.mxu0 %v2551
  %2578 = vmatprep.subr.bf16.mxu0 0
  %2579 = vmatpush1.bf16.msra.mxu0 %v2553
  %2580 = vmatprep.subr.bf16.mxu0 0
  %2581 = vmatpush1.bf16.msra.mxu0 %v2572
  %2582 = vmatprep.subr.bf16.mxu0 0
  %2583 = vmatpush1.bf16.msra.mxu0 0
  %2584 = vmatprep.subr.bf16.mxu0 0
  %2585 = vmatpush1.bf16.msra.mxu0 0
  %2586 = vmatprep.subr.bf16.mxu0 0
  %2587 = vmatpush1.bf16.msra.mxu0 0
  %2588 = vmatprep.subr.bf16.mxu0 0
  %2589 = vmatpush1.bf16.msra.mxu0 0
  %2590 = vmatprep.subr.bf16.mxu0 0
  %2591 = vmatpush1.bf16.msra.mxu0 0
  %2592 = vmatprep.subr.bf16.mxu0 0
  %2593 = vmatpush1.bf16.msra.mxu0 0
  %2594 = vmatprep.subr.bf16.mxu0 0
  %2595 = vmatpush1.bf16.msra.mxu0 0
  %2596 = vmatprep.subr.bf16.mxu0 0
  %2597 = vmatpush1.bf16.msra.mxu0 0
  %2598 = vmatprep.subr.bf16.mxu0 0
  %2599 = vmatpush1.bf16.msra.mxu0 0
  %2600 = vmatprep.subr.bf16.mxu0 0
  %2601 = vmatpush1.bf16.msra.mxu0 0
  %2602 = vmatprep.subr.bf16.mxu0 0
  %2603 = vmatpush1.bf16.msra.mxu0 0
  %2604 = vmatprep.subr.bf16.mxu0 0
  %2605 = vmatpush1.bf16.msra.mxu0 0
  %2606 = vmatprep.mubr.bf16.mxu0 0
  %2607 = vmatmul.mubr.bf16.gmra.mrb[0].mxu0 %v2560
  %v2608 = vpop.f32.mrb[0].mxu0
  %v2609 = vadd.f32 0.0, %v2608
  %v2610 = vpop.f32.mrb[0].mxu0
  %v2611 = vpop.f32.mrb[0].mxu0
  %v2612 = vadd.f32 0.0, %v2611
  %v2613 = vpop.f32.mrb[0].mxu0
  %2614 = vmatprep.mubr.bf16.mxu0 0
  %2615 = vmatmul.mubr.bf16.gmra.mrb[0].mxu0 %v2563
  %v2616 = vpop.f32.mrb[0].mxu0
  %v2617 = vadd.f32 0.0, %v2616
  %v2618 = vpop.f32.mrb[0].mxu0
  %v2619 = vpop.f32.mrb[0].mxu0
  %v2620 = vadd.f32 0.0, %v2619
  %v2621 = vpop.f32.mrb[0].mxu0
  %2622 = vmatprep.mubr.bf16.mxu0 0
  %2623 = vmatmul.mubr.bf16.gmra.mrb[0].mxu0 %v2566
  %v2624 = vpop.f32.mrb[0].mxu0
  %v2625 = vadd.f32 0.0, %v2624
  %v2626 = vpop.f32.mrb[0].mxu0
  %v2627 = vpop.f32.mrb[0].mxu0
  %v2628 = vadd.f32 0.0, %v2627
  %v2629 = vpop.f32.mrb[0].mxu0
  %2630 = vmatprep.mubr.bf16.mxu0 0
  %2631 = vmatmul.mubr.bf16.gmra.mrb[0].mxu0 %v2569
  %v2632 = vpop.f32.mrb[0].mxu0
  %v2633 = vadd.f32 0.0, %v2632
  %v2634 = vpop.f32.mrb[0].mxu0
  %v2635 = vpop.f32.mrb[0].mxu0
  %v2636 = vpop.f32.mrb[0].mxu0
  %2637 = vdwg.mxu0
  %v2638 = vmul.f32 %v2609, %v1122
  %v2639 = vmul.f32 %v2612, %v1122
  %v2640 = vmul.f32 %v2617, %v1122
  %v2641 = vmul.f32 %v2620, %v1122
  %v2642 = vmul.f32 %v2625, %v1122
  %v2643 = vmul.f32 %v2628, %v1122
  %v2644 = vmul.f32 %v2633, %v1122
  %v2645 = vmul.f32 %v271, %v1133
  %v2646 = vmul.f32 %v272, %v1133
  %v2647 = vmul.f32 %v273, %v1133
  %v2648 = vmul.f32 %v274, %v1133
  %v2649 = vmul.f32 %v275, %v1133
  %v2650 = vmul.f32 %v276, %v1133
  %v2651 = vmul.f32 %v277, %v1133
  %v2652 = vpack.c.bf16 %v2646, %v2645
  %v2653 = vpack.c.bf16 %v2648, %v2647
  %v2654 = vpack.c.bf16 %v2650, %v2649
  %v2655 = vpack.c.bf16 %v2651, %v2651
  %v2657 = vsel %vm103, %v2652, 0
  %v2660 = vsel %vm103, %v2653, 0
  %v2663 = vsel %vm103, %v2654, 0
  %v2666 = vsel %vm103, %v2655, 0
  %2668 = vmatprep.subr.bf16.mxu0 0
  %2669 = vmatpush1.bf16.xpose.msra.mxu0 %v2392
  %2670 = vmatprep.subr.bf16.mxu0 0
  %2671 = vmatpush1.bf16.xpose.msra.mxu0 %v2395
  %2672 = vmatprep.subr.bf16.mxu0 0
  %2673 = vmatpush1.bf16.xpose.msra.mxu0 %v2398
  %2674 = vmatprep.subr.bf16.mxu0 0
  %2675 = vmatpush1.bf16.xpose.msra.mxu0 %v2401
  %2676 = vmatprep.subr.bf16.mxu0 0
  %2677 = vmatpush1.bf16.xpose.msra.mxu0 0
  %2678 = vmatprep.subr.bf16.mxu0 0
  %2679 = vmatpush1.bf16.xpose.msra.mxu0 0
  %2680 = vmatprep.subr.bf16.mxu0 0
  %2681 = vmatpush1.bf16.xpose.msra.mxu0 0
  %2682 = vmatprep.subr.bf16.mxu0 0
  %2683 = vmatpush1.bf16.xpose.msra.mxu0 0
  %2684 = vmatprep.subr.bf16.mxu0 0
  %2685 = vmatpush1.bf16.xpose.msra.mxu0 0
  %2686 = vmatprep.subr.bf16.mxu0 0
  %2687 = vmatpush1.bf16.xpose.msra.mxu0 0
  %2688 = vmatprep.subr.bf16.mxu0 0
  %2689 = vmatpush1.bf16.xpose.msra.mxu0 0
  %2690 = vmatprep.subr.bf16.mxu0 0
  %2691 = vmatpush1.bf16.xpose.msra.mxu0 0
  %2692 = vmatprep.subr.bf16.mxu0 0
  %2693 = vmatpush1.bf16.xpose.msra.mxu0 0
  %2694 = vmatprep.subr.bf16.mxu0 0
  %2695 = vmatpush1.bf16.xpose.msra.mxu0 0
  %2696 = vmatprep.subr.bf16.mxu0 0
  %2697 = vmatpush1.bf16.xpose.msra.mxu0 0
  %2698 = vmatprep.subr.bf16.mxu0 0
  %2699 = vmatpush1.bf16.xpose.msra.mxu0 0
  %2700 = vmatprep.mubr.bf16.mxu0 0
  %2701 = vmatmul.mubr.bf16.gmra.mrb[0].mxu0 %v2657
  %v2702 = vpop.f32.mrb[0].mxu0
  %v2703 = vadd.f32 %v1146, %v2702
  %v2704 = vpop.f32.mrb[0].mxu0
  %v2705 = vpop.f32.mrb[0].mxu0
  %v2706 = vadd.f32 %v1147, %v2705
  %v2707 = vpop.f32.mrb[0].mxu0
  %2708 = vmatprep.mubr.bf16.mxu0 0
  %2709 = vmatmul.mubr.bf16.gmra.mrb[0].mxu0 %v2660
  %v2710 = vpop.f32.mrb[0].mxu0
  %v2711 = vadd.f32 %v1148, %v2710
  %v2712 = vpop.f32.mrb[0].mxu0
  %v2713 = vpop.f32.mrb[0].mxu0
  %v2714 = vadd.f32 %v1149, %v2713
  %v2715 = vpop.f32.mrb[0].mxu0
  %2716 = vmatprep.mubr.bf16.mxu0 0
  %2717 = vmatmul.mubr.bf16.gmra.mrb[0].mxu0 %v2663
  %v2718 = vpop.f32.mrb[0].mxu0
  %v2719 = vadd.f32 %v1150, %v2718
  %v2720 = vpop.f32.mrb[0].mxu0
  %v2721 = vpop.f32.mrb[0].mxu0
  %v2722 = vadd.f32 %v1151, %v2721
  %v2723 = vpop.f32.mrb[0].mxu0
  %2724 = vmatprep.mubr.bf16.mxu0 0
  %2725 = vmatmul.mubr.bf16.gmra.mrb[0].mxu0 %v2666
  %v2726 = vpop.f32.mrb[0].mxu0
  %v2727 = vadd.f32 %v1152, %v2726
  %v2728 = vpop.f32.mrb[0].mxu0
  %v2729 = vpop.f32.mrb[0].mxu0
  %v2730 = vpop.f32.mrb[0].mxu0
  %2731 = vdwg.mxu0
  %v2732 = vsel %vm946, %v2703, -inf
  %2733 = vmax.xlane.f32.xlu0 %v2732
  %v2734 = vpop.xlane.xlu0 %2733
  %v2735 = vsel %vm946, %v2706, -inf
  %2736 = vmax.xlane.f32.xlu0 %v2735
  %v2737 = vpop.xlane.xlu0 %2736
  %v2738 = vsel %vm946, %v2711, -inf
  %2739 = vmax.xlane.f32.xlu0 %v2738
  %v2740 = vpop.xlane.xlu0 %2739
  %v2741 = vsel %vm946, %v2714, -inf
  %2742 = vmax.xlane.f32.xlu0 %v2741
  %v2743 = vpop.xlane.xlu0 %2742
  %v2744 = vsel %vm946, %v2719, -inf
  %2745 = vmax.xlane.f32.xlu0 %v2744
  %v2746 = vpop.xlane.xlu0 %2745
  %v2747 = vsel %vm946, %v2722, -inf
  %2748 = vmax.xlane.f32.xlu0 %v2747
  %v2749 = vpop.xlane.xlu0 %2748
  %v2750 = vsel %vm946, %v2727, -inf
  %2751 = vmax.xlane.f32.xlu0 %v2750
  %v2752 = vpop.xlane.xlu0 %2751
  %v2753 = vsub.f32 %v2703, %v2734
  %v2754 = vsub.f32 %v2706, %v2737
  %v2755 = vsub.f32 %v2711, %v2740
  %v2756 = vsub.f32 %v2714, %v2743
  %v2757 = vsub.f32 %v2719, %v2746
  %v2758 = vsub.f32 %v2722, %v2749
  %v2759 = vsub.f32 %v2727, %v2752
  %v2760 = vmul.f32 %v2753, 1.442695
  %v2761 = vpow.pop %v2760
  %v2762 = vmul.f32 %v2754, 1.442695
  %v2763 = vpow.pop %v2762
  %v2764 = vmul.f32 %v2755, 1.442695
  %v2765 = vpow.pop %v2764
  %v2766 = vmul.f32 %v2756, 1.442695
  %v2767 = vpow.pop %v2766
  %v2768 = vmul.f32 %v2757, 1.442695
  %v2769 = vpow.pop %v2768
  %v2770 = vmul.f32 %v2758, 1.442695
  %v2771 = vpow.pop %v2770
  %v2772 = vmul.f32 %v2759, 1.442695
  %v2773 = vpow.pop %v2772
  %v2774 = vsel %vm946, %v2761, 0.0
  %2775 = vadd.xlane.f32.xlu0 %v2774
  %v2776 = vpop.xlane.xlu0 %2775
  %v2777 = vsel %vm946, %v2763, 0.0
  %2778 = vadd.xlane.f32.xlu0 %v2777
  %v2779 = vpop.xlane.xlu0 %2778
  %v2780 = vsel %vm946, %v2765, 0.0
  %2781 = vadd.xlane.f32.xlu0 %v2780
  %v2782 = vpop.xlane.xlu0 %2781
  %v2783 = vsel %vm946, %v2767, 0.0
  %2784 = vadd.xlane.f32.xlu0 %v2783
  %v2785 = vpop.xlane.xlu0 %2784
  %v2786 = vsel %vm946, %v2769, 0.0
  %2787 = vadd.xlane.f32.xlu0 %v2786
  %v2788 = vpop.xlane.xlu0 %2787
  %v2789 = vsel %vm946, %v2771, 0.0
  %2790 = vadd.xlane.f32.xlu0 %v2789
  %v2791 = vpop.xlane.xlu0 %2790
  %v2792 = vsel %vm946, %v2773, 0.0
  %2793 = vadd.xlane.f32.xlu0 %v2792
  %v2794 = vpop.xlane.xlu0 %2793
  %v2795 = vrcp.pop %v2776
  %v2796 = vrcp.pop %v2779
  %v2797 = vrcp.pop %v2782
  %v2798 = vrcp.pop %v2785
  %v2799 = vrcp.pop %v2788
  %v2800 = vrcp.pop %v2791
  %v2801 = vrcp.pop %v2794
  %v2802 = vmul.f32 %v2761, %v2795
  %v2803 = vmul.f32 %v2763, %v2796
  %v2804 = vmul.f32 %v2765, %v2797
  %v2805 = vmul.f32 %v2767, %v2798
  %v2806 = vmul.f32 %v2769, %v2799
  %v2807 = vmul.f32 %v2771, %v2800
  %v2808 = vmul.f32 %v2773, %v2801
  %v2809 = vpack.c.bf16 %v2803, %v2802
  %v2810 = vpack.c.bf16 %v2805, %v2804
  %v2811 = vpack.c.bf16 %v2807, %v2806
  %v2812 = vpack.c.bf16 %v2808, %v2808
  %v2814 = vsel %vm946, %v2809, 0
  %v2817 = vsel %vm946, %v2810, 0
  %v2820 = vsel %vm946, %v2811, 0
  %v2823 = vsel %vm946, %v2812, 0
  %2825 = vmatprep.subr.bf16.mxu0 0
  %2826 = vmatpush1.bf16.msra.mxu0 %v2549
  %2827 = vmatprep.subr.bf16.mxu0 0
  %2828 = vmatpush1.bf16.msra.mxu0 %v2551
  %2829 = vmatprep.subr.bf16.mxu0 0
  %2830 = vmatpush1.bf16.msra.mxu0 %v2553
  %2831 = vmatprep.subr.bf16.mxu0 0
  %2832 = vmatpush1.bf16.msra.mxu0 %v2572
  %2833 = vmatprep.subr.bf16.mxu0 0
  %2834 = vmatpush1.bf16.msra.mxu0 0
  %2835 = vmatprep.subr.bf16.mxu0 0
  %2836 = vmatpush1.bf16.msra.mxu0 0
  %2837 = vmatprep.subr.bf16.mxu0 0
  %2838 = vmatpush1.bf16.msra.mxu0 0
  %2839 = vmatprep.subr.bf16.mxu0 0
  %2840 = vmatpush1.bf16.msra.mxu0 0
  %2841 = vmatprep.subr.bf16.mxu0 0
  %2842 = vmatpush1.bf16.msra.mxu0 0
  %2843 = vmatprep.subr.bf16.mxu0 0
  %2844 = vmatpush1.bf16.msra.mxu0 0
  %2845 = vmatprep.subr.bf16.mxu0 0
  %2846 = vmatpush1.bf16.msra.mxu0 0
  %2847 = vmatprep.subr.bf16.mxu0 0
  %2848 = vmatpush1.bf16.msra.mxu0 0
  %2849 = vmatprep.subr.bf16.mxu0 0
  %2850 = vmatpush1.bf16.msra.mxu0 0
  %2851 = vmatprep.subr.bf16.mxu0 0
  %2852 = vmatpush1.bf16.msra.mxu0 0
  %2853 = vmatprep.subr.bf16.mxu0 0
  %2854 = vmatpush1.bf16.msra.mxu0 0
  %2855 = vmatprep.subr.bf16.mxu0 0
  %2856 = vmatpush1.bf16.msra.mxu0 0
  %2857 = vmatprep.mubr.bf16.mxu0 0
  %2858 = vmatmul.mubr.bf16.gmra.mrb[0].mxu0 %v2814
  %v2859 = vpop.f32.mrb[0].mxu0
  %v2860 = vadd.f32 0.0, %v2859
  %v2861 = vpop.f32.mrb[0].mxu0
  %v2862 = vpop.f32.mrb[0].mxu0
  %v2863 = vadd.f32 0.0, %v2862
  %v2864 = vpop.f32.mrb[0].mxu0
  %2865 = vmatprep.mubr.bf16.mxu0 0
  %2866 = vmatmul.mubr.bf16.gmra.mrb[0].mxu0 %v2817
  %v2867 = vpop.f32.mrb[0].mxu0
  %v2868 = vadd.f32 0.0, %v2867
  %v2869 = vpop.f32.mrb[0].mxu0
  %v2870 = vpop.f32.mrb[0].mxu0
  %v2871 = vadd.f32 0.0, %v2870
  %v2872 = vpop.f32.mrb[0].mxu0
  %2873 = vmatprep.mubr.bf16.mxu0 0
  %2874 = vmatmul.mubr.bf16.gmra.mrb[0].mxu0 %v2820
  %v2875 = vpop.f32.mrb[0].mxu0
  %v2876 = vadd.f32 0.0, %v2875
  %v2877 = vpop.f32.mrb[0].mxu0
  %v2878 = vpop.f32.mrb[0].mxu0
  %v2879 = vadd.f32 0.0, %v2878
  %v2880 = vpop.f32.mrb[0].mxu0
  %2881 = vmatprep.mubr.bf16.mxu0 0
  %2882 = vmatmul.mubr.bf16.gmra.mrb[0].mxu0 %v2823
  %v2883 = vpop.f32.mrb[0].mxu0
  %v2884 = vadd.f32 0.0, %v2883
  %v2885 = vpop.f32.mrb[0].mxu0
  %v2886 = vpop.f32.mrb[0].mxu0
  %v2887 = vpop.f32.mrb[0].mxu0
  %2888 = vdwg.mxu0
  %v2889 = vmul.f32 %v2860, %v1389
  %v2890 = vmul.f32 %v2863, %v1389
  %v2891 = vmul.f32 %v2868, %v1389
  %v2892 = vmul.f32 %v2871, %v1389
  %v2893 = vmul.f32 %v2876, %v1389
  %v2894 = vmul.f32 %v2879, %v1389
  %v2895 = vmul.f32 %v2884, %v1389
  %v2896 = vadd.f32 %v2638, %v2889
  %v2897 = vadd.f32 %v2639, %v2890
  %v2898 = vadd.f32 %v2640, %v2891
  %v2899 = vadd.f32 %v2641, %v2892
  %v2900 = vadd.f32 %v2642, %v2893
  %v2901 = vadd.f32 %v2643, %v2894
  %v2902 = vadd.f32 %v2644, %v2895
  %v2903 = vmul.f32 %v271, %v1407
  %v2904 = vmul.f32 %v272, %v1407
  %v2905 = vmul.f32 %v273, %v1407
  %v2906 = vmul.f32 %v274, %v1407
  %v2907 = vmul.f32 %v275, %v1407
  %v2908 = vmul.f32 %v276, %v1407
  %v2909 = vmul.f32 %v277, %v1407
  %v2910 = vpack.c.bf16 %v2904, %v2903
  %v2911 = vpack.c.bf16 %v2906, %v2905
  %v2912 = vpack.c.bf16 %v2908, %v2907
  %v2913 = vpack.c.bf16 %v2909, %v2909
  %v2915 = vsel %vm103, %v2910, 0
  %v2918 = vsel %vm103, %v2911, 0
  %v2921 = vsel %vm103, %v2912, 0
  %v2924 = vsel %vm103, %v2913, 0
  %2926 = vmatprep.subr.bf16.mxu0 0
  %2927 = vmatpush1.bf16.xpose.msra.mxu0 %v2392
  %2928 = vmatprep.subr.bf16.mxu0 0
  %2929 = vmatpush1.bf16.xpose.msra.mxu0 %v2395
  %2930 = vmatprep.subr.bf16.mxu0 0
  %2931 = vmatpush1.bf16.xpose.msra.mxu0 %v2398
  %2932 = vmatprep.subr.bf16.mxu0 0
  %2933 = vmatpush1.bf16.xpose.msra.mxu0 %v2401
  %2934 = vmatprep.subr.bf16.mxu0 0
  %2935 = vmatpush1.bf16.xpose.msra.mxu0 0
  %2936 = vmatprep.subr.bf16.mxu0 0
  %2937 = vmatpush1.bf16.xpose.msra.mxu0 0
  %2938 = vmatprep.subr.bf16.mxu0 0
  %2939 = vmatpush1.bf16.xpose.msra.mxu0 0
  %2940 = vmatprep.subr.bf16.mxu0 0
  %2941 = vmatpush1.bf16.xpose.msra.mxu0 0
  %2942 = vmatprep.subr.bf16.mxu0 0
  %2943 = vmatpush1.bf16.xpose.msra.mxu0 0
  %2944 = vmatprep.subr.bf16.mxu0 0
  %2945 = vmatpush1.bf16.xpose.msra.mxu0 0
  %2946 = vmatprep.subr.bf16.mxu0 0
  %2947 = vmatpush1.bf16.xpose.msra.mxu0 0
  %2948 = vmatprep.subr.bf16.mxu0 0
  %2949 = vmatpush1.bf16.xpose.msra.mxu0 0
  %2950 = vmatprep.subr.bf16.mxu0 0
  %2951 = vmatpush1.bf16.xpose.msra.mxu0 0
  %2952 = vmatprep.subr.bf16.mxu0 0
  %2953 = vmatpush1.bf16.xpose.msra.mxu0 0
  %2954 = vmatprep.subr.bf16.mxu0 0
  %2955 = vmatpush1.bf16.xpose.msra.mxu0 0
  %2956 = vmatprep.subr.bf16.mxu0 0
  %2957 = vmatpush1.bf16.xpose.msra.mxu0 0
  %2958 = vmatprep.mubr.bf16.mxu0 0
  %2959 = vmatmul.mubr.bf16.gmra.mrb[0].mxu0 %v2915
  %v2960 = vpop.f32.mrb[0].mxu0
  %v2961 = vadd.f32 %v1420, %v2960
  %v2962 = vpop.f32.mrb[0].mxu0
  %v2963 = vpop.f32.mrb[0].mxu0
  %v2964 = vadd.f32 %v1421, %v2963
  %v2965 = vpop.f32.mrb[0].mxu0
  %2966 = vmatprep.mubr.bf16.mxu0 0
  %2967 = vmatmul.mubr.bf16.gmra.mrb[0].mxu0 %v2918
  %v2968 = vpop.f32.mrb[0].mxu0
  %v2969 = vadd.f32 %v1422, %v2968
  %v2970 = vpop.f32.mrb[0].mxu0
  %v2971 = vpop.f32.mrb[0].mxu0
  %v2972 = vadd.f32 %v1423, %v2971
  %v2973 = vpop.f32.mrb[0].mxu0
  %2974 = vmatprep.mubr.bf16.mxu0 0
  %2975 = vmatmul.mubr.bf16.gmra.mrb[0].mxu0 %v2921
  %v2976 = vpop.f32.mrb[0].mxu0
  %v2977 = vadd.f32 %v1424, %v2976
  %v2978 = vpop.f32.mrb[0].mxu0
  %v2979 = vpop.f32.mrb[0].mxu0
  %v2980 = vadd.f32 %v1425, %v2979
  %v2981 = vpop.f32.mrb[0].mxu0
  %2982 = vmatprep.mubr.bf16.mxu0 0
  %2983 = vmatmul.mubr.bf16.gmra.mrb[0].mxu0 %v2924
  %v2984 = vpop.f32.mrb[0].mxu0
  %v2985 = vadd.f32 %v1426, %v2984
  %v2986 = vpop.f32.mrb[0].mxu0
  %v2987 = vpop.f32.mrb[0].mxu0
  %v2988 = vpop.f32.mrb[0].mxu0
  %2989 = vdwg.mxu0
  %v2990 = vsel %vm946, %v2961, -inf
  %2991 = vmax.xlane.f32.xlu0 %v2990
  %v2992 = vpop.xlane.xlu0 %2991
  %v2993 = vsel %vm946, %v2964, -inf
  %2994 = vmax.xlane.f32.xlu0 %v2993
  %v2995 = vpop.xlane.xlu0 %2994
  %v2996 = vsel %vm946, %v2969, -inf
  %2997 = vmax.xlane.f32.xlu0 %v2996
  %v2998 = vpop.xlane.xlu0 %2997
  %v2999 = vsel %vm946, %v2972, -inf
  %3000 = vmax.xlane.f32.xlu0 %v2999
  %v3001 = vpop.xlane.xlu0 %3000
  %v3002 = vsel %vm946, %v2977, -inf
  %3003 = vmax.xlane.f32.xlu0 %v3002
  %v3004 = vpop.xlane.xlu0 %3003
  %v3005 = vsel %vm946, %v2980, -inf
  %3006 = vmax.xlane.f32.xlu0 %v3005
  %v3007 = vpop.xlane.xlu0 %3006
  %v3008 = vsel %vm946, %v2985, -inf
  %3009 = vmax.xlane.f32.xlu0 %v3008
  %v3010 = vpop.xlane.xlu0 %3009
  %v3011 = vsub.f32 %v2961, %v2992
  %v3012 = vsub.f32 %v2964, %v2995
  %v3013 = vsub.f32 %v2969, %v2998
  %v3014 = vsub.f32 %v2972, %v3001
  %v3015 = vsub.f32 %v2977, %v3004
  %v3016 = vsub.f32 %v2980, %v3007
  %v3017 = vsub.f32 %v2985, %v3010
  %v3018 = vmul.f32 %v3011, 1.442695
  %v3019 = vpow.pop %v3018
  %v3020 = vmul.f32 %v3012, 1.442695
  %v3021 = vpow.pop %v3020
  %v3022 = vmul.f32 %v3013, 1.442695
  %v3023 = vpow.pop %v3022
  %v3024 = vmul.f32 %v3014, 1.442695
  %v3025 = vpow.pop %v3024
  %v3026 = vmul.f32 %v3015, 1.442695
  %v3027 = vpow.pop %v3026
  %v3028 = vmul.f32 %v3016, 1.442695
  %v3029 = vpow.pop %v3028
  %v3030 = vmul.f32 %v3017, 1.442695
  %v3031 = vpow.pop %v3030
  %v3032 = vsel %vm946, %v3019, 0.0
  %3033 = vadd.xlane.f32.xlu0 %v3032
  %v3034 = vpop.xlane.xlu0 %3033
  %v3035 = vsel %vm946, %v3021, 0.0
  %3036 = vadd.xlane.f32.xlu0 %v3035
  %v3037 = vpop.xlane.xlu0 %3036
  %v3038 = vsel %vm946, %v3023, 0.0
  %3039 = vadd.xlane.f32.xlu0 %v3038
  %v3040 = vpop.xlane.xlu0 %3039
  %v3041 = vsel %vm946, %v3025, 0.0
  %3042 = vadd.xlane.f32.xlu0 %v3041
  %v3043 = vpop.xlane.xlu0 %3042
  %v3044 = vsel %vm946, %v3027, 0.0
  %3045 = vadd.xlane.f32.xlu0 %v3044
  %v3046 = vpop.xlane.xlu0 %3045
  %v3047 = vsel %vm946, %v3029, 0.0
  %3048 = vadd.xlane.f32.xlu0 %v3047
  %v3049 = vpop.xlane.xlu0 %3048
  %v3050 = vsel %vm946, %v3031, 0.0
  %3051 = vadd.xlane.f32.xlu0 %v3050
  %v3052 = vpop.xlane.xlu0 %3051
  %v3053 = vrcp.pop %v3034
  %v3054 = vrcp.pop %v3037
  %v3055 = vrcp.pop %v3040
  %v3056 = vrcp.pop %v3043
  %v3057 = vrcp.pop %v3046
  %v3058 = vrcp.pop %v3049
  %v3059 = vrcp.pop %v3052
  %v3060 = vmul.f32 %v3019, %v3053
  %v3061 = vmul.f32 %v3021, %v3054
  %v3062 = vmul.f32 %v3023, %v3055
  %v3063 = vmul.f32 %v3025, %v3056
  %v3064 = vmul.f32 %v3027, %v3057
  %v3065 = vmul.f32 %v3029, %v3058
  %v3066 = vmul.f32 %v3031, %v3059
  %v3067 = vpack.c.bf16 %v3061, %v3060
  %v3068 = vpack.c.bf16 %v3063, %v3062
  %v3069 = vpack.c.bf16 %v3065, %v3064
  %v3070 = vpack.c.bf16 %v3066, %v3066
  %v3072 = vsel %vm946, %v3067, 0
  %v3075 = vsel %vm946, %v3068, 0
  %v3078 = vsel %vm946, %v3069, 0
  %v3081 = vsel %vm946, %v3070, 0
  %3083 = vmatprep.subr.bf16.mxu0 0
  %3084 = vmatpush1.bf16.msra.mxu0 %v2549
  %3085 = vmatprep.subr.bf16.mxu0 0
  %3086 = vmatpush1.bf16.msra.mxu0 %v2551
  %3087 = vmatprep.subr.bf16.mxu0 0
  %3088 = vmatpush1.bf16.msra.mxu0 %v2553
  %3089 = vmatprep.subr.bf16.mxu0 0
  %3090 = vmatpush1.bf16.msra.mxu0 %v2572
  %3091 = vmatprep.subr.bf16.mxu0 0
  %3092 = vmatpush1.bf16.msra.mxu0 0
  %3093 = vmatprep.subr.bf16.mxu0 0
  %3094 = vmatpush1.bf16.msra.mxu0 0
  %3095 = vmatprep.subr.bf16.mxu0 0
  %3096 = vmatpush1.bf16.msra.mxu0 0
  %3097 = vmatprep.subr.bf16.mxu0 0
  %3098 = vmatpush1.bf16.msra.mxu0 0
  %3099 = vmatprep.subr.bf16.mxu0 0
  %3100 = vmatpush1.bf16.msra.mxu0 0
  %3101 = vmatprep.subr.bf16.mxu0 0
  %3102 = vmatpush1.bf16.msra.mxu0 0
  %3103 = vmatprep.subr.bf16.mxu0 0
  %3104 = vmatpush1.bf16.msra.mxu0 0
  %3105 = vmatprep.subr.bf16.mxu0 0
  %3106 = vmatpush1.bf16.msra.mxu0 0
  %3107 = vmatprep.subr.bf16.mxu0 0
  %3108 = vmatpush1.bf16.msra.mxu0 0
  %3109 = vmatprep.subr.bf16.mxu0 0
  %3110 = vmatpush1.bf16.msra.mxu0 0
  %3111 = vmatprep.subr.bf16.mxu0 0
  %3112 = vmatpush1.bf16.msra.mxu0 0
  %3113 = vmatprep.subr.bf16.mxu0 0
  %3114 = vmatpush1.bf16.msra.mxu0 0
  %3115 = vmatprep.mubr.bf16.mxu0 0
  %3116 = vmatmul.mubr.bf16.gmra.mrb[0].mxu0 %v3072
  %v3117 = vpop.f32.mrb[0].mxu0
  %v3118 = vadd.f32 0.0, %v3117
  %v3119 = vpop.f32.mrb[0].mxu0
  %v3120 = vpop.f32.mrb[0].mxu0
  %v3121 = vadd.f32 0.0, %v3120
  %v3122 = vpop.f32.mrb[0].mxu0
  %3123 = vmatprep.mubr.bf16.mxu0 0
  %3124 = vmatmul.mubr.bf16.gmra.mrb[0].mxu0 %v3075
  %v3125 = vpop.f32.mrb[0].mxu0
  %v3126 = vadd.f32 0.0, %v3125
  %v3127 = vpop.f32.mrb[0].mxu0
  %v3128 = vpop.f32.mrb[0].mxu0
  %v3129 = vadd.f32 0.0, %v3128
  %v3130 = vpop.f32.mrb[0].mxu0
  %3131 = vmatprep.mubr.bf16.mxu0 0
  %3132 = vmatmul.mubr.bf16.gmra.mrb[0].mxu0 %v3078
  %v3133 = vpop.f32.mrb[0].mxu0
  %v3134 = vadd.f32 0.0, %v3133
  %v3135 = vpop.f32.mrb[0].mxu0
  %v3136 = vpop.f32.mrb[0].mxu0
  %v3137 = vadd.f32 0.0, %v3136
  %v3138 = vpop.f32.mrb[0].mxu0
  %3139 = vmatprep.mubr.bf16.mxu0 0
  %3140 = vmatmul.mubr.bf16.gmra.mrb[0].mxu0 %v3081
  %v3141 = vpop.f32.mrb[0].mxu0
  %v3142 = vadd.f32 0.0, %v3141
  %v3143 = vpop.f32.mrb[0].mxu0
  %v3144 = vpop.f32.mrb[0].mxu0
  %v3145 = vpop.f32.mrb[0].mxu0
  %3146 = vdwg.mxu0
  %v3147 = vmul.f32 %v3118, %v1663
  %v3148 = vmul.f32 %v3121, %v1663
  %v3149 = vmul.f32 %v3126, %v1663
  %v3150 = vmul.f32 %v3129, %v1663
  %v3151 = vmul.f32 %v3134, %v1663
  %v3152 = vmul.f32 %v3137, %v1663
  %v3153 = vmul.f32 %v3142, %v1663
  %v3154 = vadd.f32 %v2896, %v3147
  %v3155 = vadd.f32 %v2897, %v3148
  %v3156 = vadd.f32 %v2898, %v3149
  %v3157 = vadd.f32 %v2899, %v3150
  %v3158 = vadd.f32 %v2900, %v3151
  %v3159 = vadd.f32 %v2901, %v3152
  %v3160 = vadd.f32 %v2902, %v3153
  %v3161 = vmul.f32 %v271, %v1681
  %v3162 = vmul.f32 %v272, %v1681
  %v3163 = vmul.f32 %v273, %v1681
  %v3164 = vmul.f32 %v274, %v1681
  %v3165 = vmul.f32 %v275, %v1681
  %v3166 = vmul.f32 %v276, %v1681
  %v3167 = vmul.f32 %v277, %v1681
  %v3168 = vpack.c.bf16 %v3162, %v3161
  %v3169 = vpack.c.bf16 %v3164, %v3163
  %v3170 = vpack.c.bf16 %v3166, %v3165
  %v3171 = vpack.c.bf16 %v3167, %v3167
  %v3173 = vsel %vm103, %v3168, 0
  %v3176 = vsel %vm103, %v3169, 0
  %v3179 = vsel %vm103, %v3170, 0
  %v3182 = vsel %vm103, %v3171, 0
  %3184 = vmatprep.subr.bf16.mxu0 0
  %3185 = vmatpush1.bf16.xpose.msra.mxu0 %v2392
  %3186 = vmatprep.subr.bf16.mxu0 0
  %3187 = vmatpush1.bf16.xpose.msra.mxu0 %v2395
  %3188 = vmatprep.subr.bf16.mxu0 0
  %3189 = vmatpush1.bf16.xpose.msra.mxu0 %v2398
  %3190 = vmatprep.subr.bf16.mxu0 0
  %3191 = vmatpush1.bf16.xpose.msra.mxu0 %v2401
  %3192 = vmatprep.subr.bf16.mxu0 0
  %3193 = vmatpush1.bf16.xpose.msra.mxu0 0
  %3194 = vmatprep.subr.bf16.mxu0 0
  %3195 = vmatpush1.bf16.xpose.msra.mxu0 0
  %3196 = vmatprep.subr.bf16.mxu0 0
  %3197 = vmatpush1.bf16.xpose.msra.mxu0 0
  %3198 = vmatprep.subr.bf16.mxu0 0
  %3199 = vmatpush1.bf16.xpose.msra.mxu0 0
  %3200 = vmatprep.subr.bf16.mxu0 0
  %3201 = vmatpush1.bf16.xpose.msra.mxu0 0
  %3202 = vmatprep.subr.bf16.mxu0 0
  %3203 = vmatpush1.bf16.xpose.msra.mxu0 0
  %3204 = vmatprep.subr.bf16.mxu0 0
  %3205 = vmatpush1.bf16.xpose.msra.mxu0 0
  %3206 = vmatprep.subr.bf16.mxu0 0
  %3207 = vmatpush1.bf16.xpose.msra.mxu0 0
  %3208 = vmatprep.subr.bf16.mxu0 0
  %3209 = vmatpush1.bf16.xpose.msra.mxu0 0
  %3210 = vmatprep.subr.bf16.mxu0 0
  %3211 = vmatpush1.bf16.xpose.msra.mxu0 0
  %3212 = vmatprep.subr.bf16.mxu0 0
  %3213 = vmatpush1.bf16.xpose.msra.mxu0 0
  %3214 = vmatprep.subr.bf16.mxu0 0
  %3215 = vmatpush1.bf16.xpose.msra.mxu0 0
  %3216 = vmatprep.mubr.bf16.mxu0 0
  %3217 = vmatmul.mubr.bf16.gmra.mrb[0].mxu0 %v3173
  %v3218 = vpop.f32.mrb[0].mxu0
  %v3219 = vadd.f32 %v1694, %v3218
  %v3220 = vpop.f32.mrb[0].mxu0
  %v3221 = vpop.f32.mrb[0].mxu0
  %v3222 = vadd.f32 %v1695, %v3221
  %v3223 = vpop.f32.mrb[0].mxu0
  %3224 = vmatprep.mubr.bf16.mxu0 0
  %3225 = vmatmul.mubr.bf16.gmra.mrb[0].mxu0 %v3176
  %v3226 = vpop.f32.mrb[0].mxu0
  %v3227 = vadd.f32 %v1696, %v3226
  %v3228 = vpop.f32.mrb[0].mxu0
  %v3229 = vpop.f32.mrb[0].mxu0
  %v3230 = vadd.f32 %v1697, %v3229
  %v3231 = vpop.f32.mrb[0].mxu0
  %3232 = vmatprep.mubr.bf16.mxu0 0
  %3233 = vmatmul.mubr.bf16.gmra.mrb[0].mxu0 %v3179
  %v3234 = vpop.f32.mrb[0].mxu0
  %v3235 = vadd.f32 %v1698, %v3234
  %v3236 = vpop.f32.mrb[0].mxu0
  %v3237 = vpop.f32.mrb[0].mxu0
  %v3238 = vadd.f32 %v1699, %v3237
  %v3239 = vpop.f32.mrb[0].mxu0
  %3240 = vmatprep.mubr.bf16.mxu0 0
  %3241 = vmatmul.mubr.bf16.gmra.mrb[0].mxu0 %v3182
  %v3242 = vpop.f32.mrb[0].mxu0
  %v3243 = vadd.f32 %v1700, %v3242
  %v3244 = vpop.f32.mrb[0].mxu0
  %v3245 = vpop.f32.mrb[0].mxu0
  %v3246 = vpop.f32.mrb[0].mxu0
  %3247 = vdwg.mxu0
  %v3248 = vsel %vm946, %v3219, -inf
  %3249 = vmax.xlane.f32.xlu0 %v3248
  %v3250 = vpop.xlane.xlu0 %3249
  %v3251 = vsel %vm946, %v3222, -inf
  %3252 = vmax.xlane.f32.xlu0 %v3251
  %v3253 = vpop.xlane.xlu0 %3252
  %v3254 = vsel %vm946, %v3227, -inf
  %3255 = vmax.xlane.f32.xlu0 %v3254
  %v3256 = vpop.xlane.xlu0 %3255
  %v3257 = vsel %vm946, %v3230, -inf
  %3258 = vmax.xlane.f32.xlu0 %v3257
  %v3259 = vpop.xlane.xlu0 %3258
  %v3260 = vsel %vm946, %v3235, -inf
  %3261 = vmax.xlane.f32.xlu0 %v3260
  %v3262 = vpop.xlane.xlu0 %3261
  %v3263 = vsel %vm946, %v3238, -inf
  %3264 = vmax.xlane.f32.xlu0 %v3263
  %v3265 = vpop.xlane.xlu0 %3264
  %v3266 = vsel %vm946, %v3243, -inf
  %3267 = vmax.xlane.f32.xlu0 %v3266
  %v3268 = vpop.xlane.xlu0 %3267
  %v3269 = vsub.f32 %v3219, %v3250
  %v3270 = vsub.f32 %v3222, %v3253
  %v3271 = vsub.f32 %v3227, %v3256
  %v3272 = vsub.f32 %v3230, %v3259
  %v3273 = vsub.f32 %v3235, %v3262
  %v3274 = vsub.f32 %v3238, %v3265
  %v3275 = vsub.f32 %v3243, %v3268
  %v3276 = vmul.f32 %v3269, 1.442695
  %v3277 = vpow.pop %v3276
  %v3278 = vmul.f32 %v3270, 1.442695
  %v3279 = vpow.pop %v3278
  %v3280 = vmul.f32 %v3271, 1.442695
  %v3281 = vpow.pop %v3280
  %v3282 = vmul.f32 %v3272, 1.442695
  %v3283 = vpow.pop %v3282
  %v3284 = vmul.f32 %v3273, 1.442695
  %v3285 = vpow.pop %v3284
  %v3286 = vmul.f32 %v3274, 1.442695
  %v3287 = vpow.pop %v3286
  %v3288 = vmul.f32 %v3275, 1.442695
  %v3289 = vpow.pop %v3288
  %v3290 = vsel %vm946, %v3277, 0.0
  %3291 = vadd.xlane.f32.xlu0 %v3290
  %v3292 = vpop.xlane.xlu0 %3291
  %v3293 = vsel %vm946, %v3279, 0.0
  %3294 = vadd.xlane.f32.xlu0 %v3293
  %v3295 = vpop.xlane.xlu0 %3294
  %v3296 = vsel %vm946, %v3281, 0.0
  %3297 = vadd.xlane.f32.xlu0 %v3296
  %v3298 = vpop.xlane.xlu0 %3297
  %v3299 = vsel %vm946, %v3283, 0.0
  %3300 = vadd.xlane.f32.xlu0 %v3299
  %v3301 = vpop.xlane.xlu0 %3300
  %v3302 = vsel %vm946, %v3285, 0.0
  %3303 = vadd.xlane.f32.xlu0 %v3302
  %v3304 = vpop.xlane.xlu0 %3303
  %v3305 = vsel %vm946, %v3287, 0.0
  %3306 = vadd.xlane.f32.xlu0 %v3305
  %v3307 = vpop.xlane.xlu0 %3306
  %v3308 = vsel %vm946, %v3289, 0.0
  %3309 = vadd.xlane.f32.xlu0 %v3308
  %v3310 = vpop.xlane.xlu0 %3309
  %v3311 = vrcp.pop %v3292
  %v3312 = vrcp.pop %v3295
  %v3313 = vrcp.pop %v3298
  %v3314 = vrcp.pop %v3301
  %v3315 = vrcp.pop %v3304
  %v3316 = vrcp.pop %v3307
  %v3317 = vrcp.pop %v3310
  %v3318 = vmul.f32 %v3277, %v3311
  %v3319 = vmul.f32 %v3279, %v3312
  %v3320 = vmul.f32 %v3281, %v3313
  %v3321 = vmul.f32 %v3283, %v3314
  %v3322 = vmul.f32 %v3285, %v3315
  %v3323 = vmul.f32 %v3287, %v3316
  %v3324 = vmul.f32 %v3289, %v3317
  %v3325 = vpack.c.bf16 %v3319, %v3318
  %v3326 = vpack.c.bf16 %v3321, %v3320
  %v3327 = vpack.c.bf16 %v3323, %v3322
  %v3328 = vpack.c.bf16 %v3324, %v3324
  %v3330 = vsel %vm946, %v3325, 0
  %v3333 = vsel %vm946, %v3326, 0
  %v3336 = vsel %vm946, %v3327, 0
  %v3339 = vsel %vm946, %v3328, 0
  %3341 = vmatprep.subr.bf16.mxu0 0
  %3342 = vmatpush1.bf16.msra.mxu0 %v2549
  %3343 = vmatprep.subr.bf16.mxu0 0
  %3344 = vmatpush1.bf16.msra.mxu0 %v2551
  %3345 = vmatprep.subr.bf16.mxu0 0
  %3346 = vmatpush1.bf16.msra.mxu0 %v2553
  %3347 = vmatprep.subr.bf16.mxu0 0
  %3348 = vmatpush1.bf16.msra.mxu0 %v2572
  %3349 = vmatprep.subr.bf16.mxu0 0
  %3350 = vmatpush1.bf16.msra.mxu0 0
  %3351 = vmatprep.subr.bf16.mxu0 0
  %3352 = vmatpush1.bf16.msra.mxu0 0
  %3353 = vmatprep.subr.bf16.mxu0 0
  %3354 = vmatpush1.bf16.msra.mxu0 0
  %3355 = vmatprep.subr.bf16.mxu0 0
  %3356 = vmatpush1.bf16.msra.mxu0 0
  %3357 = vmatprep.subr.bf16.mxu0 0
  %3358 = vmatpush1.bf16.msra.mxu0 0
  %3359 = vmatprep.subr.bf16.mxu0 0
  %3360 = vmatpush1.bf16.msra.mxu0 0
  %3361 = vmatprep.subr.bf16.mxu0 0
  %3362 = vmatpush1.bf16.msra.mxu0 0
  %3363 = vmatprep.subr.bf16.mxu0 0
  %3364 = vmatpush1.bf16.msra.mxu0 0
  %3365 = vmatprep.subr.bf16.mxu0 0
  %3366 = vmatpush1.bf16.msra.mxu0 0
  %3367 = vmatprep.subr.bf16.mxu0 0
  %3368 = vmatpush1.bf16.msra.mxu0 0
  %3369 = vmatprep.subr.bf16.mxu0 0
  %3370 = vmatpush1.bf16.msra.mxu0 0
  %3371 = vmatprep.subr.bf16.mxu0 0
  %3372 = vmatpush1.bf16.msra.mxu0 0
  %3373 = vmatprep.mubr.bf16.mxu0 0
  %3374 = vmatmul.mubr.bf16.gmra.mrb[0].mxu0 %v3330
  %v3375 = vpop.f32.mrb[0].mxu0
  %v3376 = vadd.f32 0.0, %v3375
  %v3377 = vpop.f32.mrb[0].mxu0
  %v3378 = vpop.f32.mrb[0].mxu0
  %v3379 = vadd.f32 0.0, %v3378
  %v3380 = vpop.f32.mrb[0].mxu0
  %3381 = vmatprep.mubr.bf16.mxu0 0
  %3382 = vmatmul.mubr.bf16.gmra.mrb[0].mxu0 %v3333
  %v3383 = vpop.f32.mrb[0].mxu0
  %v3384 = vadd.f32 0.0, %v3383
  %v3385 = vpop.f32.mrb[0].mxu0
  %v3386 = vpop.f32.mrb[0].mxu0
  %v3387 = vadd.f32 0.0, %v3386
  %v3388 = vpop.f32.mrb[0].mxu0
  %3389 = vmatprep.mubr.bf16.mxu0 0
  %3390 = vmatmul.mubr.bf16.gmra.mrb[0].mxu0 %v3336
  %v3391 = vpop.f32.mrb[0].mxu0
  %v3392 = vadd.f32 0.0, %v3391
  %v3393 = vpop.f32.mrb[0].mxu0
  %v3394 = vpop.f32.mrb[0].mxu0
  %v3395 = vadd.f32 0.0, %v3394
  %v3396 = vpop.f32.mrb[0].mxu0
  %3397 = vmatprep.mubr.bf16.mxu0 0
  %3398 = vmatmul.mubr.bf16.gmra.mrb[0].mxu0 %v3339
  %v3399 = vpop.f32.mrb[0].mxu0
  %v3400 = vadd.f32 0.0, %v3399
  %v3401 = vpop.f32.mrb[0].mxu0
  %v3402 = vpop.f32.mrb[0].mxu0
  %v3403 = vpop.f32.mrb[0].mxu0
  %3404 = vdwg.mxu0
  %v3405 = vmul.f32 %v3376, %v1937
  %v3406 = vmul.f32 %v3379, %v1937
  %v3407 = vmul.f32 %v3384, %v1937
  %v3408 = vmul.f32 %v3387, %v1937
  %v3409 = vmul.f32 %v3392, %v1937
  %v3410 = vmul.f32 %v3395, %v1937
  %v3411 = vmul.f32 %v3400, %v1937
  %v3412 = vadd.f32 %v3154, %v3405
  %v3413 = vadd.f32 %v3155, %v3406
  %v3414 = vadd.f32 %v3156, %v3407
  %v3415 = vadd.f32 %v3157, %v3408
  %v3416 = vadd.f32 %v3158, %v3409
  %v3417 = vadd.f32 %v3159, %v3410
  %v3418 = vadd.f32 %v3160, %v3411
  %3420 = vrot.lane.b32.xlu0 %v2355, 64
  %v3421 = vpop.permute.xlu0 %3420
  %v3423 = vmul.f32 %v279, %v3421
  %v3424 = vlaneseq
  %v3425 = vshrl.u32 %v3424, 7
  %v3426 = vsub.s32 0, %v3425
  %v3427 = vrot.slane %v3423, %v3426
  %v3428 = vadd.f32 %v3412, %v3427
  %v3429 = vadd.f32 %v3413, %v3427
  %v3430 = vadd.f32 %v3414, %v3427
  %v3431 = vadd.f32 %v3415, %v3427
  %v3432 = vadd.f32 %v3416, %v3427
  %v3433 = vadd.f32 %v3417, %v3427
  %v3434 = vadd.f32 %v3418, %v3427
  %v3435 = vadd.f32 %v3428, %v2308
  %v3436 = vadd.f32 %v3429, %v2311
  %v3437 = vadd.f32 %v3430, %v2316
  %v3438 = vadd.f32 %v3431, %v2319
  %v3439 = vadd.f32 %v3432, %v2324
  %v3440 = vadd.f32 %v3433, %v2327
  %v3441 = vadd.f32 %v3434, %v2332
  %v3442 = vmax.f32 %v3435, 0.0
  %v3443 = vmax.f32 %v3436, 0.0
  %v3444 = vmax.f32 %v3437, 0.0
  %v3445 = vmax.f32 %v3438, 0.0
  %v3446 = vmax.f32 %v3439, 0.0
  %v3447 = vmax.f32 %v3440, 0.0
  %v3448 = vmax.f32 %v3441, 0.0
  %v3449 = vpack.c.bf16 %v1976, %v1975
  %v3450 = vpack.c.bf16 %v1978, %v1977
  %v3451 = vpack.c.bf16 %v1980, %v1979
  %v3452 = vpack.c.bf16 %v3442, %v1981
  %v3453 = vpack.c.bf16 %v3444, %v3443
  %v3454 = vpack.c.bf16 %v3446, %v3445
  %v3455 = vpack.c.bf16 %v3448, %v3447
  %v3456 = vld [vmem:[%s3] sm:$0xf]
  %v3457 = vld [vmem:[%s3 + $0x4] sm:$0xf]
  %v3458 = vld [vmem:[%s3 + $0x8] sm:$0xf]
  %v3459 = vld [vmem:[%s3 + $0xc] sm:$0xf]
  %v3460 = vld [vmem:[%s3 + $0x10] sm:$0xf]
  %v3461 = vld [vmem:[%s3 + $0x14] sm:$0xf]
  %v3462 = vld [vmem:[%s3 + $0x18] sm:$0xf]
  %v3463 = vld [vmem:[%s3 + $0x1c] sm:$0xf]
  %v3464 = vlaneseq
  %v3465 = vshrl.u32 %v3464, 7
  %v3466 = vsub.s32 0, %v3465
  %v3467 = vrot.slane %v280, %v3466
  %v3476 = vunpack.c.l.b16 %v3456
  %v3477 = vunpack.c.l.b16 %v3457
  %v3478 = vunpack.c.l.b16 %v3458
  %v3479 = vunpack.c.l.b16 %v3459
  %v3480 = vunpack.c.l.b16 %v3460
  %v3481 = vunpack.c.l.b16 %v3461
  %v3482 = vunpack.c.l.b16 %v3462
  %v3483 = vunpack.c.l.b16 %v3463
  %v3484 = vpack.c.b16 %v3477, %v3476
  %v3485 = vpack.c.b16 %v3479, %v3478
  %v3486 = vpack.c.b16 %v3481, %v3480
  %v3487 = vpack.c.b16 %v3483, %v3482
  %vm3492 = vcmask 523264
  %v3494 = vsel %vm3492, %v3449, 0
  %v3497 = vsel %vm3492, %v3450, 0
  %v3500 = vsel %vm3492, %v3451, 0
  %v3503 = vsel %vm3492, %v3452, 0
  %v3506 = vsel %vm3492, %v3453, 0
  %v3509 = vsel %vm3492, %v3454, 0
  %v3512 = vsel %vm3492, %v3455, 0
  %3514 = vmatprep.subr.bf16.mxu0 0
  %3515 = vmatpush1.bf16.msra.mxu0 %v3484
  %3516 = vmatprep.subr.bf16.mxu0 0
  %3517 = vmatpush1.bf16.msra.mxu0 %v3485
  %3518 = vmatprep.subr.bf16.mxu0 0
  %3519 = vmatpush1.bf16.msra.mxu0 %v3486
  %3520 = vmatprep.subr.bf16.mxu0 0
  %3521 = vmatpush1.bf16.msra.mxu0 %v3487
  %3522 = vmatprep.subr.bf16.mxu0 0
  %3523 = vmatpush1.bf16.msra.mxu0 0
  %3524 = vmatprep.subr.bf16.mxu0 0
  %3525 = vmatpush1.bf16.msra.mxu0 0
  %3526 = vmatprep.subr.bf16.mxu0 0
  %3527 = vmatpush1.bf16.msra.mxu0 0
  %3528 = vmatprep.subr.bf16.mxu0 0
  %3529 = vmatpush1.bf16.msra.mxu0 0
  %3530 = vmatprep.subr.bf16.mxu0 0
  %3531 = vmatpush1.bf16.msra.mxu0 0
  %3532 = vmatprep.subr.bf16.mxu0 0
  %3533 = vmatpush1.bf16.msra.mxu0 0
  %3534 = vmatprep.subr.bf16.mxu0 0
  %3535 = vmatpush1.bf16.msra.mxu0 0
  %3536 = vmatprep.subr.bf16.mxu0 0
  %3537 = vmatpush1.bf16.msra.mxu0 0
  %3538 = vmatprep.subr.bf16.mxu0 0
  %3539 = vmatpush1.bf16.msra.mxu0 0
  %3540 = vmatprep.subr.bf16.mxu0 0
  %3541 = vmatpush1.bf16.msra.mxu0 0
  %3542 = vmatprep.subr.bf16.mxu0 0
  %3543 = vmatpush1.bf16.msra.mxu0 0
  %3544 = vmatprep.subr.bf16.mxu0 0
  %3545 = vmatpush1.bf16.msra.mxu0 0
  %3546 = vmatprep.mubr.bf16.mxu0 0
  %3547 = vmatmul.mubr.bf16.gmra.mrb[0].mxu0 %v3494
  %v3548 = vpop.f32.mrb[0].mxu0
  %v3549 = vadd.f32 %v3467, %v3548
  %v3550 = vpop.f32.mrb[0].mxu0
  %v3551 = vpop.f32.mrb[0].mxu0
  %v3552 = vadd.f32 %v3467, %v3551
  %v3553 = vpop.f32.mrb[0].mxu0
  %3554 = vmatprep.mubr.bf16.mxu0 0
  %3555 = vmatmul.mubr.bf16.gmra.mrb[0].mxu0 %v3497
  %v3556 = vpop.f32.mrb[0].mxu0
  %v3557 = vadd.f32 %v3467, %v3556
  %v3558 = vpop.f32.mrb[0].mxu0
  %v3559 = vpop.f32.mrb[0].mxu0
  %v3560 = vadd.f32 %v3467, %v3559
  %v3561 = vpop.f32.mrb[0].mxu0
  %3562 = vmatprep.mubr.bf16.mxu0 0
  %3563 = vmatmul.mubr.bf16.gmra.mrb[0].mxu0 %v3500
  %v3564 = vpop.f32.mrb[0].mxu0
  %v3565 = vadd.f32 %v3467, %v3564
  %v3566 = vpop.f32.mrb[0].mxu0
  %v3567 = vpop.f32.mrb[0].mxu0
  %v3568 = vadd.f32 %v3467, %v3567
  %v3569 = vpop.f32.mrb[0].mxu0
  %3570 = vmatprep.mubr.bf16.mxu0 0
  %3571 = vmatmul.mubr.bf16.gmra.mrb[0].mxu0 %v3503
  %v3572 = vpop.f32.mrb[0].mxu0
  %v3573 = vadd.f32 %v3467, %v3572
  %v3574 = vpop.f32.mrb[0].mxu0
  %v3575 = vpop.f32.mrb[0].mxu0
  %v3576 = vadd.f32 %v3467, %v3575
  %v3577 = vpop.f32.mrb[0].mxu0
  %3578 = vmatprep.mubr.bf16.mxu0 0
  %3579 = vmatmul.mubr.bf16.gmra.mrb[0].mxu0 %v3506
  %v3580 = vpop.f32.mrb[0].mxu0
  %v3581 = vadd.f32 %v3467, %v3580
  %v3582 = vpop.f32.mrb[0].mxu0
  %v3583 = vpop.f32.mrb[0].mxu0
  %v3584 = vadd.f32 %v3467, %v3583
  %v3585 = vpop.f32.mrb[0].mxu0
  %3586 = vmatprep.mubr.bf16.mxu0 0
  %3587 = vmatmul.mubr.bf16.gmra.mrb[0].mxu0 %v3509
  %v3588 = vpop.f32.mrb[0].mxu0
  %v3589 = vadd.f32 %v3467, %v3588
  %v3590 = vpop.f32.mrb[0].mxu0
  %v3591 = vpop.f32.mrb[0].mxu0
  %v3592 = vadd.f32 %v3467, %v3591
  %v3593 = vpop.f32.mrb[0].mxu0
  %3594 = vmatprep.mubr.bf16.mxu0 0
  %3595 = vmatmul.mubr.bf16.gmra.mrb[0].mxu0 %v3512
  %v3596 = vpop.f32.mrb[0].mxu0
  %v3597 = vadd.f32 %v3467, %v3596
  %v3598 = vpop.f32.mrb[0].mxu0
  %v3599 = vpop.f32.mrb[0].mxu0
  %v3600 = vadd.f32 %v3467, %v3599
  %v3601 = vpop.f32.mrb[0].mxu0
  %3602 = vdwg.mxu0
  %3603 = vst.msk [vmem:[%s9] sm:$0xff] %vm103, %v3549
  %3604 = vst.msk [vmem:[%s9 + $0x8] sm:$0xff] %vm103, %v3552
  %3605 = vst.msk [vmem:[%s9 + $0x10] sm:$0xff] %vm103, %v3557
  %3606 = vst.msk [vmem:[%s9 + $0x18] sm:$0xff] %vm103, %v3560
  %3607 = vst.msk [vmem:[%s9 + $0x20] sm:$0xff] %vm103, %v3565
  %3608 = vst.msk [vmem:[%s9 + $0x28] sm:$0xff] %vm103, %v3568
  %3609 = vst.msk [vmem:[%s9 + $0x30] sm:$0xff] %vm103, %v3573
  %3610 = vst.msk [vmem:[%s9 + $0x38] sm:$0xff] %vm103, %v3576
  %3611 = vst.msk [vmem:[%s9 + $0x40] sm:$0xff] %vm103, %v3581
  %3612 = vst.msk [vmem:[%s9 + $0x48] sm:$0xff] %vm103, %v3584
  %3613 = vst.msk [vmem:[%s9 + $0x50] sm:$0xff] %vm103, %v3589
  %3614 = vst.msk [vmem:[%s9 + $0x58] sm:$0xff] %vm103, %v3592
  %3615 = vst.msk [vmem:[%s9 + $0x60] sm:$0xff] %vm103, %v3597
  %3616 = vst.msk [vmem:[%s9 + $0x68] sm:$0xff] %vm103, %v3600
  // Predicated region
  $region38: #{attention4d_forward.1} parent=0 // pred_check
    _
  $region39: #{attention4d_forward.1} parent=0 // pred_check_branch
    %3618 = sbr.rel (0) target = $region41
  $region40: #{attention4d_forward.1} parent=0 // pred_region
    _
  $region41: #{attention4d_forward.1} parent=0 // pred_fallthru
    _
  // Predicated region
  $region42: #{attention4d_forward.1} parent=0 // pred_check
    _
  $region43: #{attention4d_forward.1} parent=0 // pred_check_branch
    %3620 = sbr.rel (0) target = $region45
  $region44: #{attention4d_forward.1} parent=0 // pred_region
    _
  $region45: #{attention4d_forward.1} parent=0 // pred_fallthru
    _

</llo_original>
